<compile_context>
chip_gen: v7x
topology: tpu7x:2x2x1
jax: 0.10.0
libtpu: 0.0.40
codegen_flags: <defaults>
</compile_context>

<pallas_src>
import functools

import jax
import jax.numpy as jnp
from jax.experimental import pallas as pl
from jax.experimental.pallas import tpu as pltpu


def _round_up(x, m):
    return ((x + m - 1) // m) * m


def feudal_manager_kernel(
    xs_ref,       # (Tp, Ip)        all timestep inputs, resident
    hc0_ref,      # (2, Hp)         initial [h0; c0]
    w_lstm_ref,   # (Ip+Hp, 4Hp)    stacked [W_ih; W_hh] (gate-column padded)
    w_goal_ref,   # (Hp, AKp)       goal_fc weight (lane padded)
    bias_ref,     # (1, 4Hp+AKp)    [b_ih+b_hh | b_goal] (padded)
    m_ref,        # (AKp, AKp)      block-diagonal per-agent mask
    win_ref,      # (Tp, Tp)        dilated sliding-window (deque) matrix
    goals_ref,    # (2, Tp, AKp)    out: [goal_norm; raw_goal]
    hc_out_ref,   # (2, Hp)         out: final [h; c]
    h_all_ref,    # (Tp, Hp)        VMEM scratch: hidden state of every step
    *, hidden_p, input_p, n_steps,
):
    Hp, Ip = hidden_p, input_p

    # Zero so padded rows (t >= n_steps) can never inject Inf/NaN garbage into
    # the batched tail matmuls.
    h_all_ref[...] = jnp.zeros_like(h_all_ref)

    b_lstm = bias_ref[:, 0:4 * Hp]            # (1, 4Hp), hoisted out of the loop

    # ---- serial part: only the LSTM cell lives inside the loop --------------
    def step(t, carry):
        h, c = carry                                        # each (1, Hp)
        x = xs_ref[pl.ds(t, 1), :]                          # (1, Ip)
        gates = (
            jnp.dot(x, w_lstm_ref[0:Ip, :], preferred_element_type=jnp.float32)
            + jnp.dot(h, w_lstm_ref[Ip:, :], preferred_element_type=jnp.float32)
            + b_lstm
        )                                                   # (1, 4Hp)
        i_g = jax.nn.sigmoid(gates[:, 0 * Hp:1 * Hp])       # lane-aligned slices
        f_g = jax.nn.sigmoid(gates[:, 1 * Hp:2 * Hp])
        g_g = jnp.tanh(gates[:, 2 * Hp:3 * Hp])
        o_g = jax.nn.sigmoid(gates[:, 3 * Hp:4 * Hp])
        c_new = f_g * c + i_g * g_g
        h_new = o_g * jnp.tanh(c_new)
        h_all_ref[pl.ds(t, 1), :] = h_new
        return h_new, c_new

    h_fin, c_fin = jax.lax.fori_loop(
        0, n_steps, step, (hc0_ref[0:1, :], hc0_ref[1:2, :]), unroll=True)
    hc_out_ref[0:1, :] = h_fin
    hc_out_ref[1:2, :] = c_fin

    # ---- batched, non-recurrent tail over all T steps ------------------------
    h_all = h_all_ref[...]                                              # (Tp, Hp)
    raw = (jnp.dot(h_all, w_goal_ref[...], preferred_element_type=jnp.float32)
           + bias_ref[:, 4 * Hp:])                                      # (Tp, AKp)
    # Dilated deque of maxlen=dilation == banded lower-triangular window matmul.
    goal_sum = jnp.dot(win_ref[...], raw, preferred_element_type=jnp.float32)
    # Per-agent L2 norm via block-diagonal 0/1 mask (no reshape of narrow cols).
    norms_sq = jnp.dot(goal_sum * goal_sum, m_ref[...],
                       preferred_element_type=jnp.float32)              # (Tp, AKp)
    inv = jax.lax.rsqrt(jnp.maximum(norms_sq, 1e-24))   # == 1 / max(||v||, 1e-12)
    goals_ref[0, :, :] = goal_sum * inv
    goals_ref[1, :, :] = raw


def pack_manager_params(params, *, n_agents, k_dim, input_size):
    """One-time host-side fusion / lane padding of the module parameters."""
    H = params["w_hh"].shape[0]
    I = input_size
    Hp = _round_up(H, 128)          # pad hidden so each gate block is lane-aligned
    Ip = _round_up(I, 128)
    ak = n_agents * k_dim
    akp = _round_up(ak, 128)

    def pad_gate_cols(w, rows_out):
        # (rows_in, 4H) -> (rows_out, 4Hp), each gate block padded independently.
        rows_in = w.shape[0]
        out = jnp.zeros((rows_out, 4 * Hp), jnp.float32)
        for g in range(4):
            out = out.at[:rows_in, g * Hp:g * Hp + H].set(w[:, g * H:(g + 1) * H])
        return out

    w_lstm = jnp.concatenate(
        [pad_gate_cols(params["w_ih"], Ip), pad_gate_cols(params["w_hh"], Hp)],
        axis=0)                                                   # (Ip+Hp, 4Hp)
    b_lstm = pad_gate_cols(params["b_ih"] + params["b_hh"], 1)    # (1, 4Hp)

    w_goal = jnp.zeros((Hp, akp), jnp.float32).at[:H, :ak].set(params["w_goal"])
    b_goal = jnp.zeros((1, akp), jnp.float32).at[:, :ak].set(params["b_goal"])
    biases = jnp.concatenate([b_lstm, b_goal], axis=-1)           # (1, 4Hp+AKp)

    lane = jnp.arange(akp)
    valid = lane < ak
    grp = lane // k_dim
    m = ((grp[:, None] == grp[None, :])
         & valid[:, None] & valid[None, :]).astype(jnp.float32)   # (AKp, AKp)

    return {"w_lstm": w_lstm, "w_goal": w_goal, "biases": biases, "m": m,
            "H": H, "Hp": Hp, "I": I, "Ip": Ip, "ak": ak, "akp": akp}


def feudal_manager_rollout(xs, hidden_state, packed, *, n_agents, k_dim, dilation):
    """Run T forward() steps of Feudal_ManagerAgent in a single pallas_call.

    xs:            (T, 1, input_size)
    hidden_state:  (h0, c0), each (1, hidden)
    Returns (goal_norm (T, n_agents, k), (h, c) final, raw_goal (T, n_agents, k)).
    """
    h0, c0 = hidden_state
    T = xs.shape[0]
    I = xs.shape[-1]
    H, Hp, Ip = packed["H"], packed["Hp"], packed["Ip"]
    ak, akp = packed["ak"], packed["akp"]
    Tp = _round_up(T, 8)

    xs_pad = jnp.zeros((Tp, Ip), jnp.float32).at[:T, :I].set(xs.reshape(T, I))
    hc0 = (jnp.zeros((2, Hp), jnp.float32)
           .at[0, :H].set(h0[0]).at[1, :H].set(c0[0]))

    # win[t, s] = 1 iff step s is in the dilated deque at step t.
    t_idx = jnp.arange(Tp)
    win = ((t_idx[None, :] <= t_idx[:, None])
           & (t_idx[None, :] > t_idx[:, None] - dilation)).astype(jnp.float32)

    kernel = functools.partial(feudal_manager_kernel,
                               hidden_p=Hp, input_p=Ip, n_steps=T)
    vmem_full = pl.BlockSpec(memory_space=pltpu.MemorySpace.VMEM)

    goals, hc_out = pl.pallas_call(
        kernel,
        out_shape=(
            jax.ShapeDtypeStruct((2, Tp, akp), jnp.float32),
            jax.ShapeDtypeStruct((2, Hp), jnp.float32),
        ),
        in_specs=[vmem_full] * 7,
        out_specs=(vmem_full, vmem_full),
        scratch_shapes=[pltpu.VMEM((Tp, Hp), jnp.float32)],
    )(xs_pad, hc0, packed["w_lstm"], packed["w_goal"], packed["biases"],
      packed["m"], win)

    goal_norm = goals[0, :T, :ak].reshape(T, n_agents, k_dim)
    raw_goal = goals[1, :T, :ak].reshape(T, n_agents, k_dim)
    return goal_norm, (hc_out[0:1, :H], hc_out[1:2, :H]), raw_goal


def reference_rollout(xs, hidden_state, params, *, n_agents, k_dim, dilation):
    """Pure-JAX per-step reference mirroring the PyTorch module semantics."""
    h, c = hidden_state
    H = h.shape[-1]
    buf = []
    goal_norms, raw_goals = [], []
    for t in range(xs.shape[0]):
        x = xs[t]  # (1, I)
        gates = (x @ params["w_ih"] + params["b_ih"]
                 + h @ params["w_hh"] + params["b_hh"])
        i = jax.nn.sigmoid(gates[:, 0 * H:1 * H])
        f = jax.nn.sigmoid(gates[:, 1 * H:2 * H])
        g = jnp.tanh(gates[:, 2 * H:3 * H])
        o = jax.nn.sigmoid(gates[:, 3 * H:4 * H])
        c = f * c + i * g
        h = o * jnp.tanh(c)
        raw = (h @ params["w_goal"] + params["b_goal"]).reshape(1, n_agents, k_dim)
        buf.append(raw)
        if len(buf) > dilation:
            buf.pop(0)
        gsum = jnp.sum(jnp.stack(buf), axis=0)                        # (1, A, K)
        norm = jnp.sqrt(jnp.sum(gsum * gsum, axis=-1, keepdims=True))
        gnorm = gsum / jnp.maximum(norm, 1e-12)                       # F.normalize
        goal_norms.append(gnorm[0])
        raw_goals.append(raw[0])
    return jnp.stack(goal_norms), (h, c), jnp.stack(raw_goals)


if __name__ == "__main__":
    # Small shapes consistent with the module (5v5 manager, batch of 1 per step).
    T = 8            # rollout length (number of forward() calls fused)
    input_size = 96  # manager input feature dim
    hidden = 64      # args.manager_hidden_dim
    k_dim = 16       # args.embedding_dim_k
    n_agents = 5     # 5v5
    dilation = 4     # args.manager_dilation (deque maxlen)

    key = jax.random.PRNGKey(0)
    ks = jax.random.split(key, 10)
    scale = 0.1
    params = {
        "w_ih":   scale * jax.random.normal(ks[0], (input_size, 4 * hidden), jnp.float32),
        "b_ih":   scale * jax.random.normal(ks[1], (1, 4 * hidden), jnp.float32),
        "w_hh":   scale * jax.random.normal(ks[2], (hidden, 4 * hidden), jnp.float32),
        "b_hh":   scale * jax.random.normal(ks[3], (1, 4 * hidden), jnp.float32),
        "w_goal": scale * jax.random.normal(ks[4], (hidden, n_agents * k_dim), jnp.float32),
        "b_goal": scale * jax.random.normal(ks[5], (1, n_agents * k_dim), jnp.float32),
    }

    xs = jax.random.normal(ks[6], (T, 1, input_size), jnp.float32)
    h0 = jnp.zeros((1, hidden), jnp.float32)   # init_hidden()
    c0 = jnp.zeros((1, hidden), jnp.float32)

    packed = pack_manager_params(params, n_agents=n_agents, k_dim=k_dim,
                                 input_size=input_size)

    goal_norm, (h, c), raw_goal = feudal_manager_rollout(
        xs, (h0, c0), packed, n_agents=n_agents, k_dim=k_dim, dilation=dilation)
    jax.block_until_ready((goal_norm, h, c, raw_goal))

    ref_goal_norm, (ref_h, ref_c), ref_raw = reference_rollout(
        xs, (h0, c0), params, n_agents=n_agents, k_dim=k_dim, dilation=dilation)

    assert jnp.allclose(goal_norm, ref_goal_norm, atol=1e-4, rtol=1e-4)
    assert jnp.allclose(raw_goal, ref_raw, atol=1e-4, rtol=1e-4)
    assert jnp.allclose(h, ref_h, atol=1e-4, rtol=1e-4)
    assert jnp.allclose(c, ref_c, atol=1e-4, rtol=1e-4)

    print("KERNEL_OK")
</pallas_src>

<mosaic_0001>
module attributes {stable_mosaic.version = 11 : i64} {
  func.func @feudal_manager_kernel(%arg0: memref<8x128xf32, #tpu.memory_space<vmem>>, %arg1: memref<2x128xf32, #tpu.memory_space<vmem>>, %arg2: memref<256x512xf32, #tpu.memory_space<vmem>>, %arg3: memref<128x128xf32, #tpu.memory_space<vmem>>, %arg4: memref<1x640xf32, #tpu.memory_space<vmem>>, %arg5: memref<128x128xf32, #tpu.memory_space<vmem>>, %arg6: memref<8x8xf32, #tpu.memory_space<vmem>>, %arg7: memref<2x8x128xf32, #tpu.memory_space<vmem>>, %arg8: memref<2x128xf32, #tpu.memory_space<vmem>>, %arg9: memref<8x128xf32, #tpu.memory_space<vmem>>) attributes {dimension_semantics = [], scalar_prefetch = 0 : i64, scratch_operands = 1 : i64, tpu.core_type = #tpu.core_type<tc>} {
    %cst = arith.constant 0.000000e+00 : f32
    %0 = vector.broadcast %cst : f32 to vector<8x128xf32>
    %c0 = arith.constant 0 : index
    %c0_0 = arith.constant 0 : index
    %1 = vector.load %arg9[%c0, %c0_0] : memref<8x128xf32, #tpu.memory_space<vmem>>, vector<8x128xf32>
    tpu.vector_store %arg9[%c0, %c0_0], %0 {strides = array<i32>} : memref<8x128xf32, #tpu.memory_space<vmem>>, vector<8x128xf32>,
    %c0_1 = arith.constant 0 : index
    %c0_2 = arith.constant 0 : index
    %2 = vector.load %arg4[%c0_1, %c0_2] : memref<1x640xf32, #tpu.memory_space<vmem>>, vector<1x512xf32>
    %c0_3 = arith.constant 0 : index
    %c0_4 = arith.constant 0 : index
    %3 = vector.load %arg1[%c0_3, %c0_4] : memref<2x128xf32, #tpu.memory_space<vmem>>, vector<1x128xf32>
    %c1 = arith.constant 1 : index
    %c0_5 = arith.constant 0 : index
    %4 = vector.load %arg1[%c1, %c0_5] : memref<2x128xf32, #tpu.memory_space<vmem>>, vector<1x128xf32>
    %c0_i32 = arith.constant 0 : i32
    %5 = arith.index_cast %c0_i32 : i32 to index
    %c0_6 = arith.constant 0 : index
    %6 = vector.load %arg0[%5, %c0_6] : memref<8x128xf32, #tpu.memory_space<vmem>>, vector<1x128xf32>
    %c0_7 = arith.constant 0 : index
    %c0_8 = arith.constant 0 : index
    %7 = vector.load %arg2[%c0_7, %c0_8] : memref<256x512xf32, #tpu.memory_space<vmem>>, vector<128x512xf32>
    %cst_9 = arith.constant dense<0.000000e+00> : vector<1x512xf32>
    %8 = tpu.matmul %6, %7, %cst_9 {dimension_numbers = #tpu.dot_dimension_numbers<[1], [0], [0], [1], [0, 0, 1, 1], [], []>} : vector<1x128xf32>, vector<128x512xf32>, vector<1x512xf32> -> vector<1x512xf32>
    %c128 = arith.constant 128 : index
    %c0_10 = arith.constant 0 : index
    %9 = vector.load %arg2[%c128, %c0_10] : memref<256x512xf32, #tpu.memory_space<vmem>>, vector<128x512xf32>
    %cst_11 = arith.constant dense<0.000000e+00> : vector<1x512xf32>
    %10 = tpu.matmul %3, %9, %cst_11 {dimension_numbers = #tpu.dot_dimension_numbers<[1], [0], [0], [1], [0, 0, 1, 1], [], []>} : vector<1x128xf32>, vector<128x512xf32>, vector<1x512xf32> -> vector<1x512xf32>
    %11 = arith.addf %8, %10 : vector<1x512xf32>
    %12 = arith.addf %11, %2 : vector<1x512xf32>
    %13 = vector.extract_strided_slice %12 {offsets = [0, 0], sizes = [1, 128], strides = [1, 1]} : vector<1x512xf32> to vector<1x128xf32>
    %14 = arith.negf %13 : vector<1x128xf32>
    %15 = math.exp %14 : vector<1x128xf32>
    %cst_12 = arith.constant 1.000000e+00 : f32
    %16 = vector.broadcast %cst_12 : f32 to vector<1x128xf32>
    %17 = arith.addf %16, %15 : vector<1x128xf32>
    %18 = arith.divf %16, %17 : vector<1x128xf32>
    %19 = vector.extract_strided_slice %12 {offsets = [0, 128], sizes = [1, 128], strides = [1, 1]} : vector<1x512xf32> to vector<1x128xf32>
    %20 = arith.negf %19 : vector<1x128xf32>
    %21 = math.exp %20 : vector<1x128xf32>
    %cst_13 = arith.constant 1.000000e+00 : f32
    %22 = vector.broadcast %cst_13 : f32 to vector<1x128xf32>
    %23 = arith.addf %22, %21 : vector<1x128xf32>
    %24 = arith.divf %22, %23 : vector<1x128xf32>
    %25 = vector.extract_strided_slice %12 {offsets = [0, 256], sizes = [1, 128], strides = [1, 1]} : vector<1x512xf32> to vector<1x128xf32>
    %26 = math.tanh %25 : vector<1x128xf32>
    %27 = vector.extract_strided_slice %12 {offsets = [0, 384], sizes = [1, 128], strides = [1, 1]} : vector<1x512xf32> to vector<1x128xf32>
    %28 = arith.negf %27 : vector<1x128xf32>
    %29 = math.exp %28 : vector<1x128xf32>
    %cst_14 = arith.constant 1.000000e+00 : f32
    %30 = vector.broadcast %cst_14 : f32 to vector<1x128xf32>
    %31 = arith.addf %30, %29 : vector<1x128xf32>
    %32 = arith.divf %30, %31 : vector<1x128xf32>
    %33 = arith.mulf %24, %4 : vector<1x128xf32>
    %34 = arith.mulf %18, %26 : vector<1x128xf32>
    %35 = arith.addf %33, %34 : vector<1x128xf32>
    %36 = math.tanh %35 : vector<1x128xf32>
    %37 = arith.mulf %32, %36 : vector<1x128xf32>
    %38 = arith.index_cast %c0_i32 : i32 to index
    %c0_15 = arith.constant 0 : index
    %39 = vector.load %arg9[%38, %c0_15] : memref<8x128xf32, #tpu.memory_space<vmem>>, vector<1x128xf32>
    tpu.vector_store %arg9[%38, %c0_15], %37 {strides = array<i32>} : memref<8x128xf32, #tpu.memory_space<vmem>>, vector<1x128xf32>,
    %c1_i32 = arith.constant 1 : i32
    %40 = arith.index_cast %c1_i32 : i32 to index
    %c0_16 = arith.constant 0 : index
    %41 = vector.load %arg0[%40, %c0_16] : memref<8x128xf32, #tpu.memory_space<vmem>>, vector<1x128xf32>
    %c0_17 = arith.constant 0 : index
    %c0_18 = arith.constant 0 : index
    %42 = vector.load %arg2[%c0_17, %c0_18] : memref<256x512xf32, #tpu.memory_space<vmem>>, vector<128x512xf32>
    %cst_19 = arith.constant dense<0.000000e+00> : vector<1x512xf32>
    %43 = tpu.matmul %41, %42, %cst_19 {dimension_numbers = #tpu.dot_dimension_numbers<[1], [0], [0], [1], [0, 0, 1, 1], [], []>} : vector<1x128xf32>, vector<128x512xf32>, vector<1x512xf32> -> vector<1x512xf32>
    %c128_20 = arith.constant 128 : index
    %c0_21 = arith.constant 0 : index
    %44 = vector.load %arg2[%c128_20, %c0_21] : memref<256x512xf32, #tpu.memory_space<vmem>>, vector<128x512xf32>
    %cst_22 = arith.constant dense<0.000000e+00> : vector<1x512xf32>
    %45 = tpu.matmul %37, %44, %cst_22 {dimension_numbers = #tpu.dot_dimension_numbers<[1], [0], [0], [1], [0, 0, 1, 1], [], []>} : vector<1x128xf32>, vector<128x512xf32>, vector<1x512xf32> -> vector<1x512xf32>
    %46 = arith.addf %43, %45 : vector<1x512xf32>
    %47 = arith.addf %46, %2 : vector<1x512xf32>
    %48 = vector.extract_strided_slice %47 {offsets = [0, 0], sizes = [1, 128], strides = [1, 1]} : vector<1x512xf32> to vector<1x128xf32>
    %49 = arith.negf %48 : vector<1x128xf32>
    %50 = math.exp %49 : vector<1x128xf32>
    %cst_23 = arith.constant 1.000000e+00 : f32
    %51 = vector.broadcast %cst_23 : f32 to vector<1x128xf32>
    %52 = arith.addf %51, %50 : vector<1x128xf32>
    %53 = arith.divf %51, %52 : vector<1x128xf32>
    %54 = vector.extract_strided_slice %47 {offsets = [0, 128], sizes = [1, 128], strides = [1, 1]} : vector<1x512xf32> to vector<1x128xf32>
    %55 = arith.negf %54 : vector<1x128xf32>
    %56 = math.exp %55 : vector<1x128xf32>
    %cst_24 = arith.constant 1.000000e+00 : f32
    %57 = vector.broadcast %cst_24 : f32 to vector<1x128xf32>
    %58 = arith.addf %57, %56 : vector<1x128xf32>
    %59 = arith.divf %57, %58 : vector<1x128xf32>
    %60 = vector.extract_strided_slice %47 {offsets = [0, 256], sizes = [1, 128], strides = [1, 1]} : vector<1x512xf32> to vector<1x128xf32>
    %61 = math.tanh %60 : vector<1x128xf32>
    %62 = vector.extract_strided_slice %47 {offsets = [0, 384], sizes = [1, 128], strides = [1, 1]} : vector<1x512xf32> to vector<1x128xf32>
    %63 = arith.negf %62 : vector<1x128xf32>
    %64 = math.exp %63 : vector<1x128xf32>
    %cst_25 = arith.constant 1.000000e+00 : f32
    %65 = vector.broadcast %cst_25 : f32 to vector<1x128xf32>
    %66 = arith.addf %65, %64 : vector<1x128xf32>
    %67 = arith.divf %65, %66 : vector<1x128xf32>
    %68 = arith.mulf %59, %35 : vector<1x128xf32>
    %69 = arith.mulf %53, %61 : vector<1x128xf32>
    %70 = arith.addf %68, %69 : vector<1x128xf32>
    %71 = math.tanh %70 : vector<1x128xf32>
    %72 = arith.mulf %67, %71 : vector<1x128xf32>
    %73 = arith.index_cast %c1_i32 : i32 to index
    %c0_26 = arith.constant 0 : index
    %74 = vector.load %arg9[%73, %c0_26] : memref<8x128xf32, #tpu.memory_space<vmem>>, vector<1x128xf32>
    tpu.vector_store %arg9[%73, %c0_26], %72 {strides = array<i32>} : memref<8x128xf32, #tpu.memory_space<vmem>>, vector<1x128xf32>,
    %c2_i32 = arith.constant 2 : i32
    %75 = arith.index_cast %c2_i32 : i32 to index
    %c0_27 = arith.constant 0 : index
    %76 = vector.load %arg0[%75, %c0_27] : memref<8x128xf32, #tpu.memory_space<vmem>>, vector<1x128xf32>
    %c0_28 = arith.constant 0 : index
    %c0_29 = arith.constant 0 : index
    %77 = vector.load %arg2[%c0_28, %c0_29] : memref<256x512xf32, #tpu.memory_space<vmem>>, vector<128x512xf32>
    %cst_30 = arith.constant dense<0.000000e+00> : vector<1x512xf32>
    %78 = tpu.matmul %76, %77, %cst_30 {dimension_numbers = #tpu.dot_dimension_numbers<[1], [0], [0], [1], [0, 0, 1, 1], [], []>} : vector<1x128xf32>, vector<128x512xf32>, vector<1x512xf32> -> vector<1x512xf32>
    %c128_31 = arith.constant 128 : index
    %c0_32 = arith.constant 0 : index
    %79 = vector.load %arg2[%c128_31, %c0_32] : memref<256x512xf32, #tpu.memory_space<vmem>>, vector<128x512xf32>
    %cst_33 = arith.constant dense<0.000000e+00> : vector<1x512xf32>
    %80 = tpu.matmul %72, %79, %cst_33 {dimension_numbers = #tpu.dot_dimension_numbers<[1], [0], [0], [1], [0, 0, 1, 1], [], []>} : vector<1x128xf32>, vector<128x512xf32>, vector<1x512xf32> -> vector<1x512xf32>
    %81 = arith.addf %78, %80 : vector<1x512xf32>
    %82 = arith.addf %81, %2 : vector<1x512xf32>
    %83 = vector.extract_strided_slice %82 {offsets = [0, 0], sizes = [1, 128], strides = [1, 1]} : vector<1x512xf32> to vector<1x128xf32>
    %84 = arith.negf %83 : vector<1x128xf32>
    %85 = math.exp %84 : vector<1x128xf32>
    %cst_34 = arith.constant 1.000000e+00 : f32
    %86 = vector.broadcast %cst_34 : f32 to vector<1x128xf32>
    %87 = arith.addf %86, %85 : vector<1x128xf32>
    %88 = arith.divf %86, %87 : vector<1x128xf32>
    %89 = vector.extract_strided_slice %82 {offsets = [0, 128], sizes = [1, 128], strides = [1, 1]} : vector<1x512xf32> to vector<1x128xf32>
    %90 = arith.negf %89 : vector<1x128xf32>
    %91 = math.exp %90 : vector<1x128xf32>
    %cst_35 = arith.constant 1.000000e+00 : f32
    %92 = vector.broadcast %cst_35 : f32 to vector<1x128xf32>
    %93 = arith.addf %92, %91 : vector<1x128xf32>
    %94 = arith.divf %92, %93 : vector<1x128xf32>
    %95 = vector.extract_strided_slice %82 {offsets = [0, 256], sizes = [1, 128], strides = [1, 1]} : vector<1x512xf32> to vector<1x128xf32>
    %96 = math.tanh %95 : vector<1x128xf32>
    %97 = vector.extract_strided_slice %82 {offsets = [0, 384], sizes = [1, 128], strides = [1, 1]} : vector<1x512xf32> to vector<1x128xf32>
    %98 = arith.negf %97 : vector<1x128xf32>
    %99 = math.exp %98 : vector<1x128xf32>
    %cst_36 = arith.constant 1.000000e+00 : f32
    %100 = vector.broadcast %cst_36 : f32 to vector<1x128xf32>
    %101 = arith.addf %100, %99 : vector<1x128xf32>
    %102 = arith.divf %100, %101 : vector<1x128xf32>
    %103 = arith.mulf %94, %70 : vector<1x128xf32>
    %104 = arith.mulf %88, %96 : vector<1x128xf32>
    %105 = arith.addf %103, %104 : vector<1x128xf32>
    %106 = math.tanh %105 : vector<1x128xf32>
    %107 = arith.mulf %102, %106 : vector<1x128xf32>
    %108 = arith.index_cast %c2_i32 : i32 to index
    %c0_37 = arith.constant 0 : index
    %109 = vector.load %arg9[%108, %c0_37] : memref<8x128xf32, #tpu.memory_space<vmem>>, vector<1x128xf32>
    tpu.vector_store %arg9[%108, %c0_37], %107 {strides = array<i32>} : memref<8x128xf32, #tpu.memory_space<vmem>>, vector<1x128xf32>,
    %c3_i32 = arith.constant 3 : i32
    %110 = arith.index_cast %c3_i32 : i32 to index
    %c0_38 = arith.constant 0 : index
    %111 = vector.load %arg0[%110, %c0_38] : memref<8x128xf32, #tpu.memory_space<vmem>>, vector<1x128xf32>
    %c0_39 = arith.constant 0 : index
    %c0_40 = arith.constant 0 : index
    %112 = vector.load %arg2[%c0_39, %c0_40] : memref<256x512xf32, #tpu.memory_space<vmem>>, vector<128x512xf32>
    %cst_41 = arith.constant dense<0.000000e+00> : vector<1x512xf32>
    %113 = tpu.matmul %111, %112, %cst_41 {dimension_numbers = #tpu.dot_dimension_numbers<[1], [0], [0], [1], [0, 0, 1, 1], [], []>} : vector<1x128xf32>, vector<128x512xf32>, vector<1x512xf32> -> vector<1x512xf32>
    %c128_42 = arith.constant 128 : index
    %c0_43 = arith.constant 0 : index
    %114 = vector.load %arg2[%c128_42, %c0_43] : memref<256x512xf32, #tpu.memory_space<vmem>>, vector<128x512xf32>
    %cst_44 = arith.constant dense<0.000000e+00> : vector<1x512xf32>
    %115 = tpu.matmul %107, %114, %cst_44 {dimension_numbers = #tpu.dot_dimension_numbers<[1], [0], [0], [1], [0, 0, 1, 1], [], []>} : vector<1x128xf32>, vector<128x512xf32>, vector<1x512xf32> -> vector<1x512xf32>
    %116 = arith.addf %113, %115 : vector<1x512xf32>
    %117 = arith.addf %116, %2 : vector<1x512xf32>
    %118 = vector.extract_strided_slice %117 {offsets = [0, 0], sizes = [1, 128], strides = [1, 1]} : vector<1x512xf32> to vector<1x128xf32>
    %119 = arith.negf %118 : vector<1x128xf32>
    %120 = math.exp %119 : vector<1x128xf32>
    %cst_45 = arith.constant 1.000000e+00 : f32
    %121 = vector.broadcast %cst_45 : f32 to vector<1x128xf32>
    %122 = arith.addf %121, %120 : vector<1x128xf32>
    %123 = arith.divf %121, %122 : vector<1x128xf32>
    %124 = vector.extract_strided_slice %117 {offsets = [0, 128], sizes = [1, 128], strides = [1, 1]} : vector<1x512xf32> to vector<1x128xf32>
    %125 = arith.negf %124 : vector<1x128xf32>
    %126 = math.exp %125 : vector<1x128xf32>
    %cst_46 = arith.constant 1.000000e+00 : f32
    %127 = vector.broadcast %cst_46 : f32 to vector<1x128xf32>
    %128 = arith.addf %127, %126 : vector<1x128xf32>
    %129 = arith.divf %127, %128 : vector<1x128xf32>
    %130 = vector.extract_strided_slice %117 {offsets = [0, 256], sizes = [1, 128], strides = [1, 1]} : vector<1x512xf32> to vector<1x128xf32>
    %131 = math.tanh %130 : vector<1x128xf32>
    %132 = vector.extract_strided_slice %117 {offsets = [0, 384], sizes = [1, 128], strides = [1, 1]} : vector<1x512xf32> to vector<1x128xf32>
    %133 = arith.negf %132 : vector<1x128xf32>
    %134 = math.exp %133 : vector<1x128xf32>
    %cst_47 = arith.constant 1.000000e+00 : f32
    %135 = vector.broadcast %cst_47 : f32 to vector<1x128xf32>
    %136 = arith.addf %135, %134 : vector<1x128xf32>
    %137 = arith.divf %135, %136 : vector<1x128xf32>
    %138 = arith.mulf %129, %105 : vector<1x128xf32>
    %139 = arith.mulf %123, %131 : vector<1x128xf32>
    %140 = arith.addf %138, %139 : vector<1x128xf32>
    %141 = math.tanh %140 : vector<1x128xf32>
    %142 = arith.mulf %137, %141 : vector<1x128xf32>
    %143 = arith.index_cast %c3_i32 : i32 to index
    %c0_48 = arith.constant 0 : index
    %144 = vector.load %arg9[%143, %c0_48] : memref<8x128xf32, #tpu.memory_space<vmem>>, vector<1x128xf32>
    tpu.vector_store %arg9[%143, %c0_48], %142 {strides = array<i32>} : memref<8x128xf32, #tpu.memory_space<vmem>>, vector<1x128xf32>,
    %c4_i32 = arith.constant 4 : i32
    %145 = arith.index_cast %c4_i32 : i32 to index
    %c0_49 = arith.constant 0 : index
    %146 = vector.load %arg0[%145, %c0_49] : memref<8x128xf32, #tpu.memory_space<vmem>>, vector<1x128xf32>
    %c0_50 = arith.constant 0 : index
    %c0_51 = arith.constant 0 : index
    %147 = vector.load %arg2[%c0_50, %c0_51] : memref<256x512xf32, #tpu.memory_space<vmem>>, vector<128x512xf32>
    %cst_52 = arith.constant dense<0.000000e+00> : vector<1x512xf32>
    %148 = tpu.matmul %146, %147, %cst_52 {dimension_numbers = #tpu.dot_dimension_numbers<[1], [0], [0], [1], [0, 0, 1, 1], [], []>} : vector<1x128xf32>, vector<128x512xf32>, vector<1x512xf32> -> vector<1x512xf32>
    %c128_53 = arith.constant 128 : index
    %c0_54 = arith.constant 0 : index
    %149 = vector.load %arg2[%c128_53, %c0_54] : memref<256x512xf32, #tpu.memory_space<vmem>>, vector<128x512xf32>
    %cst_55 = arith.constant dense<0.000000e+00> : vector<1x512xf32>
    %150 = tpu.matmul %142, %149, %cst_55 {dimension_numbers = #tpu.dot_dimension_numbers<[1], [0], [0], [1], [0, 0, 1, 1], [], []>} : vector<1x128xf32>, vector<128x512xf32>, vector<1x512xf32> -> vector<1x512xf32>
    %151 = arith.addf %148, %150 : vector<1x512xf32>
    %152 = arith.addf %151, %2 : vector<1x512xf32>
    %153 = vector.extract_strided_slice %152 {offsets = [0, 0], sizes = [1, 128], strides = [1, 1]} : vector<1x512xf32> to vector<1x128xf32>
    %154 = arith.negf %153 : vector<1x128xf32>
    %155 = math.exp %154 : vector<1x128xf32>
    %cst_56 = arith.constant 1.000000e+00 : f32
    %156 = vector.broadcast %cst_56 : f32 to vector<1x128xf32>
    %157 = arith.addf %156, %155 : vector<1x128xf32>
    %158 = arith.divf %156, %157 : vector<1x128xf32>
    %159 = vector.extract_strided_slice %152 {offsets = [0, 128], sizes = [1, 128], strides = [1, 1]} : vector<1x512xf32> to vector<1x128xf32>
    %160 = arith.negf %159 : vector<1x128xf32>
    %161 = math.exp %160 : vector<1x128xf32>
    %cst_57 = arith.constant 1.000000e+00 : f32
    %162 = vector.broadcast %cst_57 : f32 to vector<1x128xf32>
    %163 = arith.addf %162, %161 : vector<1x128xf32>
    %164 = arith.divf %162, %163 : vector<1x128xf32>
    %165 = vector.extract_strided_slice %152 {offsets = [0, 256], sizes = [1, 128], strides = [1, 1]} : vector<1x512xf32> to vector<1x128xf32>
    %166 = math.tanh %165 : vector<1x128xf32>
    %167 = vector.extract_strided_slice %152 {offsets = [0, 384], sizes = [1, 128], strides = [1, 1]} : vector<1x512xf32> to vector<1x128xf32>
    %168 = arith.negf %167 : vector<1x128xf32>
    %169 = math.exp %168 : vector<1x128xf32>
    %cst_58 = arith.constant 1.000000e+00 : f32
    %170 = vector.broadcast %cst_58 : f32 to vector<1x128xf32>
    %171 = arith.addf %170, %169 : vector<1x128xf32>
    %172 = arith.divf %170, %171 : vector<1x128xf32>
    %173 = arith.mulf %164, %140 : vector<1x128xf32>
    %174 = arith.mulf %158, %166 : vector<1x128xf32>
    %175 = arith.addf %173, %174 : vector<1x128xf32>
    %176 = math.tanh %175 : vector<1x128xf32>
    %177 = arith.mulf %172, %176 : vector<1x128xf32>
    %178 = arith.index_cast %c4_i32 : i32 to index
    %c0_59 = arith.constant 0 : index
    %179 = vector.load %arg9[%178, %c0_59] : memref<8x128xf32, #tpu.memory_space<vmem>>, vector<1x128xf32>
    tpu.vector_store %arg9[%178, %c0_59], %177 {strides = array<i32>} : memref<8x128xf32, #tpu.memory_space<vmem>>, vector<1x128xf32>,
    %c5_i32 = arith.constant 5 : i32
    %180 = arith.index_cast %c5_i32 : i32 to index
    %c0_60 = arith.constant 0 : index
    %181 = vector.load %arg0[%180, %c0_60] : memref<8x128xf32, #tpu.memory_space<vmem>>, vector<1x128xf32>
    %c0_61 = arith.constant 0 : index
    %c0_62 = arith.constant 0 : index
    %182 = vector.load %arg2[%c0_61, %c0_62] : memref<256x512xf32, #tpu.memory_space<vmem>>, vector<128x512xf32>
    %cst_63 = arith.constant dense<0.000000e+00> : vector<1x512xf32>
    %183 = tpu.matmul %181, %182, %cst_63 {dimension_numbers = #tpu.dot_dimension_numbers<[1], [0], [0], [1], [0, 0, 1, 1], [], []>} : vector<1x128xf32>, vector<128x512xf32>, vector<1x512xf32> -> vector<1x512xf32>
    %c128_64 = arith.constant 128 : index
    %c0_65 = arith.constant 0 : index
    %184 = vector.load %arg2[%c128_64, %c0_65] : memref<256x512xf32, #tpu.memory_space<vmem>>, vector<128x512xf32>
    %cst_66 = arith.constant dense<0.000000e+00> : vector<1x512xf32>
    %185 = tpu.matmul %177, %184, %cst_66 {dimension_numbers = #tpu.dot_dimension_numbers<[1], [0], [0], [1], [0, 0, 1, 1], [], []>} : vector<1x128xf32>, vector<128x512xf32>, vector<1x512xf32> -> vector<1x512xf32>
    %186 = arith.addf %183, %185 : vector<1x512xf32>
    %187 = arith.addf %186, %2 : vector<1x512xf32>
    %188 = vector.extract_strided_slice %187 {offsets = [0, 0], sizes = [1, 128], strides = [1, 1]} : vector<1x512xf32> to vector<1x128xf32>
    %189 = arith.negf %188 : vector<1x128xf32>
    %190 = math.exp %189 : vector<1x128xf32>
    %cst_67 = arith.constant 1.000000e+00 : f32
    %191 = vector.broadcast %cst_67 : f32 to vector<1x128xf32>
    %192 = arith.addf %191, %190 : vector<1x128xf32>
    %193 = arith.divf %191, %192 : vector<1x128xf32>
    %194 = vector.extract_strided_slice %187 {offsets = [0, 128], sizes = [1, 128], strides = [1, 1]} : vector<1x512xf32> to vector<1x128xf32>
    %195 = arith.negf %194 : vector<1x128xf32>
    %196 = math.exp %195 : vector<1x128xf32>
    %cst_68 = arith.constant 1.000000e+00 : f32
    %197 = vector.broadcast %cst_68 : f32 to vector<1x128xf32>
    %198 = arith.addf %197, %196 : vector<1x128xf32>
    %199 = arith.divf %197, %198 : vector<1x128xf32>
    %200 = vector.extract_strided_slice %187 {offsets = [0, 256], sizes = [1, 128], strides = [1, 1]} : vector<1x512xf32> to vector<1x128xf32>
    %201 = math.tanh %200 : vector<1x128xf32>
    %202 = vector.extract_strided_slice %187 {offsets = [0, 384], sizes = [1, 128], strides = [1, 1]} : vector<1x512xf32> to vector<1x128xf32>
    %203 = arith.negf %202 : vector<1x128xf32>
    %204 = math.exp %203 : vector<1x128xf32>
    %cst_69 = arith.constant 1.000000e+00 : f32
    %205 = vector.broadcast %cst_69 : f32 to vector<1x128xf32>
    %206 = arith.addf %205, %204 : vector<1x128xf32>
    %207 = arith.divf %205, %206 : vector<1x128xf32>
    %208 = arith.mulf %199, %175 : vector<1x128xf32>
    %209 = arith.mulf %193, %201 : vector<1x128xf32>
    %210 = arith.addf %208, %209 : vector<1x128xf32>
    %211 = math.tanh %210 : vector<1x128xf32>
    %212 = arith.mulf %207, %211 : vector<1x128xf32>
    %213 = arith.index_cast %c5_i32 : i32 to index
    %c0_70 = arith.constant 0 : index
    %214 = vector.load %arg9[%213, %c0_70] : memref<8x128xf32, #tpu.memory_space<vmem>>, vector<1x128xf32>
    tpu.vector_store %arg9[%213, %c0_70], %212 {strides = array<i32>} : memref<8x128xf32, #tpu.memory_space<vmem>>, vector<1x128xf32>,
    %c6_i32 = arith.constant 6 : i32
    %215 = arith.index_cast %c6_i32 : i32 to index
    %c0_71 = arith.constant 0 : index
    %216 = vector.load %arg0[%215, %c0_71] : memref<8x128xf32, #tpu.memory_space<vmem>>, vector<1x128xf32>
    %c0_72 = arith.constant 0 : index
    %c0_73 = arith.constant 0 : index
    %217 = vector.load %arg2[%c0_72, %c0_73] : memref<256x512xf32, #tpu.memory_space<vmem>>, vector<128x512xf32>
    %cst_74 = arith.constant dense<0.000000e+00> : vector<1x512xf32>
    %218 = tpu.matmul %216, %217, %cst_74 {dimension_numbers = #tpu.dot_dimension_numbers<[1], [0], [0], [1], [0, 0, 1, 1], [], []>} : vector<1x128xf32>, vector<128x512xf32>, vector<1x512xf32> -> vector<1x512xf32>
    %c128_75 = arith.constant 128 : index
    %c0_76 = arith.constant 0 : index
    %219 = vector.load %arg2[%c128_75, %c0_76] : memref<256x512xf32, #tpu.memory_space<vmem>>, vector<128x512xf32>
    %cst_77 = arith.constant dense<0.000000e+00> : vector<1x512xf32>
    %220 = tpu.matmul %212, %219, %cst_77 {dimension_numbers = #tpu.dot_dimension_numbers<[1], [0], [0], [1], [0, 0, 1, 1], [], []>} : vector<1x128xf32>, vector<128x512xf32>, vector<1x512xf32> -> vector<1x512xf32>
    %221 = arith.addf %218, %220 : vector<1x512xf32>
    %222 = arith.addf %221, %2 : vector<1x512xf32>
    %223 = vector.extract_strided_slice %222 {offsets = [0, 0], sizes = [1, 128], strides = [1, 1]} : vector<1x512xf32> to vector<1x128xf32>
    %224 = arith.negf %223 : vector<1x128xf32>
    %225 = math.exp %224 : vector<1x128xf32>
    %cst_78 = arith.constant 1.000000e+00 : f32
    %226 = vector.broadcast %cst_78 : f32 to vector<1x128xf32>
    %227 = arith.addf %226, %225 : vector<1x128xf32>
    %228 = arith.divf %226, %227 : vector<1x128xf32>
    %229 = vector.extract_strided_slice %222 {offsets = [0, 128], sizes = [1, 128], strides = [1, 1]} : vector<1x512xf32> to vector<1x128xf32>
    %230 = arith.negf %229 : vector<1x128xf32>
    %231 = math.exp %230 : vector<1x128xf32>
    %cst_79 = arith.constant 1.000000e+00 : f32
    %232 = vector.broadcast %cst_79 : f32 to vector<1x128xf32>
    %233 = arith.addf %232, %231 : vector<1x128xf32>
    %234 = arith.divf %232, %233 : vector<1x128xf32>
    %235 = vector.extract_strided_slice %222 {offsets = [0, 256], sizes = [1, 128], strides = [1, 1]} : vector<1x512xf32> to vector<1x128xf32>
    %236 = math.tanh %235 : vector<1x128xf32>
    %237 = vector.extract_strided_slice %222 {offsets = [0, 384], sizes = [1, 128], strides = [1, 1]} : vector<1x512xf32> to vector<1x128xf32>
    %238 = arith.negf %237 : vector<1x128xf32>
    %239 = math.exp %238 : vector<1x128xf32>
    %cst_80 = arith.constant 1.000000e+00 : f32
    %240 = vector.broadcast %cst_80 : f32 to vector<1x128xf32>
    %241 = arith.addf %240, %239 : vector<1x128xf32>
    %242 = arith.divf %240, %241 : vector<1x128xf32>
    %243 = arith.mulf %234, %210 : vector<1x128xf32>
    %244 = arith.mulf %228, %236 : vector<1x128xf32>
    %245 = arith.addf %243, %244 : vector<1x128xf32>
    %246 = math.tanh %245 : vector<1x128xf32>
    %247 = arith.mulf %242, %246 : vector<1x128xf32>
    %248 = arith.index_cast %c6_i32 : i32 to index
    %c0_81 = arith.constant 0 : index
    %249 = vector.load %arg9[%248, %c0_81] : memref<8x128xf32, #tpu.memory_space<vmem>>, vector<1x128xf32>
    tpu.vector_store %arg9[%248, %c0_81], %247 {strides = array<i32>} : memref<8x128xf32, #tpu.memory_space<vmem>>, vector<1x128xf32>,
    %c7_i32 = arith.constant 7 : i32
    %250 = arith.index_cast %c7_i32 : i32 to index
    %c0_82 = arith.constant 0 : index
    %251 = vector.load %arg0[%250, %c0_82] : memref<8x128xf32, #tpu.memory_space<vmem>>, vector<1x128xf32>
    %c0_83 = arith.constant 0 : index
    %c0_84 = arith.constant 0 : index
    %252 = vector.load %arg2[%c0_83, %c0_84] : memref<256x512xf32, #tpu.memory_space<vmem>>, vector<128x512xf32>
    %cst_85 = arith.constant dense<0.000000e+00> : vector<1x512xf32>
    %253 = tpu.matmul %251, %252, %cst_85 {dimension_numbers = #tpu.dot_dimension_numbers<[1], [0], [0], [1], [0, 0, 1, 1], [], []>} : vector<1x128xf32>, vector<128x512xf32>, vector<1x512xf32> -> vector<1x512xf32>
    %c128_86 = arith.constant 128 : index
    %c0_87 = arith.constant 0 : index
    %254 = vector.load %arg2[%c128_86, %c0_87] : memref<256x512xf32, #tpu.memory_space<vmem>>, vector<128x512xf32>
    %cst_88 = arith.constant dense<0.000000e+00> : vector<1x512xf32>
    %255 = tpu.matmul %247, %254, %cst_88 {dimension_numbers = #tpu.dot_dimension_numbers<[1], [0], [0], [1], [0, 0, 1, 1], [], []>} : vector<1x128xf32>, vector<128x512xf32>, vector<1x512xf32> -> vector<1x512xf32>
    %256 = arith.addf %253, %255 : vector<1x512xf32>
    %257 = arith.addf %256, %2 : vector<1x512xf32>
    %258 = vector.extract_strided_slice %257 {offsets = [0, 0], sizes = [1, 128], strides = [1, 1]} : vector<1x512xf32> to vector<1x128xf32>
    %259 = arith.negf %258 : vector<1x128xf32>
    %260 = math.exp %259 : vector<1x128xf32>
    %cst_89 = arith.constant 1.000000e+00 : f32
    %261 = vector.broadcast %cst_89 : f32 to vector<1x128xf32>
    %262 = arith.addf %261, %260 : vector<1x128xf32>
    %263 = arith.divf %261, %262 : vector<1x128xf32>
    %264 = vector.extract_strided_slice %257 {offsets = [0, 128], sizes = [1, 128], strides = [1, 1]} : vector<1x512xf32> to vector<1x128xf32>
    %265 = arith.negf %264 : vector<1x128xf32>
    %266 = math.exp %265 : vector<1x128xf32>
    %cst_90 = arith.constant 1.000000e+00 : f32
    %267 = vector.broadcast %cst_90 : f32 to vector<1x128xf32>
    %268 = arith.addf %267, %266 : vector<1x128xf32>
    %269 = arith.divf %267, %268 : vector<1x128xf32>
    %270 = vector.extract_strided_slice %257 {offsets = [0, 256], sizes = [1, 128], strides = [1, 1]} : vector<1x512xf32> to vector<1x128xf32>
    %271 = math.tanh %270 : vector<1x128xf32>
    %272 = vector.extract_strided_slice %257 {offsets = [0, 384], sizes = [1, 128], strides = [1, 1]} : vector<1x512xf32> to vector<1x128xf32>
    %273 = arith.negf %272 : vector<1x128xf32>
    %274 = math.exp %273 : vector<1x128xf32>
    %cst_91 = arith.constant 1.000000e+00 : f32
    %275 = vector.broadcast %cst_91 : f32 to vector<1x128xf32>
    %276 = arith.addf %275, %274 : vector<1x128xf32>
    %277 = arith.divf %275, %276 : vector<1x128xf32>
    %278 = arith.mulf %269, %245 : vector<1x128xf32>
    %279 = arith.mulf %263, %271 : vector<1x128xf32>
    %280 = arith.addf %278, %279 : vector<1x128xf32>
    %281 = math.tanh %280 : vector<1x128xf32>
    %282 = arith.mulf %277, %281 : vector<1x128xf32>
    %283 = arith.index_cast %c7_i32 : i32 to index
    %c0_92 = arith.constant 0 : index
    %284 = vector.load %arg9[%283, %c0_92] : memref<8x128xf32, #tpu.memory_space<vmem>>, vector<1x128xf32>
    tpu.vector_store %arg9[%283, %c0_92], %282 {strides = array<i32>} : memref<8x128xf32, #tpu.memory_space<vmem>>, vector<1x128xf32>,
    %c8_i32 = arith.constant 8 : i32
    %c0_93 = arith.constant 0 : index
    %c0_94 = arith.constant 0 : index
    %285 = vector.load %arg8[%c0_93, %c0_94] : memref<2x128xf32, #tpu.memory_space<vmem>>, vector<1x128xf32>
    tpu.vector_store %arg8[%c0_93, %c0_94], %282 {strides = array<i32>} : memref<2x128xf32, #tpu.memory_space<vmem>>, vector<1x128xf32>,
    %c1_95 = arith.constant 1 : index
    %c0_96 = arith.constant 0 : index
    %286 = vector.load %arg8[%c1_95, %c0_96] : memref<2x128xf32, #tpu.memory_space<vmem>>, vector<1x128xf32>
    tpu.vector_store %arg8[%c1_95, %c0_96], %280 {strides = array<i32>} : memref<2x128xf32, #tpu.memory_space<vmem>>, vector<1x128xf32>,
    %c0_97 = arith.constant 0 : index
    %c0_98 = arith.constant 0 : index
    %287 = vector.load %arg9[%c0_97, %c0_98] : memref<8x128xf32, #tpu.memory_space<vmem>>, vector<8x128xf32>
    %c0_99 = arith.constant 0 : index
    %c0_100 = arith.constant 0 : index
    %288 = vector.load %arg3[%c0_99, %c0_100] : memref<128x128xf32, #tpu.memory_space<vmem>>, vector<128x128xf32>
    %cst_101 = arith.constant dense<0.000000e+00> : vector<8x128xf32>
    %289 = tpu.matmul %287, %288, %cst_101 {dimension_numbers = #tpu.dot_dimension_numbers<[1], [0], [0], [1], [0, 0, 1, 1], [], []>} : vector<8x128xf32>, vector<128x128xf32>, vector<8x128xf32> -> vector<8x128xf32>
    %c0_102 = arith.constant 0 : index
    %c512 = arith.constant 512 : index
    %290 = vector.load %arg4[%c0_102, %c512] : memref<1x640xf32, #tpu.memory_space<vmem>>, vector<1x128xf32>
    %291 = vector.broadcast %290 : vector<1x128xf32> to vector<8x128xf32>
    %292 = arith.addf %289, %291 : vector<8x128xf32>
    %c0_103 = arith.constant 0 : index
    %c0_104 = arith.constant 0 : index
    %293 = vector.load %arg6[%c0_103, %c0_104] : memref<8x8xf32, #tpu.memory_space<vmem>>, vector<8x8xf32>
    %cst_105 = arith.constant dense<0.000000e+00> : vector<8x128xf32>
    %294 = tpu.matmul %293, %292, %cst_105 {dimension_numbers = #tpu.dot_dimension_numbers<[1], [0], [0], [1], [0, 0, 1, 1], [], []>} : vector<8x8xf32>, vector<8x128xf32>, vector<8x128xf32> -> vector<8x128xf32>
    %295 = arith.mulf %294, %294 : vector<8x128xf32>
    %c0_106 = arith.constant 0 : index
    %c0_107 = arith.constant 0 : index
    %296 = vector.load %arg5[%c0_106, %c0_107] : memref<128x128xf32, #tpu.memory_space<vmem>>, vector<128x128xf32>
    %cst_108 = arith.constant dense<0.000000e+00> : vector<8x128xf32>
    %297 = tpu.matmul %295, %296, %cst_108 {dimension_numbers = #tpu.dot_dimension_numbers<[1], [0], [0], [1], [0, 0, 1, 1], [], []>} : vector<8x128xf32>, vector<128x128xf32>, vector<8x128xf32> -> vector<8x128xf32>
    %cst_109 = arith.constant 1.000000e-24 : f32
    %298 = vector.broadcast %cst_109 : f32 to vector<8x128xf32>
    %299 = arith.maximumf %297, %298 : vector<8x128xf32>
    %300 = math.rsqrt %299 : vector<8x128xf32>
    %301 = arith.mulf %294, %300 : vector<8x128xf32>
    %c0_110 = arith.constant 0 : index
    %c0_111 = arith.constant 0 : index
    %c0_112 = arith.constant 0 : index
    %302 = vector.load %arg7[%c0_110, %c0_111, %c0_112] : memref<2x8x128xf32, #tpu.memory_space<vmem>>, vector<1x8x128xf32>
    %303 = vector.shape_cast %302 : vector<1x8x128xf32> to vector<8x128xf32>
    %304 = vector.shape_cast %301 : vector<8x128xf32> to vector<1x8x128xf32>
    tpu.vector_store %arg7[%c0_110, %c0_111, %c0_112], %304 {strides = array<i32>} : memref<2x8x128xf32, #tpu.memory_space<vmem>>, vector<1x8x128xf32>,
    %c1_113 = arith.constant 1 : index
    %c0_114 = arith.constant 0 : index
    %c0_115 = arith.constant 0 : index
    %305 = vector.load %arg7[%c1_113, %c0_114, %c0_115] : memref<2x8x128xf32, #tpu.memory_space<vmem>>, vector<1x8x128xf32>
    %306 = vector.shape_cast %305 : vector<1x8x128xf32> to vector<8x128xf32>
    %307 = vector.shape_cast %292 : vector<8x128xf32> to vector<1x8x128xf32>
    tpu.vector_store %arg7[%c1_113, %c0_114, %c0_115], %307 {strides = array<i32>} : memref<2x8x128xf32, #tpu.memory_space<vmem>>, vector<1x8x128xf32>,
    return
  }
}

</mosaic_0001>

<llo_original>
// kernel: tpu_custom_call.1
$region0: #{tpu_custom_call.1}
  #allocation0 [shape = 'u32[]', space=smem, size = 0x4, offset = 0x4, fixed_abs, tag = 'smem constant byte address 0x4 - core index']
  #allocation1 [shape = 'u32[144,128]{1,0:T(1,128)}', space=vmem, size = 0x12000, scoped, tag = 'internal scratch']
  #allocation2 [shape = 'f32[8,128]{1,0:T(8,128)}', space=vmem, size = 0x1000, scoped, tag = 'scratch operand']
  %s0 = inlined_call_operand.hbm [shape: f32[8,128], index: 0, kind: input, shape index: {}]
  %s1 = inlined_call_operand.vmem [shape: f32[2,128], index: 1, kind: input, shape index: {}]
  %s2 = inlined_call_operand.hbm [shape: f32[256,512], index: 2, kind: input, shape index: {}]
  %s3 = inlined_call_operand.hbm [shape: f32[128,128], index: 3, kind: input, shape index: {}]
  %s4 = inlined_call_operand.vmem [shape: f32[1,640], index: 4, kind: input, shape index: {}]
  %s5 = inlined_call_operand.hbm [shape: f32[128,128], index: 5, kind: input, shape index: {}]
  %s6 = inlined_call_operand.vmem [shape: f32[8,8], index: 6, kind: input, shape index: {}]
  %s7 = inlined_call_operand.hbm [shape: f32[2,8,128], index: 7, kind: output, shape index: {0}]
  %s8 = inlined_call_operand.hbm [shape: f32[2,128], index: 8, kind: output, shape index: {1}]
  %9 = xla_tuple %s7, %s8
  %s10 = sld [smem:[#allocation0]]
  $region62: #{tpu_custom_call.1} parent=0
    _
  %s12 = ssub.s32 1, %s10
  %s13 = scalar_select 0, %s12, %s10
  $region1: #{tpu_custom_call.1} parent=0
    #allocation3 [shape = 'u8[4096]{0}', space=vmem, size = 0x1000, scoped, tag = 'input window, operand 0, single buffered']
    #allocation4 [shape = 's32[1]{0}', space=sflag, size = 0x4, scoped, tag = 'scoped memory for tpu_custom_call.1']
    #allocation5 [shape = 's32[1]{0}', space=sflag, size = 0x4, scoped, tag = 'scoped memory for tpu_custom_call.1']
    #allocation6 [shape = 'u8[524288]{0}', space=vmem, size = 0x80000, scoped, tag = 'input window, operand 2, single buffered']
    #allocation7 [shape = 's32[1]{0}', space=sflag, size = 0x4, scoped, tag = 'scoped memory for tpu_custom_call.1']
    #allocation8 [shape = 'u8[65536]{0}', space=vmem, size = 0x10000, scoped, tag = 'input window, operand 3, single buffered']
    #allocation9 [shape = 'u8[65536]{0}', space=vmem, size = 0x10000, scoped, tag = 'input window, operand 5, single buffered']
    #allocation10 [shape = 's32[1]{0}', space=sflag, size = 0x4, scoped, tag = 'scoped memory for tpu_custom_call.1']
    #allocation11 [shape = 'u8[8192]{0}', space=vmem, size = 0x2000, scoped, tag = 'output window, operand 0, single buffered']
    #allocation12 [shape = 'u8[1024]{0}', space=vmem, size = 0x400, scoped, tag = 'output window, operand 1, single buffered']
    #allocation13 [shape = 's32[1]{0}', space=sflag, size = 0x4, scoped, tag = 'scoped memory for tpu_custom_call.1']
    %14 = vsyncpa [#allocation4], 0
    %15 = vsyncpa [#allocation7], 0
    %16 = vsyncpa [#allocation10], 0
    %17 = vsyncpa [#allocation5], 0
    %18 = vsyncpa [#allocation13], 0
    // Predicated region
    $region2: #{tpu_custom_call.1} parent=1 // pred_check
      _
    $region3: #{tpu_custom_call.1} parent=1 // pred_check_branch
      %20 = sbr.rel (0) target = $region5
    $region4: #{tpu_custom_call.1} parent=1 // pred_region
      %s22 = ssub.s32 128, 128
      %23 = vsyncadd [#allocation4], %s22
      %s25 = sshll.u32 [#allocation3], 4
      %s26 = int_to_ptr.vmem [resolvable:$true] %s25
      %28 = dma.hbm_to_vmem [thread:$0]  %s0, 128, %s26, [#allocation4]
    $region5: #{tpu_custom_call.1} parent=1 // pred_fallthru
      _
    // Predicated region
    $region6: #{tpu_custom_call.1} parent=1 // pred_check
      _
    $region7: #{tpu_custom_call.1} parent=1 // pred_check_branch
      %30 = sbr.rel (0) target = $region9
    $region8: #{tpu_custom_call.1} parent=1 // pred_region
      _
    $region9: #{tpu_custom_call.1} parent=1 // pred_fallthru
      _
    // Predicated region
    $region10: #{tpu_custom_call.1} parent=1 // pred_check
      _
    $region11: #{tpu_custom_call.1} parent=1 // pred_check_branch
      %32 = sbr.rel (0) target = $region13
    $region12: #{tpu_custom_call.1} parent=1 // pred_region
      %s34 = ssub.s32 16384, 16384
      %35 = vsyncadd [#allocation7], %s34
      %s36 = sshll.u32 [#allocation6], 4
      %s37 = int_to_ptr.vmem [resolvable:$true] %s36
      %42 = dma.hbm_to_vmem [thread:$0]  %s2, 16384, %s37, [#allocation7], 512, 512, 32
    $region13: #{tpu_custom_call.1} parent=1 // pred_fallthru
      _
    // Predicated region
    $region14: #{tpu_custom_call.1} parent=1 // pred_check
      _
    $region15: #{tpu_custom_call.1} parent=1 // pred_check_branch
      %44 = sbr.rel (0) target = $region17
    $region16: #{tpu_custom_call.1} parent=1 // pred_region
      %s46 = ssub.s32 2048, 2048
      %47 = vsyncadd [#allocation7], %s46
      %s48 = sshll.u32 [#allocation8], 4
      %s49 = int_to_ptr.vmem [resolvable:$true] %s48
      %54 = dma.hbm_to_vmem [thread:$0]  %s3, 2048, %s49, [#allocation7], 128, 128, 8
    $region17: #{tpu_custom_call.1} parent=1 // pred_fallthru
      _
    // Predicated region
    $region18: #{tpu_custom_call.1} parent=1 // pred_check
      _
    $region19: #{tpu_custom_call.1} parent=1 // pred_check_branch
      %56 = sbr.rel (0) target = $region21
    $region20: #{tpu_custom_call.1} parent=1 // pred_region
      _
    $region21: #{tpu_custom_call.1} parent=1 // pred_fallthru
      _
    // Predicated region
    $region22: #{tpu_custom_call.1} parent=1 // pred_check
      _
    $region23: #{tpu_custom_call.1} parent=1 // pred_check_branch
      %58 = sbr.rel (0) target = $region25
    $region24: #{tpu_custom_call.1} parent=1 // pred_region
      %s60 = ssub.s32 2048, 2048
      %61 = vsyncadd [#allocation10], %s60
      %s62 = sshll.u32 [#allocation9], 4
      %s63 = int_to_ptr.vmem [resolvable:$true] %s62
      %68 = dma.hbm_to_vmem [thread:$0]  %s5, 2048, %s63, [#allocation10], 128, 128, 8
    $region25: #{tpu_custom_call.1} parent=1 // pred_fallthru
      _
    // Predicated region
    $region26: #{tpu_custom_call.1} parent=1 // pred_check
      _
    $region27: #{tpu_custom_call.1} parent=1 // pred_check_branch
      %70 = sbr.rel (0) target = $region29
    $region28: #{tpu_custom_call.1} parent=1 // pred_region
      _
    $region29: #{tpu_custom_call.1} parent=1 // pred_fallthru
      _
    // Predicated region
    $region30: #{tpu_custom_call.1} parent=1 // pred_check
      _
    $region31: #{tpu_custom_call.1} parent=1 // pred_check_branch
      %72 = sbr.rel (0) target = $region33
    $region32: #{tpu_custom_call.1} parent=1 // pred_region
      %73 = dma.done [#allocation4], 128
    $region33: #{tpu_custom_call.1} parent=1 // pred_fallthru
      _
    // Predicated region
    $region34: #{tpu_custom_call.1} parent=1 // pred_check
      _
    $region35: #{tpu_custom_call.1} parent=1 // pred_check_branch
      %75 = sbr.rel (0) target = $region37
    $region36: #{tpu_custom_call.1} parent=1 // pred_region
      %76 = dma.done [#allocation7], 16384
    $region37: #{tpu_custom_call.1} parent=1 // pred_fallthru
      _
    // Predicated region
    $region38: #{tpu_custom_call.1} parent=1 // pred_check
      _
    $region39: #{tpu_custom_call.1} parent=1 // pred_check_branch
      %78 = sbr.rel (0) target = $region41
    $region40: #{tpu_custom_call.1} parent=1 // pred_region
      %79 = dma.done [#allocation7], 2048
    $region41: #{tpu_custom_call.1} parent=1 // pred_fallthru
      _
    // Predicated region
    $region42: #{tpu_custom_call.1} parent=1 // pred_check
      _
    $region43: #{tpu_custom_call.1} parent=1 // pred_check_branch
      %81 = sbr.rel (0) target = $region45
    $region44: #{tpu_custom_call.1} parent=1 // pred_region
      %82 = dma.done [#allocation10], 2048
    $region45: #{tpu_custom_call.1} parent=1 // pred_fallthru
      _
    %83 = vst [vmem:[#allocation2] sm:$0xff] 0.0
    %v84 = vld [vmem:[%s4] sm:$0xf]
    %v85 = vld [vmem:[%s1] sm:$0x1]
    %v86 = vld [vmem:[%s1 + $0x1] sm:$0x1]
    %v87 = vld [vmem:[#allocation3] sm:$0x1]
    %v88 = vld [vmem:[#allocation6] sm:$0xff]
    %v89 = vld [vmem:[#allocation6 + $0x8] sm:$0xff]
    %v90 = vld [vmem:[#allocation6 + $0x10] sm:$0xff]
    %v91 = vld [vmem:[#allocation6 + $0x18] sm:$0xff]
    %v92 = vld [vmem:[#allocation6 + $0x20] sm:$0xff]
    %v93 = vld [vmem:[#allocation6 + $0x28] sm:$0xff]
    %v94 = vld [vmem:[#allocation6 + $0x30] sm:$0xff]
    %v95 = vld [vmem:[#allocation6 + $0x38] sm:$0xff]
    %v96 = vld [vmem:[#allocation6 + $0x40] sm:$0xff]
    %v97 = vld [vmem:[#allocation6 + $0x48] sm:$0xff]
    %v98 = vld [vmem:[#allocation6 + $0x50] sm:$0xff]
    %v99 = vld [vmem:[#allocation6 + $0x58] sm:$0xff]
    %v100 = vld [vmem:[#allocation6 + $0x60] sm:$0xff]
    %v101 = vld [vmem:[#allocation6 + $0x68] sm:$0xff]
    %v102 = vld [vmem:[#allocation6 + $0x70] sm:$0xff]
    %v103 = vld [vmem:[#allocation6 + $0x78] sm:$0xff]
    %v104 = vld [vmem:[#allocation6 + $0x80] sm:$0xff]
    %v105 = vld [vmem:[#allocation6 + $0x88] sm:$0xff]
    %v106 = vld [vmem:[#allocation6 + $0x90] sm:$0xff]
    %v107 = vld [vmem:[#allocation6 + $0x98] sm:$0xff]
    %v108 = vld [vmem:[#allocation6 + $0xa0] sm:$0xff]
    %v109 = vld [vmem:[#allocation6 + $0xa8] sm:$0xff]
    %v110 = vld [vmem:[#allocation6 + $0xb0] sm:$0xff]
    %v111 = vld [vmem:[#allocation6 + $0xb8] sm:$0xff]
    %v112 = vld [vmem:[#allocation6 + $0xc0] sm:$0xff]
    %v113 = vld [vmem:[#allocation6 + $0xc8] sm:$0xff]
    %v114 = vld [vmem:[#allocation6 + $0xd0] sm:$0xff]
    %v115 = vld [vmem:[#allocation6 + $0xd8] sm:$0xff]
    %v116 = vld [vmem:[#allocation6 + $0xe0] sm:$0xff]
    %v117 = vld [vmem:[#allocation6 + $0xe8] sm:$0xff]
    %v118 = vld [vmem:[#allocation6 + $0xf0] sm:$0xff]
    %v119 = vld [vmem:[#allocation6 + $0xf8] sm:$0xff]
    %v120 = vld [vmem:[#allocation6 + $0x100] sm:$0xff]
    %v121 = vld [vmem:[#allocation6 + $0x108] sm:$0xff]
    %v122 = vld [vmem:[#allocation6 + $0x110] sm:$0xff]
    %v123 = vld [vmem:[#allocation6 + $0x118] sm:$0xff]
    %v124 = vld [vmem:[#allocation6 + $0x120] sm:$0xff]
    %v125 = vld [vmem:[#allocation6 + $0x128] sm:$0xff]
    %v126 = vld [vmem:[#allocation6 + $0x130] sm:$0xff]
    %v127 = vld [vmem:[#allocation6 + $0x138] sm:$0xff]
    %v128 = vld [vmem:[#allocation6 + $0x140] sm:$0xff]
    %v129 = vld [vmem:[#allocation6 + $0x148] sm:$0xff]
    %v130 = vld [vmem:[#allocation6 + $0x150] sm:$0xff]
    %v131 = vld [vmem:[#allocation6 + $0x158] sm:$0xff]
    %v132 = vld [vmem:[#allocation6 + $0x160] sm:$0xff]
    %v133 = vld [vmem:[#allocation6 + $0x168] sm:$0xff]
    %v134 = vld [vmem:[#allocation6 + $0x170] sm:$0xff]
    %v135 = vld [vmem:[#allocation6 + $0x178] sm:$0xff]
    %v136 = vld [vmem:[#allocation6 + $0x180] sm:$0xff]
    %v137 = vld [vmem:[#allocation6 + $0x188] sm:$0xff]
    %v138 = vld [vmem:[#allocation6 + $0x190] sm:$0xff]
    %v139 = vld [vmem:[#allocation6 + $0x198] sm:$0xff]
    %v140 = vld [vmem:[#allocation6 + $0x1a0] sm:$0xff]
    %v141 = vld [vmem:[#allocation6 + $0x1a8] sm:$0xff]
    %v142 = vld [vmem:[#allocation6 + $0x1b0] sm:$0xff]
    %v143 = vld [vmem:[#allocation6 + $0x1b8] sm:$0xff]
    %v144 = vld [vmem:[#allocation6 + $0x1c0] sm:$0xff]
    %v145 = vld [vmem:[#allocation6 + $0x1c8] sm:$0xff]
    %v146 = vld [vmem:[#allocation6 + $0x1d0] sm:$0xff]
    %v147 = vld [vmem:[#allocation6 + $0x1d8] sm:$0xff]
    %v148 = vld [vmem:[#allocation6 + $0x1e0] sm:$0xff]
    %v149 = vld [vmem:[#allocation6 + $0x1e8] sm:$0xff]
    %v150 = vld [vmem:[#allocation6 + $0x1f0] sm:$0xff]
    %v151 = vld [vmem:[#allocation6 + $0x1f8] sm:$0xff]
    %v152 = vld [vmem:[#allocation6 + $0x200] sm:$0xff]
    %v153 = vld [vmem:[#allocation6 + $0x208] sm:$0xff]
    %v154 = vld [vmem:[#allocation6 + $0x210] sm:$0xff]
    %v155 = vld [vmem:[#allocation6 + $0x218] sm:$0xff]
    %v156 = vld [vmem:[#allocation6 + $0x220] sm:$0xff]
    %v157 = vld [vmem:[#allocation6 + $0x228] sm:$0xff]
    %v158 = vld [vmem:[#allocation6 + $0x230] sm:$0xff]
    %v159 = vld [vmem:[#allocation6 + $0x238] sm:$0xff]
    %v160 = vld [vmem:[#allocation6 + $0x240] sm:$0xff]
    %v161 = vld [vmem:[#allocation6 + $0x248] sm:$0xff]
    %v162 = vld [vmem:[#allocation6 + $0x250] sm:$0xff]
    %v163 = vld [vmem:[#allocation6 + $0x258] sm:$0xff]
    %v164 = vld [vmem:[#allocation6 + $0x260] sm:$0xff]
    %v165 = vld [vmem:[#allocation6 + $0x268] sm:$0xff]
    %v166 = vld [vmem:[#allocation6 + $0x270] sm:$0xff]
    %v167 = vld [vmem:[#allocation6 + $0x278] sm:$0xff]
    %v168 = vld [vmem:[#allocation6 + $0x280] sm:$0xff]
    %v169 = vld [vmem:[#allocation6 + $0x288] sm:$0xff]
    %v170 = vld [vmem:[#allocation6 + $0x290] sm:$0xff]
    %v171 = vld [vmem:[#allocation6 + $0x298] sm:$0xff]
    %v172 = vld [vmem:[#allocation6 + $0x2a0] sm:$0xff]
    %v173 = vld [vmem:[#allocation6 + $0x2a8] sm:$0xff]
    %v174 = vld [vmem:[#allocation6 + $0x2b0] sm:$0xff]
    %v175 = vld [vmem:[#allocation6 + $0x2b8] sm:$0xff]
    %v176 = vld [vmem:[#allocation6 + $0x2c0] sm:$0xff]
    %v177 = vld [vmem:[#allocation6 + $0x2c8] sm:$0xff]
    %v178 = vld [vmem:[#allocation6 + $0x2d0] sm:$0xff]
    %v179 = vld [vmem:[#allocation6 + $0x2d8] sm:$0xff]
    %v180 = vld [vmem:[#allocation6 + $0x2e0] sm:$0xff]
    %v181 = vld [vmem:[#allocation6 + $0x2e8] sm:$0xff]
    %v182 = vld [vmem:[#allocation6 + $0x2f0] sm:$0xff]
    %v183 = vld [vmem:[#allocation6 + $0x2f8] sm:$0xff]
    %v184 = vld [vmem:[#allocation6 + $0x300] sm:$0xff]
    %v185 = vld [vmem:[#allocation6 + $0x308] sm:$0xff]
    %v186 = vld [vmem:[#allocation6 + $0x310] sm:$0xff]
    %v187 = vld [vmem:[#allocation6 + $0x318] sm:$0xff]
    %v188 = vld [vmem:[#allocation6 + $0x320] sm:$0xff]
    %v189 = vld [vmem:[#allocation6 + $0x328] sm:$0xff]
    %v190 = vld [vmem:[#allocation6 + $0x330] sm:$0xff]
    %v191 = vld [vmem:[#allocation6 + $0x338] sm:$0xff]
    %v192 = vld [vmem:[#allocation6 + $0x340] sm:$0xff]
    %v193 = vld [vmem:[#allocation6 + $0x348] sm:$0xff]
    %v194 = vld [vmem:[#allocation6 + $0x350] sm:$0xff]
    %v195 = vld [vmem:[#allocation6 + $0x358] sm:$0xff]
    %v196 = vld [vmem:[#allocation6 + $0x360] sm:$0xff]
    %v197 = vld [vmem:[#allocation6 + $0x368] sm:$0xff]
    %v198 = vld [vmem:[#allocation6 + $0x370] sm:$0xff]
    %v199 = vld [vmem:[#allocation6 + $0x378] sm:$0xff]
    %v200 = vld [vmem:[#allocation6 + $0x380] sm:$0xff]
    %v201 = vld [vmem:[#allocation6 + $0x388] sm:$0xff]
    %v202 = vld [vmem:[#allocation6 + $0x390] sm:$0xff]
    %v203 = vld [vmem:[#allocation6 + $0x398] sm:$0xff]
    %v204 = vld [vmem:[#allocation6 + $0x3a0] sm:$0xff]
    %v205 = vld [vmem:[#allocation6 + $0x3a8] sm:$0xff]
    %v206 = vld [vmem:[#allocation6 + $0x3b0] sm:$0xff]
    %v207 = vld [vmem:[#allocation6 + $0x3b8] sm:$0xff]
    %v208 = vld [vmem:[#allocation6 + $0x3c0] sm:$0xff]
    %v209 = vld [vmem:[#allocation6 + $0x3c8] sm:$0xff]
    %v210 = vld [vmem:[#allocation6 + $0x3d0] sm:$0xff]
    %v211 = vld [vmem:[#allocation6 + $0x3d8] sm:$0xff]
    %v212 = vld [vmem:[#allocation6 + $0x3e0] sm:$0xff]
    %v213 = vld [vmem:[#allocation6 + $0x3e8] sm:$0xff]
    %v214 = vld [vmem:[#allocation6 + $0x3f0] sm:$0xff]
    %v215 = vld [vmem:[#allocation6 + $0x3f8] sm:$0xff]
    %216 = vmatprep.subr.mxu0 %v153
    %217 = vmatpush1.msra.mxu0 %v152
    %218 = vmatprep.subr.mxu0 %v157
    %219 = vmatpush1.msra.mxu0 %v156
    %220 = vmatprep.subr.mxu0 %v161
    %221 = vmatpush1.msra.mxu0 %v160
    %222 = vmatprep.subr.mxu0 %v165
    %223 = vmatpush1.msra.mxu0 %v164
    %224 = vmatprep.subr.mxu0 %v169
    %225 = vmatpush1.msra.mxu0 %v168
    %226 = vmatprep.subr.mxu0 %v173
    %227 = vmatpush1.msra.mxu0 %v172
    %228 = vmatprep.subr.mxu0 %v177
    %229 = vmatpush1.msra.mxu0 %v176
    %230 = vmatprep.subr.mxu0 %v181
    %231 = vmatpush1.msra.mxu0 %v180
    %232 = vmatprep.subr.mxu0 %v185
    %233 = vmatpush1.msra.mxu0 %v184
    %234 = vmatprep.subr.mxu0 %v189
    %235 = vmatpush1.msra.mxu0 %v188
    %236 = vmatprep.subr.mxu0 %v193
    %237 = vmatpush1.msra.mxu0 %v192
    %238 = vmatprep.subr.mxu0 %v197
    %239 = vmatpush1.msra.mxu0 %v196
    %240 = vmatprep.subr.mxu0 %v201
    %241 = vmatpush1.msra.mxu0 %v200
    %242 = vmatprep.subr.mxu0 %v205
    %243 = vmatpush1.msra.mxu0 %v204
    %244 = vmatprep.subr.mxu0 %v209
    %245 = vmatpush1.msra.mxu0 %v208
    %246 = vmatprep.subr.mxu0 %v213
    %247 = vmatpush1.msra.mxu0 %v212
    %248 = vmatprep.subr.mxu0 0.0
    %249 = vmatpush1.msra.mxu0 0.0
    %250 = vmatprep.subr.mxu0 0.0
    %251 = vmatpush1.msra.mxu0 0.0
    %252 = vmatprep.subr.mxu0 0.0
    %253 = vmatpush1.msra.mxu0 0.0
    %254 = vmatprep.subr.mxu0 0.0
    %255 = vmatpush1.msra.mxu0 0.0
    %256 = vmatprep.subr.mxu0 0.0
    %257 = vmatpush1.msra.mxu0 0.0
    %258 = vmatprep.subr.mxu0 0.0
    %259 = vmatpush1.msra.mxu0 0.0
    %260 = vmatprep.subr.mxu0 0.0
    %261 = vmatpush1.msra.mxu0 0.0
    %262 = vmatprep.subr.mxu0 0.0
    %263 = vmatpush1.msra.mxu0 0.0
    %264 = vmatprep.subr.mxu0 0.0
    %265 = vmatpush1.msra.mxu0 0.0
    %266 = vmatprep.subr.mxu0 0.0
    %267 = vmatpush1.msra.mxu0 0.0
    %268 = vmatprep.subr.mxu0 0.0
    %269 = vmatpush1.msra.mxu0 0.0
    %270 = vmatprep.subr.mxu0 0.0
    %271 = vmatpush1.msra.mxu0 0.0
    %272 = vmatprep.subr.mxu0 0.0
    %273 = vmatpush1.msra.mxu0 0.0
    %274 = vmatprep.subr.mxu0 0.0
    %275 = vmatpush1.msra.mxu0 0.0
    %276 = vmatprep.subr.mxu0 0.0
    %277 = vmatpush1.msra.mxu0 0.0
    %278 = vmatprep.subr.mxu0 0.0
    %279 = vmatpush1.msra.mxu0 0.0
    %280 = vmatprep.mubr.f32.mxu0 0.0
    %281 = vmatmul.mubr.f32.gmra.mrb[0].mxu0 %v85
    %v282 = vpop.f32.mrb[0].mxu0
    %v283 = vadd.f32 0.0, %v282
    %v284 = vpop.f32.mrb[0].mxu0
    %v285 = vadd.f32 0.0, %v284
    %286 = vdwg.mxu0
    %287 = vmatprep.subr.mxu0 %v155
    %288 = vmatpush1.msra.mxu0 %v154
    %289 = vmatprep.subr.mxu0 %v159
    %290 = vmatpush1.msra.mxu0 %v158
    %291 = vmatprep.subr.mxu0 %v163
    %292 = vmatpush1.msra.mxu0 %v162
    %293 = vmatprep.subr.mxu0 %v167
    %294 = vmatpush1.msra.mxu0 %v166
    %295 = vmatprep.subr.mxu0 %v171
    %296 = vmatpush1.msra.mxu0 %v170
    %297 = vmatprep.subr.mxu0 %v175
    %298 = vmatpush1.msra.mxu0 %v174
    %299 = vmatprep.subr.mxu0 %v179
    %300 = vmatpush1.msra.mxu0 %v178
    %301 = vmatprep.subr.mxu0 %v183
    %302 = vmatpush1.msra.mxu0 %v182
    %303 = vmatprep.subr.mxu0 %v187
    %304 = vmatpush1.msra.mxu0 %v186
    %305 = vmatprep.subr.mxu0 %v191
    %306 = vmatpush1.msra.mxu0 %v190
    %307 = vmatprep.subr.mxu0 %v195
    %308 = vmatpush1.msra.mxu0 %v194
    %309 = vmatprep.subr.mxu0 %v199
    %310 = vmatpush1.msra.mxu0 %v198
    %311 = vmatprep.subr.mxu0 %v203
    %312 = vmatpush1.msra.mxu0 %v202
    %313 = vmatprep.subr.mxu0 %v207
    %314 = vmatpush1.msra.mxu0 %v206
    %315 = vmatprep.subr.mxu0 %v211
    %316 = vmatpush1.msra.mxu0 %v210
    %317 = vmatprep.subr.mxu0 %v215
    %318 = vmatpush1.msra.mxu0 %v214
    %319 = vmatprep.subr.mxu0 0.0
    %320 = vmatpush1.msra.mxu0 0.0
    %321 = vmatprep.subr.mxu0 0.0
    %322 = vmatpush1.msra.mxu0 0.0
    %323 = vmatprep.subr.mxu0 0.0
    %324 = vmatpush1.msra.mxu0 0.0
    %325 = vmatprep.subr.mxu0 0.0
    %326 = vmatpush1.msra.mxu0 0.0
    %327 = vmatprep.subr.mxu0 0.0
    %328 = vmatpush1.msra.mxu0 0.0
    %329 = vmatprep.subr.mxu0 0.0
    %330 = vmatpush1.msra.mxu0 0.0
    %331 = vmatprep.subr.mxu0 0.0
    %332 = vmatpush1.msra.mxu0 0.0
    %333 = vmatprep.subr.mxu0 0.0
    %334 = vmatpush1.msra.mxu0 0.0
    %335 = vmatprep.subr.mxu0 0.0
    %336 = vmatpush1.msra.mxu0 0.0
    %337 = vmatprep.subr.mxu0 0.0
    %338 = vmatpush1.msra.mxu0 0.0
    %339 = vmatprep.subr.mxu0 0.0
    %340 = vmatpush1.msra.mxu0 0.0
    %341 = vmatprep.subr.mxu0 0.0
    %342 = vmatpush1.msra.mxu0 0.0
    %343 = vmatprep.subr.mxu0 0.0
    %344 = vmatpush1.msra.mxu0 0.0
    %345 = vmatprep.subr.mxu0 0.0
    %346 = vmatpush1.msra.mxu0 0.0
    %347 = vmatprep.subr.mxu0 0.0
    %348 = vmatpush1.msra.mxu0 0.0
    %349 = vmatprep.subr.mxu0 0.0
    %350 = vmatpush1.msra.mxu0 0.0
    %351 = vmatprep.mubr.f32.mxu0 0.0
    %352 = vmatmul.mubr.f32.gmra.mrb[0].mxu0 %v85
    %v353 = vpop.f32.mrb[0].mxu0
    %v354 = vadd.f32 0.0, %v353
    %v355 = vpop.f32.mrb[0].mxu0
    %v356 = vadd.f32 0.0, %v355
    %357 = vdwg.mxu0
    %358 = vmatprep.subr.mxu0 %v89
    %359 = vmatpush1.msra.mxu0 %v88
    %360 = vmatprep.subr.mxu0 %v93
    %361 = vmatpush1.msra.mxu0 %v92
    %362 = vmatprep.subr.mxu0 %v97
    %363 = vmatpush1.msra.mxu0 %v96
    %364 = vmatprep.subr.mxu0 %v101
    %365 = vmatpush1.msra.mxu0 %v100
    %366 = vmatprep.subr.mxu0 %v105
    %367 = vmatpush1.msra.mxu0 %v104
    %368 = vmatprep.subr.mxu0 %v109
    %369 = vmatpush1.msra.mxu0 %v108
    %370 = vmatprep.subr.mxu0 %v113
    %371 = vmatpush1.msra.mxu0 %v112
    %372 = vmatprep.subr.mxu0 %v117
    %373 = vmatpush1.msra.mxu0 %v116
    %374 = vmatprep.subr.mxu0 %v121
    %375 = vmatpush1.msra.mxu0 %v120
    %376 = vmatprep.subr.mxu0 %v125
    %377 = vmatpush1.msra.mxu0 %v124
    %378 = vmatprep.subr.mxu0 %v129
    %379 = vmatpush1.msra.mxu0 %v128
    %380 = vmatprep.subr.mxu0 %v133
    %381 = vmatpush1.msra.mxu0 %v132
    %382 = vmatprep.subr.mxu0 %v137
    %383 = vmatpush1.msra.mxu0 %v136
    %384 = vmatprep.subr.mxu0 %v141
    %385 = vmatpush1.msra.mxu0 %v140
    %386 = vmatprep.subr.mxu0 %v145
    %387 = vmatpush1.msra.mxu0 %v144
    %388 = vmatprep.subr.mxu0 %v149
    %389 = vmatpush1.msra.mxu0 %v148
    %390 = vmatprep.subr.mxu0 0.0
    %391 = vmatpush1.msra.mxu0 0.0
    %392 = vmatprep.subr.mxu0 0.0
    %393 = vmatpush1.msra.mxu0 0.0
    %394 = vmatprep.subr.mxu0 0.0
    %395 = vmatpush1.msra.mxu0 0.0
    %396 = vmatprep.subr.mxu0 0.0
    %397 = vmatpush1.msra.mxu0 0.0
    %398 = vmatprep.subr.mxu0 0.0
    %399 = vmatpush1.msra.mxu0 0.0
    %400 = vmatprep.subr.mxu0 0.0
    %401 = vmatpush1.msra.mxu0 0.0
    %402 = vmatprep.subr.mxu0 0.0
    %403 = vmatpush1.msra.mxu0 0.0
    %404 = vmatprep.subr.mxu0 0.0
    %405 = vmatpush1.msra.mxu0 0.0
    %406 = vmatprep.subr.mxu0 0.0
    %407 = vmatpush1.msra.mxu0 0.0
    %408 = vmatprep.subr.mxu0 0.0
    %409 = vmatpush1.msra.mxu0 0.0
    %410 = vmatprep.subr.mxu0 0.0
    %411 = vmatpush1.msra.mxu0 0.0
    %412 = vmatprep.subr.mxu0 0.0
    %413 = vmatpush1.msra.mxu0 0.0
    %414 = vmatprep.subr.mxu0 0.0
    %415 = vmatpush1.msra.mxu0 0.0
    %416 = vmatprep.subr.mxu0 0.0
    %417 = vmatpush1.msra.mxu0 0.0
    %418 = vmatprep.subr.mxu0 0.0
    %419 = vmatpush1.msra.mxu0 0.0
    %420 = vmatprep.subr.mxu0 0.0
    %421 = vmatpush1.msra.mxu0 0.0
    %422 = vmatprep.mubr.f32.mxu0 0.0
    %423 = vmatmul.mubr.f32.gmra.mrb[0].mxu0 %v87
    %v424 = vpop.f32.mrb[0].mxu0
    %v425 = vadd.f32 %v283, %v424
    %v426 = vpop.f32.mrb[0].mxu0
    %v427 = vadd.f32 %v285, %v426
    %428 = vdwg.mxu0
    %429 = vmatprep.subr.mxu0 %v91
    %430 = vmatpush1.msra.mxu0 %v90
    %431 = vmatprep.subr.mxu0 %v95
    %432 = vmatpush1.msra.mxu0 %v94
    %433 = vmatprep.subr.mxu0 %v99
    %434 = vmatpush1.msra.mxu0 %v98
    %435 = vmatprep.subr.mxu0 %v103
    %436 = vmatpush1.msra.mxu0 %v102
    %437 = vmatprep.subr.mxu0 %v107
    %438 = vmatpush1.msra.mxu0 %v106
    %439 = vmatprep.subr.mxu0 %v111
    %440 = vmatpush1.msra.mxu0 %v110
    %441 = vmatprep.subr.mxu0 %v115
    %442 = vmatpush1.msra.mxu0 %v114
    %443 = vmatprep.subr.mxu0 %v119
    %444 = vmatpush1.msra.mxu0 %v118
    %445 = vmatprep.subr.mxu0 %v123
    %446 = vmatpush1.msra.mxu0 %v122
    %447 = vmatprep.subr.mxu0 %v127
    %448 = vmatpush1.msra.mxu0 %v126
    %449 = vmatprep.subr.mxu0 %v131
    %450 = vmatpush1.msra.mxu0 %v130
    %451 = vmatprep.subr.mxu0 %v135
    %452 = vmatpush1.msra.mxu0 %v134
    %453 = vmatprep.subr.mxu0 %v139
    %454 = vmatpush1.msra.mxu0 %v138
    %455 = vmatprep.subr.mxu0 %v143
    %456 = vmatpush1.msra.mxu0 %v142
    %457 = vmatprep.subr.mxu0 %v147
    %458 = vmatpush1.msra.mxu0 %v146
    %459 = vmatprep.subr.mxu0 %v151
    %460 = vmatpush1.msra.mxu0 %v150
    %461 = vmatprep.subr.mxu0 0.0
    %462 = vmatpush1.msra.mxu0 0.0
    %463 = vmatprep.subr.mxu0 0.0
    %464 = vmatpush1.msra.mxu0 0.0
    %465 = vmatprep.subr.mxu0 0.0
    %466 = vmatpush1.msra.mxu0 0.0
    %467 = vmatprep.subr.mxu0 0.0
    %468 = vmatpush1.msra.mxu0 0.0
    %469 = vmatprep.subr.mxu0 0.0
    %470 = vmatpush1.msra.mxu0 0.0
    %471 = vmatprep.subr.mxu0 0.0
    %472 = vmatpush1.msra.mxu0 0.0
    %473 = vmatprep.subr.mxu0 0.0
    %474 = vmatpush1.msra.mxu0 0.0
    %475 = vmatprep.subr.mxu0 0.0
    %476 = vmatpush1.msra.mxu0 0.0
    %477 = vmatprep.subr.mxu0 0.0
    %478 = vmatpush1.msra.mxu0 0.0
    %479 = vmatprep.subr.mxu0 0.0
    %480 = vmatpush1.msra.mxu0 0.0
    %481 = vmatprep.subr.mxu0 0.0
    %482 = vmatpush1.msra.mxu0 0.0
    %483 = vmatprep.subr.mxu0 0.0
    %484 = vmatpush1.msra.mxu0 0.0
    %485 = vmatprep.subr.mxu0 0.0
    %486 = vmatpush1.msra.mxu0 0.0
    %487 = vmatprep.subr.mxu0 0.0
    %488 = vmatpush1.msra.mxu0 0.0
    %489 = vmatprep.subr.mxu0 0.0
    %490 = vmatpush1.msra.mxu0 0.0
    %491 = vmatprep.subr.mxu0 0.0
    %492 = vmatpush1.msra.mxu0 0.0
    %493 = vmatprep.mubr.f32.mxu0 0.0
    %494 = vmatmul.mubr.f32.gmra.mrb[0].mxu0 %v87
    %v495 = vpop.f32.mrb[0].mxu0
    %v496 = vadd.f32 %v354, %v495
    %v497 = vpop.f32.mrb[0].mxu0
    %v498 = vadd.f32 %v356, %v497
    %499 = vdwg.mxu0
    %v501 = vlaneseq
    %v502 = vshrl.u32 %v501, 7
    %v503 = vsub.s32 0, %v502
    %v504 = vrot.slane %v84, %v503
    %v505 = vlaneseq
    %v506 = vshrl.u32 %v505, 7
    %v507 = vsub.s32 1, %v506
    %v508 = vrot.slane %v84, %v507
    %v509 = vlaneseq
    %v510 = vshrl.u32 %v509, 7
    %v511 = vsub.s32 2, %v510
    %v512 = vrot.slane %v84, %v511
    %v513 = vlaneseq
    %v514 = vshrl.u32 %v513, 7
    %v515 = vsub.s32 3, %v514
    %v516 = vrot.slane %v84, %v515
    %v521 = vadd.f32 %v425, %v504
    %v522 = vadd.f32 %v427, %v508
    %v523 = vadd.f32 %v496, %v512
    %v524 = vadd.f32 %v498, %v516
    %v525 = vxor.u32 %v521, 2147483648
    %v526 = vmul.f32 %v525, 1.442695
    %v527 = vpow.pop %v526
    %v528 = vadd.f32 %v527, 1.0
    %v529 = vrcp.pop %v528
    %v530 = vmul.f32 1.0, %v529
    %v531 = vxor.u32 %v522, 2147483648
    %v532 = vmul.f32 %v531, 1.442695
    %v533 = vpow.pop %v532
    %v534 = vadd.f32 %v533, 1.0
    %v535 = vrcp.pop %v534
    %v536 = vmul.f32 1.0, %v535
    %v537 = vtanh.pop %v523
    %v538 = vxor.u32 %v524, 2147483648
    %v539 = vmul.f32 %v538, 1.442695
    %v540 = vpow.pop %v539
    %v541 = vadd.f32 %v540, 1.0
    %v542 = vrcp.pop %v541
    %v543 = vmul.f32 1.0, %v542
    %v544 = vmul.f32 %v536, %v86
    %v545 = vmul.f32 %v530, %v537
    %v546 = vadd.f32 %v544, %v545
    %v547 = vtanh.pop %v546
    %v548 = vmul.f32 %v543, %v547
    %549 = vst [vmem:[#allocation2] sm:$0x1] %v548
    %v550 = vld [vmem:[#allocation3 + $0x1] sm:$0x1]
    %v551 = vld [vmem:[#allocation6] sm:$0xff]
    %v552 = vld [vmem:[#allocation6 + $0x8] sm:$0xff]
    %v553 = vld [vmem:[#allocation6 + $0x10] sm:$0xff]
    %v554 = vld [vmem:[#allocation6 + $0x18] sm:$0xff]
    %v555 = vld [vmem:[#allocation6 + $0x20] sm:$0xff]
    %v556 = vld [vmem:[#allocation6 + $0x28] sm:$0xff]
    %v557 = vld [vmem:[#allocation6 + $0x30] sm:$0xff]
    %v558 = vld [vmem:[#allocation6 + $0x38] sm:$0xff]
    %v559 = vld [vmem:[#allocation6 + $0x40] sm:$0xff]
    %v560 = vld [vmem:[#allocation6 + $0x48] sm:$0xff]
    %v561 = vld [vmem:[#allocation6 + $0x50] sm:$0xff]
    %v562 = vld [vmem:[#allocation6 + $0x58] sm:$0xff]
    %v563 = vld [vmem:[#allocation6 + $0x60] sm:$0xff]
    %v564 = vld [vmem:[#allocation6 + $0x68] sm:$0xff]
    %v565 = vld [vmem:[#allocation6 + $0x70] sm:$0xff]
    %v566 = vld [vmem:[#allocation6 + $0x78] sm:$0xff]
    %v567 = vld [vmem:[#allocation6 + $0x80] sm:$0xff]
    %v568 = vld [vmem:[#allocation6 + $0x88] sm:$0xff]
    %v569 = vld [vmem:[#allocation6 + $0x90] sm:$0xff]
    %v570 = vld [vmem:[#allocation6 + $0x98] sm:$0xff]
    %v571 = vld [vmem:[#allocation6 + $0xa0] sm:$0xff]
    %v572 = vld [vmem:[#allocation6 + $0xa8] sm:$0xff]
    %v573 = vld [vmem:[#allocation6 + $0xb0] sm:$0xff]
    %v574 = vld [vmem:[#allocation6 + $0xb8] sm:$0xff]
    %v575 = vld [vmem:[#allocation6 + $0xc0] sm:$0xff]
    %v576 = vld [vmem:[#allocation6 + $0xc8] sm:$0xff]
    %v577 = vld [vmem:[#allocation6 + $0xd0] sm:$0xff]
    %v578 = vld [vmem:[#allocation6 + $0xd8] sm:$0xff]
    %v579 = vld [vmem:[#allocation6 + $0xe0] sm:$0xff]
    %v580 = vld [vmem:[#allocation6 + $0xe8] sm:$0xff]
    %v581 = vld [vmem:[#allocation6 + $0xf0] sm:$0xff]
    %v582 = vld [vmem:[#allocation6 + $0xf8] sm:$0xff]
    %v583 = vld [vmem:[#allocation6 + $0x100] sm:$0xff]
    %v584 = vld [vmem:[#allocation6 + $0x108] sm:$0xff]
    %v585 = vld [vmem:[#allocation6 + $0x110] sm:$0xff]
    %v586 = vld [vmem:[#allocation6 + $0x118] sm:$0xff]
    %v587 = vld [vmem:[#allocation6 + $0x120] sm:$0xff]
    %v588 = vld [vmem:[#allocation6 + $0x128] sm:$0xff]
    %v589 = vld [vmem:[#allocation6 + $0x130] sm:$0xff]
    %v590 = vld [vmem:[#allocation6 + $0x138] sm:$0xff]
    %v591 = vld [vmem:[#allocation6 + $0x140] sm:$0xff]
    %v592 = vld [vmem:[#allocation6 + $0x148] sm:$0xff]
    %v593 = vld [vmem:[#allocation6 + $0x150] sm:$0xff]
    %v594 = vld [vmem:[#allocation6 + $0x158] sm:$0xff]
    %v595 = vld [vmem:[#allocation6 + $0x160] sm:$0xff]
    %v596 = vld [vmem:[#allocation6 + $0x168] sm:$0xff]
    %v597 = vld [vmem:[#allocation6 + $0x170] sm:$0xff]
    %v598 = vld [vmem:[#allocation6 + $0x178] sm:$0xff]
    %v599 = vld [vmem:[#allocation6 + $0x180] sm:$0xff]
    %v600 = vld [vmem:[#allocation6 + $0x188] sm:$0xff]
    %v601 = vld [vmem:[#allocation6 + $0x190] sm:$0xff]
    %v602 = vld [vmem:[#allocation6 + $0x198] sm:$0xff]
    %v603 = vld [vmem:[#allocation6 + $0x1a0] sm:$0xff]
    %v604 = vld [vmem:[#allocation6 + $0x1a8] sm:$0xff]
    %v605 = vld [vmem:[#allocation6 + $0x1b0] sm:$0xff]
    %v606 = vld [vmem:[#allocation6 + $0x1b8] sm:$0xff]
    %v607 = vld [vmem:[#allocation6 + $0x1c0] sm:$0xff]
    %v608 = vld [vmem:[#allocation6 + $0x1c8] sm:$0xff]
    %v609 = vld [vmem:[#allocation6 + $0x1d0] sm:$0xff]
    %v610 = vld [vmem:[#allocation6 + $0x1d8] sm:$0xff]
    %v611 = vld [vmem:[#allocation6 + $0x1e0] sm:$0xff]
    %v612 = vld [vmem:[#allocation6 + $0x1e8] sm:$0xff]
    %v613 = vld [vmem:[#allocation6 + $0x1f0] sm:$0xff]
    %v614 = vld [vmem:[#allocation6 + $0x1f8] sm:$0xff]
    %v615 = vld [vmem:[#allocation6 + $0x200] sm:$0xff]
    %v616 = vld [vmem:[#allocation6 + $0x208] sm:$0xff]
    %v617 = vld [vmem:[#allocation6 + $0x210] sm:$0xff]
    %v618 = vld [vmem:[#allocation6 + $0x218] sm:$0xff]
    %v619 = vld [vmem:[#allocation6 + $0x220] sm:$0xff]
    %v620 = vld [vmem:[#allocation6 + $0x228] sm:$0xff]
    %v621 = vld [vmem:[#allocation6 + $0x230] sm:$0xff]
    %v622 = vld [vmem:[#allocation6 + $0x238] sm:$0xff]
    %v623 = vld [vmem:[#allocation6 + $0x240] sm:$0xff]
    %v624 = vld [vmem:[#allocation6 + $0x248] sm:$0xff]
    %v625 = vld [vmem:[#allocation6 + $0x250] sm:$0xff]
    %v626 = vld [vmem:[#allocation6 + $0x258] sm:$0xff]
    %v627 = vld [vmem:[#allocation6 + $0x260] sm:$0xff]
    %v628 = vld [vmem:[#allocation6 + $0x268] sm:$0xff]
    %v629 = vld [vmem:[#allocation6 + $0x270] sm:$0xff]
    %v630 = vld [vmem:[#allocation6 + $0x278] sm:$0xff]
    %v631 = vld [vmem:[#allocation6 + $0x280] sm:$0xff]
    %v632 = vld [vmem:[#allocation6 + $0x288] sm:$0xff]
    %v633 = vld [vmem:[#allocation6 + $0x290] sm:$0xff]
    %v634 = vld [vmem:[#allocation6 + $0x298] sm:$0xff]
    %v635 = vld [vmem:[#allocation6 + $0x2a0] sm:$0xff]
    %v636 = vld [vmem:[#allocation6 + $0x2a8] sm:$0xff]
    %v637 = vld [vmem:[#allocation6 + $0x2b0] sm:$0xff]
    %v638 = vld [vmem:[#allocation6 + $0x2b8] sm:$0xff]
    %v639 = vld [vmem:[#allocation6 + $0x2c0] sm:$0xff]
    %v640 = vld [vmem:[#allocation6 + $0x2c8] sm:$0xff]
    %v641 = vld [vmem:[#allocation6 + $0x2d0] sm:$0xff]
    %v642 = vld [vmem:[#allocation6 + $0x2d8] sm:$0xff]
    %v643 = vld [vmem:[#allocation6 + $0x2e0] sm:$0xff]
    %v644 = vld [vmem:[#allocation6 + $0x2e8] sm:$0xff]
    %v645 = vld [vmem:[#allocation6 + $0x2f0] sm:$0xff]
    %v646 = vld [vmem:[#allocation6 + $0x2f8] sm:$0xff]
    %v647 = vld [vmem:[#allocation6 + $0x300] sm:$0xff]
    %v648 = vld [vmem:[#allocation6 + $0x308] sm:$0xff]
    %v649 = vld [vmem:[#allocation6 + $0x310] sm:$0xff]
    %v650 = vld [vmem:[#allocation6 + $0x318] sm:$0xff]
    %v651 = vld [vmem:[#allocation6 + $0x320] sm:$0xff]
    %v652 = vld [vmem:[#allocation6 + $0x328] sm:$0xff]
    %v653 = vld [vmem:[#allocation6 + $0x330] sm:$0xff]
    %v654 = vld [vmem:[#allocation6 + $0x338] sm:$0xff]
    %v655 = vld [vmem:[#allocation6 + $0x340] sm:$0xff]
    %v656 = vld [vmem:[#allocation6 + $0x348] sm:$0xff]
    %v657 = vld [vmem:[#allocation6 + $0x350] sm:$0xff]
    %v658 = vld [vmem:[#allocation6 + $0x358] sm:$0xff]
    %v659 = vld [vmem:[#allocation6 + $0x360] sm:$0xff]
    %v660 = vld [vmem:[#allocation6 + $0x368] sm:$0xff]
    %v661 = vld [vmem:[#allocation6 + $0x370] sm:$0xff]
    %v662 = vld [vmem:[#allocation6 + $0x378] sm:$0xff]
    %v663 = vld [vmem:[#allocation6 + $0x380] sm:$0xff]
    %v664 = vld [vmem:[#allocation6 + $0x388] sm:$0xff]
    %v665 = vld [vmem:[#allocation6 + $0x390] sm:$0xff]
    %v666 = vld [vmem:[#allocation6 + $0x398] sm:$0xff]
    %v667 = vld [vmem:[#allocation6 + $0x3a0] sm:$0xff]
    %v668 = vld [vmem:[#allocation6 + $0x3a8] sm:$0xff]
    %v669 = vld [vmem:[#allocation6 + $0x3b0] sm:$0xff]
    %v670 = vld [vmem:[#allocation6 + $0x3b8] sm:$0xff]
    %v671 = vld [vmem:[#allocation6 + $0x3c0] sm:$0xff]
    %v672 = vld [vmem:[#allocation6 + $0x3c8] sm:$0xff]
    %v673 = vld [vmem:[#allocation6 + $0x3d0] sm:$0xff]
    %v674 = vld [vmem:[#allocation6 + $0x3d8] sm:$0xff]
    %v675 = vld [vmem:[#allocation6 + $0x3e0] sm:$0xff]
    %v676 = vld [vmem:[#allocation6 + $0x3e8] sm:$0xff]
    %v677 = vld [vmem:[#allocation6 + $0x3f0] sm:$0xff]
    %v678 = vld [vmem:[#allocation6 + $0x3f8] sm:$0xff]
    %679 = vmatprep.subr.mxu0 %v616
    %680 = vmatpush1.msra.mxu0 %v615
    %681 = vmatprep.subr.mxu0 %v620
    %682 = vmatpush1.msra.mxu0 %v619
    %683 = vmatprep.subr.mxu0 %v624
    %684 = vmatpush1.msra.mxu0 %v623
    %685 = vmatprep.subr.mxu0 %v628
    %686 = vmatpush1.msra.mxu0 %v627
    %687 = vmatprep.subr.mxu0 %v632
    %688 = vmatpush1.msra.mxu0 %v631
    %689 = vmatprep.subr.mxu0 %v636
    %690 = vmatpush1.msra.mxu0 %v635
    %691 = vmatprep.subr.mxu0 %v640
    %692 = vmatpush1.msra.mxu0 %v639
    %693 = vmatprep.subr.mxu0 %v644
    %694 = vmatpush1.msra.mxu0 %v643
    %695 = vmatprep.subr.mxu0 %v648
    %696 = vmatpush1.msra.mxu0 %v647
    %697 = vmatprep.subr.mxu0 %v652
    %698 = vmatpush1.msra.mxu0 %v651
    %699 = vmatprep.subr.mxu0 %v656
    %700 = vmatpush1.msra.mxu0 %v655
    %701 = vmatprep.subr.mxu0 %v660
    %702 = vmatpush1.msra.mxu0 %v659
    %703 = vmatprep.subr.mxu0 %v664
    %704 = vmatpush1.msra.mxu0 %v663
    %705 = vmatprep.subr.mxu0 %v668
    %706 = vmatpush1.msra.mxu0 %v667
    %707 = vmatprep.subr.mxu0 %v672
    %708 = vmatpush1.msra.mxu0 %v671
    %709 = vmatprep.subr.mxu0 %v676
    %710 = vmatpush1.msra.mxu0 %v675
    %711 = vmatprep.subr.mxu0 0.0
    %712 = vmatpush1.msra.mxu0 0.0
    %713 = vmatprep.subr.mxu0 0.0
    %714 = vmatpush1.msra.mxu0 0.0
    %715 = vmatprep.subr.mxu0 0.0
    %716 = vmatpush1.msra.mxu0 0.0
    %717 = vmatprep.subr.mxu0 0.0
    %718 = vmatpush1.msra.mxu0 0.0
    %719 = vmatprep.subr.mxu0 0.0
    %720 = vmatpush1.msra.mxu0 0.0
    %721 = vmatprep.subr.mxu0 0.0
    %722 = vmatpush1.msra.mxu0 0.0
    %723 = vmatprep.subr.mxu0 0.0
    %724 = vmatpush1.msra.mxu0 0.0
    %725 = vmatprep.subr.mxu0 0.0
    %726 = vmatpush1.msra.mxu0 0.0
    %727 = vmatprep.subr.mxu0 0.0
    %728 = vmatpush1.msra.mxu0 0.0
    %729 = vmatprep.subr.mxu0 0.0
    %730 = vmatpush1.msra.mxu0 0.0
    %731 = vmatprep.subr.mxu0 0.0
    %732 = vmatpush1.msra.mxu0 0.0
    %733 = vmatprep.subr.mxu0 0.0
    %734 = vmatpush1.msra.mxu0 0.0
    %735 = vmatprep.subr.mxu0 0.0
    %736 = vmatpush1.msra.mxu0 0.0
    %737 = vmatprep.subr.mxu0 0.0
    %738 = vmatpush1.msra.mxu0 0.0
    %739 = vmatprep.subr.mxu0 0.0
    %740 = vmatpush1.msra.mxu0 0.0
    %741 = vmatprep.subr.mxu0 0.0
    %742 = vmatpush1.msra.mxu0 0.0
    %743 = vmatprep.mubr.f32.mxu0 0.0
    %744 = vmatmul.mubr.f32.gmra.mrb[0].mxu0 %v548
    %v745 = vpop.f32.mrb[0].mxu0
    %v746 = vadd.f32 0.0, %v745
    %v747 = vpop.f32.mrb[0].mxu0
    %v748 = vadd.f32 0.0, %v747
    %749 = vdwg.mxu0
    %750 = vmatprep.subr.mxu0 %v618
    %751 = vmatpush1.msra.mxu0 %v617
    %752 = vmatprep.subr.mxu0 %v622
    %753 = vmatpush1.msra.mxu0 %v621
    %754 = vmatprep.subr.mxu0 %v626
    %755 = vmatpush1.msra.mxu0 %v625
    %756 = vmatprep.subr.mxu0 %v630
    %757 = vmatpush1.msra.mxu0 %v629
    %758 = vmatprep.subr.mxu0 %v634
    %759 = vmatpush1.msra.mxu0 %v633
    %760 = vmatprep.subr.mxu0 %v638
    %761 = vmatpush1.msra.mxu0 %v637
    %762 = vmatprep.subr.mxu0 %v642
    %763 = vmatpush1.msra.mxu0 %v641
    %764 = vmatprep.subr.mxu0 %v646
    %765 = vmatpush1.msra.mxu0 %v645
    %766 = vmatprep.subr.mxu0 %v650
    %767 = vmatpush1.msra.mxu0 %v649
    %768 = vmatprep.subr.mxu0 %v654
    %769 = vmatpush1.msra.mxu0 %v653
    %770 = vmatprep.subr.mxu0 %v658
    %771 = vmatpush1.msra.mxu0 %v657
    %772 = vmatprep.subr.mxu0 %v662
    %773 = vmatpush1.msra.mxu0 %v661
    %774 = vmatprep.subr.mxu0 %v666
    %775 = vmatpush1.msra.mxu0 %v665
    %776 = vmatprep.subr.mxu0 %v670
    %777 = vmatpush1.msra.mxu0 %v669
    %778 = vmatprep.subr.mxu0 %v674
    %779 = vmatpush1.msra.mxu0 %v673
    %780 = vmatprep.subr.mxu0 %v678
    %781 = vmatpush1.msra.mxu0 %v677
    %782 = vmatprep.subr.mxu0 0.0
    %783 = vmatpush1.msra.mxu0 0.0
    %784 = vmatprep.subr.mxu0 0.0
    %785 = vmatpush1.msra.mxu0 0.0
    %786 = vmatprep.subr.mxu0 0.0
    %787 = vmatpush1.msra.mxu0 0.0
    %788 = vmatprep.subr.mxu0 0.0
    %789 = vmatpush1.msra.mxu0 0.0
    %790 = vmatprep.subr.mxu0 0.0
    %791 = vmatpush1.msra.mxu0 0.0
    %792 = vmatprep.subr.mxu0 0.0
    %793 = vmatpush1.msra.mxu0 0.0
    %794 = vmatprep.subr.mxu0 0.0
    %795 = vmatpush1.msra.mxu0 0.0
    %796 = vmatprep.subr.mxu0 0.0
    %797 = vmatpush1.msra.mxu0 0.0
    %798 = vmatprep.subr.mxu0 0.0
    %799 = vmatpush1.msra.mxu0 0.0
    %800 = vmatprep.subr.mxu0 0.0
    %801 = vmatpush1.msra.mxu0 0.0
    %802 = vmatprep.subr.mxu0 0.0
    %803 = vmatpush1.msra.mxu0 0.0
    %804 = vmatprep.subr.mxu0 0.0
    %805 = vmatpush1.msra.mxu0 0.0
    %806 = vmatprep.subr.mxu0 0.0
    %807 = vmatpush1.msra.mxu0 0.0
    %808 = vmatprep.subr.mxu0 0.0
    %809 = vmatpush1.msra.mxu0 0.0
    %810 = vmatprep.subr.mxu0 0.0
    %811 = vmatpush1.msra.mxu0 0.0
    %812 = vmatprep.subr.mxu0 0.0
    %813 = vmatpush1.msra.mxu0 0.0
    %814 = vmatprep.mubr.f32.mxu0 0.0
    %815 = vmatmul.mubr.f32.gmra.mrb[0].mxu0 %v548
    %v816 = vpop.f32.mrb[0].mxu0
    %v817 = vadd.f32 0.0, %v816
    %v818 = vpop.f32.mrb[0].mxu0
    %v819 = vadd.f32 0.0, %v818
    %820 = vdwg.mxu0
    %821 = vmatprep.subr.mxu0 %v552
    %822 = vmatpush1.msra.mxu0 %v551
    %823 = vmatprep.subr.mxu0 %v556
    %824 = vmatpush1.msra.mxu0 %v555
    %825 = vmatprep.subr.mxu0 %v560
    %826 = vmatpush1.msra.mxu0 %v559
    %827 = vmatprep.subr.mxu0 %v564
    %828 = vmatpush1.msra.mxu0 %v563
    %829 = vmatprep.subr.mxu0 %v568
    %830 = vmatpush1.msra.mxu0 %v567
    %831 = vmatprep.subr.mxu0 %v572
    %832 = vmatpush1.msra.mxu0 %v571
    %833 = vmatprep.subr.mxu0 %v576
    %834 = vmatpush1.msra.mxu0 %v575
    %835 = vmatprep.subr.mxu0 %v580
    %836 = vmatpush1.msra.mxu0 %v579
    %837 = vmatprep.subr.mxu0 %v584
    %838 = vmatpush1.msra.mxu0 %v583
    %839 = vmatprep.subr.mxu0 %v588
    %840 = vmatpush1.msra.mxu0 %v587
    %841 = vmatprep.subr.mxu0 %v592
    %842 = vmatpush1.msra.mxu0 %v591
    %843 = vmatprep.subr.mxu0 %v596
    %844 = vmatpush1.msra.mxu0 %v595
    %845 = vmatprep.subr.mxu0 %v600
    %846 = vmatpush1.msra.mxu0 %v599
    %847 = vmatprep.subr.mxu0 %v604
    %848 = vmatpush1.msra.mxu0 %v603
    %849 = vmatprep.subr.mxu0 %v608
    %850 = vmatpush1.msra.mxu0 %v607
    %851 = vmatprep.subr.mxu0 %v612
    %852 = vmatpush1.msra.mxu0 %v611
    %853 = vmatprep.subr.mxu0 0.0
    %854 = vmatpush1.msra.mxu0 0.0
    %855 = vmatprep.subr.mxu0 0.0
    %856 = vmatpush1.msra.mxu0 0.0
    %857 = vmatprep.subr.mxu0 0.0
    %858 = vmatpush1.msra.mxu0 0.0
    %859 = vmatprep.subr.mxu0 0.0
    %860 = vmatpush1.msra.mxu0 0.0
    %861 = vmatprep.subr.mxu0 0.0
    %862 = vmatpush1.msra.mxu0 0.0
    %863 = vmatprep.subr.mxu0 0.0
    %864 = vmatpush1.msra.mxu0 0.0
    %865 = vmatprep.subr.mxu0 0.0
    %866 = vmatpush1.msra.mxu0 0.0
    %867 = vmatprep.subr.mxu0 0.0
    %868 = vmatpush1.msra.mxu0 0.0
    %869 = vmatprep.subr.mxu0 0.0
    %870 = vmatpush1.msra.mxu0 0.0
    %871 = vmatprep.subr.mxu0 0.0
    %872 = vmatpush1.msra.mxu0 0.0
    %873 = vmatprep.subr.mxu0 0.0
    %874 = vmatpush1.msra.mxu0 0.0
    %875 = vmatprep.subr.mxu0 0.0
    %876 = vmatpush1.msra.mxu0 0.0
    %877 = vmatprep.subr.mxu0 0.0
    %878 = vmatpush1.msra.mxu0 0.0
    %879 = vmatprep.subr.mxu0 0.0
    %880 = vmatpush1.msra.mxu0 0.0
    %881 = vmatprep.subr.mxu0 0.0
    %882 = vmatpush1.msra.mxu0 0.0
    %883 = vmatprep.subr.mxu0 0.0
    %884 = vmatpush1.msra.mxu0 0.0
    %885 = vmatprep.mubr.f32.mxu0 0.0
    %886 = vmatmul.mubr.f32.gmra.mrb[0].mxu0 %v550
    %v887 = vpop.f32.mrb[0].mxu0
    %v888 = vadd.f32 %v746, %v887
    %v889 = vpop.f32.mrb[0].mxu0
    %v890 = vadd.f32 %v748, %v889
    %891 = vdwg.mxu0
    %892 = vmatprep.subr.mxu0 %v554
    %893 = vmatpush1.msra.mxu0 %v553
    %894 = vmatprep.subr.mxu0 %v558
    %895 = vmatpush1.msra.mxu0 %v557
    %896 = vmatprep.subr.mxu0 %v562
    %897 = vmatpush1.msra.mxu0 %v561
    %898 = vmatprep.subr.mxu0 %v566
    %899 = vmatpush1.msra.mxu0 %v565
    %900 = vmatprep.subr.mxu0 %v570
    %901 = vmatpush1.msra.mxu0 %v569
    %902 = vmatprep.subr.mxu0 %v574
    %903 = vmatpush1.msra.mxu0 %v573
    %904 = vmatprep.subr.mxu0 %v578
    %905 = vmatpush1.msra.mxu0 %v577
    %906 = vmatprep.subr.mxu0 %v582
    %907 = vmatpush1.msra.mxu0 %v581
    %908 = vmatprep.subr.mxu0 %v586
    %909 = vmatpush1.msra.mxu0 %v585
    %910 = vmatprep.subr.mxu0 %v590
    %911 = vmatpush1.msra.mxu0 %v589
    %912 = vmatprep.subr.mxu0 %v594
    %913 = vmatpush1.msra.mxu0 %v593
    %914 = vmatprep.subr.mxu0 %v598
    %915 = vmatpush1.msra.mxu0 %v597
    %916 = vmatprep.subr.mxu0 %v602
    %917 = vmatpush1.msra.mxu0 %v601
    %918 = vmatprep.subr.mxu0 %v606
    %919 = vmatpush1.msra.mxu0 %v605
    %920 = vmatprep.subr.mxu0 %v610
    %921 = vmatpush1.msra.mxu0 %v609
    %922 = vmatprep.subr.mxu0 %v614
    %923 = vmatpush1.msra.mxu0 %v613
    %924 = vmatprep.subr.mxu0 0.0
    %925 = vmatpush1.msra.mxu0 0.0
    %926 = vmatprep.subr.mxu0 0.0
    %927 = vmatpush1.msra.mxu0 0.0
    %928 = vmatprep.subr.mxu0 0.0
    %929 = vmatpush1.msra.mxu0 0.0
    %930 = vmatprep.subr.mxu0 0.0
    %931 = vmatpush1.msra.mxu0 0.0
    %932 = vmatprep.subr.mxu0 0.0
    %933 = vmatpush1.msra.mxu0 0.0
    %934 = vmatprep.subr.mxu0 0.0
    %935 = vmatpush1.msra.mxu0 0.0
    %936 = vmatprep.subr.mxu0 0.0
    %937 = vmatpush1.msra.mxu0 0.0
    %938 = vmatprep.subr.mxu0 0.0
    %939 = vmatpush1.msra.mxu0 0.0
    %940 = vmatprep.subr.mxu0 0.0
    %941 = vmatpush1.msra.mxu0 0.0
    %942 = vmatprep.subr.mxu0 0.0
    %943 = vmatpush1.msra.mxu0 0.0
    %944 = vmatprep.subr.mxu0 0.0
    %945 = vmatpush1.msra.mxu0 0.0
    %946 = vmatprep.subr.mxu0 0.0
    %947 = vmatpush1.msra.mxu0 0.0
    %948 = vmatprep.subr.mxu0 0.0
    %949 = vmatpush1.msra.mxu0 0.0
    %950 = vmatprep.subr.mxu0 0.0
    %951 = vmatpush1.msra.mxu0 0.0
    %952 = vmatprep.subr.mxu0 0.0
    %953 = vmatpush1.msra.mxu0 0.0
    %954 = vmatprep.subr.mxu0 0.0
    %955 = vmatpush1.msra.mxu0 0.0
    %956 = vmatprep.mubr.f32.mxu0 0.0
    %957 = vmatmul.mubr.f32.gmra.mrb[0].mxu0 %v550
    %v958 = vpop.f32.mrb[0].mxu0
    %v959 = vadd.f32 %v817, %v958
    %v960 = vpop.f32.mrb[0].mxu0
    %v961 = vadd.f32 %v819, %v960
    %962 = vdwg.mxu0
    %v963 = vadd.f32 %v888, %v504
    %v964 = vadd.f32 %v890, %v508
    %v965 = vadd.f32 %v959, %v512
    %v966 = vadd.f32 %v961, %v516
    %v967 = vxor.u32 %v963, 2147483648
    %v968 = vmul.f32 %v967, 1.442695
    %v969 = vpow.pop %v968
    %v970 = vadd.f32 %v969, 1.0
    %v971 = vrcp.pop %v970
    %v972 = vmul.f32 1.0, %v971
    %v973 = vxor.u32 %v964, 2147483648
    %v974 = vmul.f32 %v973, 1.442695
    %v975 = vpow.pop %v974
    %v976 = vadd.f32 %v975, 1.0
    %v977 = vrcp.pop %v976
    %v978 = vmul.f32 1.0, %v977
    %v979 = vtanh.pop %v965
    %v980 = vxor.u32 %v966, 2147483648
    %v981 = vmul.f32 %v980, 1.442695
    %v982 = vpow.pop %v981
    %v983 = vadd.f32 %v982, 1.0
    %v984 = vrcp.pop %v983
    %v985 = vmul.f32 1.0, %v984
    %v986 = vmul.f32 %v978, %v546
    %v987 = vmul.f32 %v972, %v979
    %v988 = vadd.f32 %v986, %v987
    %v989 = vtanh.pop %v988
    %v990 = vmul.f32 %v985, %v989
    %991 = vst [vmem:[#allocation2 + $0x1] sm:$0x1] %v990
    %v992 = vld [vmem:[#allocation3 + $0x2] sm:$0x1]
    %v993 = vld [vmem:[#allocation6] sm:$0xff]
    %v994 = vld [vmem:[#allocation6 + $0x8] sm:$0xff]
    %v995 = vld [vmem:[#allocation6 + $0x10] sm:$0xff]
    %v996 = vld [vmem:[#allocation6 + $0x18] sm:$0xff]
    %v997 = vld [vmem:[#allocation6 + $0x20] sm:$0xff]
    %v998 = vld [vmem:[#allocation6 + $0x28] sm:$0xff]
    %v999 = vld [vmem:[#allocation6 + $0x30] sm:$0xff]
    %v1000 = vld [vmem:[#allocation6 + $0x38] sm:$0xff]
    %v1001 = vld [vmem:[#allocation6 + $0x40] sm:$0xff]
    %v1002 = vld [vmem:[#allocation6 + $0x48] sm:$0xff]
    %v1003 = vld [vmem:[#allocation6 + $0x50] sm:$0xff]
    %v1004 = vld [vmem:[#allocation6 + $0x58] sm:$0xff]
    %v1005 = vld [vmem:[#allocation6 + $0x60] sm:$0xff]
    %v1006 = vld [vmem:[#allocation6 + $0x68] sm:$0xff]
    %v1007 = vld [vmem:[#allocation6 + $0x70] sm:$0xff]
    %v1008 = vld [vmem:[#allocation6 + $0x78] sm:$0xff]
    %v1009 = vld [vmem:[#allocation6 + $0x80] sm:$0xff]
    %v1010 = vld [vmem:[#allocation6 + $0x88] sm:$0xff]
    %v1011 = vld [vmem:[#allocation6 + $0x90] sm:$0xff]
    %v1012 = vld [vmem:[#allocation6 + $0x98] sm:$0xff]
    %v1013 = vld [vmem:[#allocation6 + $0xa0] sm:$0xff]
    %v1014 = vld [vmem:[#allocation6 + $0xa8] sm:$0xff]
    %v1015 = vld [vmem:[#allocation6 + $0xb0] sm:$0xff]
    %v1016 = vld [vmem:[#allocation6 + $0xb8] sm:$0xff]
    %v1017 = vld [vmem:[#allocation6 + $0xc0] sm:$0xff]
    %v1018 = vld [vmem:[#allocation6 + $0xc8] sm:$0xff]
    %v1019 = vld [vmem:[#allocation6 + $0xd0] sm:$0xff]
    %v1020 = vld [vmem:[#allocation6 + $0xd8] sm:$0xff]
    %v1021 = vld [vmem:[#allocation6 + $0xe0] sm:$0xff]
    %v1022 = vld [vmem:[#allocation6 + $0xe8] sm:$0xff]
    %v1023 = vld [vmem:[#allocation6 + $0xf0] sm:$0xff]
    %v1024 = vld [vmem:[#allocation6 + $0xf8] sm:$0xff]
    %v1025 = vld [vmem:[#allocation6 + $0x100] sm:$0xff]
    %v1026 = vld [vmem:[#allocation6 + $0x108] sm:$0xff]
    %v1027 = vld [vmem:[#allocation6 + $0x110] sm:$0xff]
    %v1028 = vld [vmem:[#allocation6 + $0x118] sm:$0xff]
    %v1029 = vld [vmem:[#allocation6 + $0x120] sm:$0xff]
    %v1030 = vld [vmem:[#allocation6 + $0x128] sm:$0xff]
    %v1031 = vld [vmem:[#allocation6 + $0x130] sm:$0xff]
    %v1032 = vld [vmem:[#allocation6 + $0x138] sm:$0xff]
    %v1033 = vld [vmem:[#allocation6 + $0x140] sm:$0xff]
    %v1034 = vld [vmem:[#allocation6 + $0x148] sm:$0xff]
    %v1035 = vld [vmem:[#allocation6 + $0x150] sm:$0xff]
    %v1036 = vld [vmem:[#allocation6 + $0x158] sm:$0xff]
    %v1037 = vld [vmem:[#allocation6 + $0x160] sm:$0xff]
    %v1038 = vld [vmem:[#allocation6 + $0x168] sm:$0xff]
    %v1039 = vld [vmem:[#allocation6 + $0x170] sm:$0xff]
    %v1040 = vld [vmem:[#allocation6 + $0x178] sm:$0xff]
    %v1041 = vld [vmem:[#allocation6 + $0x180] sm:$0xff]
    %v1042 = vld [vmem:[#allocation6 + $0x188] sm:$0xff]
    %v1043 = vld [vmem:[#allocation6 + $0x190] sm:$0xff]
    %v1044 = vld [vmem:[#allocation6 + $0x198] sm:$0xff]
    %v1045 = vld [vmem:[#allocation6 + $0x1a0] sm:$0xff]
    %v1046 = vld [vmem:[#allocation6 + $0x1a8] sm:$0xff]
    %v1047 = vld [vmem:[#allocation6 + $0x1b0] sm:$0xff]
    %v1048 = vld [vmem:[#allocation6 + $0x1b8] sm:$0xff]
    %v1049 = vld [vmem:[#allocation6 + $0x1c0] sm:$0xff]
    %v1050 = vld [vmem:[#allocation6 + $0x1c8] sm:$0xff]
    %v1051 = vld [vmem:[#allocation6 + $0x1d0] sm:$0xff]
    %v1052 = vld [vmem:[#allocation6 + $0x1d8] sm:$0xff]
    %v1053 = vld [vmem:[#allocation6 + $0x1e0] sm:$0xff]
    %v1054 = vld [vmem:[#allocation6 + $0x1e8] sm:$0xff]
    %v1055 = vld [vmem:[#allocation6 + $0x1f0] sm:$0xff]
    %v1056 = vld [vmem:[#allocation6 + $0x1f8] sm:$0xff]
    %v1057 = vld [vmem:[#allocation6 + $0x200] sm:$0xff]
    %v1058 = vld [vmem:[#allocation6 + $0x208] sm:$0xff]
    %v1059 = vld [vmem:[#allocation6 + $0x210] sm:$0xff]
    %v1060 = vld [vmem:[#allocation6 + $0x218] sm:$0xff]
    %v1061 = vld [vmem:[#allocation6 + $0x220] sm:$0xff]
    %v1062 = vld [vmem:[#allocation6 + $0x228] sm:$0xff]
    %v1063 = vld [vmem:[#allocation6 + $0x230] sm:$0xff]
    %v1064 = vld [vmem:[#allocation6 + $0x238] sm:$0xff]
    %v1065 = vld [vmem:[#allocation6 + $0x240] sm:$0xff]
    %v1066 = vld [vmem:[#allocation6 + $0x248] sm:$0xff]
    %v1067 = vld [vmem:[#allocation6 + $0x250] sm:$0xff]
    %v1068 = vld [vmem:[#allocation6 + $0x258] sm:$0xff]
    %v1069 = vld [vmem:[#allocation6 + $0x260] sm:$0xff]
    %v1070 = vld [vmem:[#allocation6 + $0x268] sm:$0xff]
    %v1071 = vld [vmem:[#allocation6 + $0x270] sm:$0xff]
    %v1072 = vld [vmem:[#allocation6 + $0x278] sm:$0xff]
    %v1073 = vld [vmem:[#allocation6 + $0x280] sm:$0xff]
    %v1074 = vld [vmem:[#allocation6 + $0x288] sm:$0xff]
    %v1075 = vld [vmem:[#allocation6 + $0x290] sm:$0xff]
    %v1076 = vld [vmem:[#allocation6 + $0x298] sm:$0xff]
    %v1077 = vld [vmem:[#allocation6 + $0x2a0] sm:$0xff]
    %v1078 = vld [vmem:[#allocation6 + $0x2a8] sm:$0xff]
    %v1079 = vld [vmem:[#allocation6 + $0x2b0] sm:$0xff]
    %v1080 = vld [vmem:[#allocation6 + $0x2b8] sm:$0xff]
    %v1081 = vld [vmem:[#allocation6 + $0x2c0] sm:$0xff]
    %v1082 = vld [vmem:[#allocation6 + $0x2c8] sm:$0xff]
    %v1083 = vld [vmem:[#allocation6 + $0x2d0] sm:$0xff]
    %v1084 = vld [vmem:[#allocation6 + $0x2d8] sm:$0xff]
    %v1085 = vld [vmem:[#allocation6 + $0x2e0] sm:$0xff]
    %v1086 = vld [vmem:[#allocation6 + $0x2e8] sm:$0xff]
    %v1087 = vld [vmem:[#allocation6 + $0x2f0] sm:$0xff]
    %v1088 = vld [vmem:[#allocation6 + $0x2f8] sm:$0xff]
    %v1089 = vld [vmem:[#allocation6 + $0x300] sm:$0xff]
    %v1090 = vld [vmem:[#allocation6 + $0x308] sm:$0xff]
    %v1091 = vld [vmem:[#allocation6 + $0x310] sm:$0xff]
    %v1092 = vld [vmem:[#allocation6 + $0x318] sm:$0xff]
    %v1093 = vld [vmem:[#allocation6 + $0x320] sm:$0xff]
    %v1094 = vld [vmem:[#allocation6 + $0x328] sm:$0xff]
    %v1095 = vld [vmem:[#allocation6 + $0x330] sm:$0xff]
    %v1096 = vld [vmem:[#allocation6 + $0x338] sm:$0xff]
    %v1097 = vld [vmem:[#allocation6 + $0x340] sm:$0xff]
    %v1098 = vld [vmem:[#allocation6 + $0x348] sm:$0xff]
    %v1099 = vld [vmem:[#allocation6 + $0x350] sm:$0xff]
    %v1100 = vld [vmem:[#allocation6 + $0x358] sm:$0xff]
    %v1101 = vld [vmem:[#allocation6 + $0x360] sm:$0xff]
    %v1102 = vld [vmem:[#allocation6 + $0x368] sm:$0xff]
    %v1103 = vld [vmem:[#allocation6 + $0x370] sm:$0xff]
    %v1104 = vld [vmem:[#allocation6 + $0x378] sm:$0xff]
    %v1105 = vld [vmem:[#allocation6 + $0x380] sm:$0xff]
    %v1106 = vld [vmem:[#allocation6 + $0x388] sm:$0xff]
    %v1107 = vld [vmem:[#allocation6 + $0x390] sm:$0xff]
    %v1108 = vld [vmem:[#allocation6 + $0x398] sm:$0xff]
    %v1109 = vld [vmem:[#allocation6 + $0x3a0] sm:$0xff]
    %v1110 = vld [vmem:[#allocation6 + $0x3a8] sm:$0xff]
    %v1111 = vld [vmem:[#allocation6 + $0x3b0] sm:$0xff]
    %v1112 = vld [vmem:[#allocation6 + $0x3b8] sm:$0xff]
    %v1113 = vld [vmem:[#allocation6 + $0x3c0] sm:$0xff]
    %v1114 = vld [vmem:[#allocation6 + $0x3c8] sm:$0xff]
    %v1115 = vld [vmem:[#allocation6 + $0x3d0] sm:$0xff]
    %v1116 = vld [vmem:[#allocation6 + $0x3d8] sm:$0xff]
    %v1117 = vld [vmem:[#allocation6 + $0x3e0] sm:$0xff]
    %v1118 = vld [vmem:[#allocation6 + $0x3e8] sm:$0xff]
    %v1119 = vld [vmem:[#allocation6 + $0x3f0] sm:$0xff]
    %v1120 = vld [vmem:[#allocation6 + $0x3f8] sm:$0xff]
    %1121 = vmatprep.subr.mxu0 %v1058
    %1122 = vmatpush1.msra.mxu0 %v1057
    %1123 = vmatprep.subr.mxu0 %v1062
    %1124 = vmatpush1.msra.mxu0 %v1061
    %1125 = vmatprep.subr.mxu0 %v1066
    %1126 = vmatpush1.msra.mxu0 %v1065
    %1127 = vmatprep.subr.mxu0 %v1070
    %1128 = vmatpush1.msra.mxu0 %v1069
    %1129 = vmatprep.subr.mxu0 %v1074
    %1130 = vmatpush1.msra.mxu0 %v1073
    %1131 = vmatprep.subr.mxu0 %v1078
    %1132 = vmatpush1.msra.mxu0 %v1077
    %1133 = vmatprep.subr.mxu0 %v1082
    %1134 = vmatpush1.msra.mxu0 %v1081
    %1135 = vmatprep.subr.mxu0 %v1086
    %1136 = vmatpush1.msra.mxu0 %v1085
    %1137 = vmatprep.subr.mxu0 %v1090
    %1138 = vmatpush1.msra.mxu0 %v1089
    %1139 = vmatprep.subr.mxu0 %v1094
    %1140 = vmatpush1.msra.mxu0 %v1093
    %1141 = vmatprep.subr.mxu0 %v1098
    %1142 = vmatpush1.msra.mxu0 %v1097
    %1143 = vmatprep.subr.mxu0 %v1102
    %1144 = vmatpush1.msra.mxu0 %v1101
    %1145 = vmatprep.subr.mxu0 %v1106
    %1146 = vmatpush1.msra.mxu0 %v1105
    %1147 = vmatprep.subr.mxu0 %v1110
    %1148 = vmatpush1.msra.mxu0 %v1109
    %1149 = vmatprep.subr.mxu0 %v1114
    %1150 = vmatpush1.msra.mxu0 %v1113
    %1151 = vmatprep.subr.mxu0 %v1118
    %1152 = vmatpush1.msra.mxu0 %v1117
    %1153 = vmatprep.subr.mxu0 0.0
    %1154 = vmatpush1.msra.mxu0 0.0
    %1155 = vmatprep.subr.mxu0 0.0
    %1156 = vmatpush1.msra.mxu0 0.0
    %1157 = vmatprep.subr.mxu0 0.0
    %1158 = vmatpush1.msra.mxu0 0.0
    %1159 = vmatprep.subr.mxu0 0.0
    %1160 = vmatpush1.msra.mxu0 0.0
    %1161 = vmatprep.subr.mxu0 0.0
    %1162 = vmatpush1.msra.mxu0 0.0
    %1163 = vmatprep.subr.mxu0 0.0
    %1164 = vmatpush1.msra.mxu0 0.0
    %1165 = vmatprep.subr.mxu0 0.0
    %1166 = vmatpush1.msra.mxu0 0.0
    %1167 = vmatprep.subr.mxu0 0.0
    %1168 = vmatpush1.msra.mxu0 0.0
    %1169 = vmatprep.subr.mxu0 0.0
    %1170 = vmatpush1.msra.mxu0 0.0
    %1171 = vmatprep.subr.mxu0 0.0
    %1172 = vmatpush1.msra.mxu0 0.0
    %1173 = vmatprep.subr.mxu0 0.0
    %1174 = vmatpush1.msra.mxu0 0.0
    %1175 = vmatprep.subr.mxu0 0.0
    %1176 = vmatpush1.msra.mxu0 0.0
    %1177 = vmatprep.subr.mxu0 0.0
    %1178 = vmatpush1.msra.mxu0 0.0
    %1179 = vmatprep.subr.mxu0 0.0
    %1180 = vmatpush1.msra.mxu0 0.0
    %1181 = vmatprep.subr.mxu0 0.0
    %1182 = vmatpush1.msra.mxu0 0.0
    %1183 = vmatprep.subr.mxu0 0.0
    %1184 = vmatpush1.msra.mxu0 0.0
    %1185 = vmatprep.mubr.f32.mxu0 0.0
    %1186 = vmatmul.mubr.f32.gmra.mrb[0].mxu0 %v990
    %v1187 = vpop.f32.mrb[0].mxu0
    %v1188 = vadd.f32 0.0, %v1187
    %v1189 = vpop.f32.mrb[0].mxu0
    %v1190 = vadd.f32 0.0, %v1189
    %1191 = vdwg.mxu0
    %1192 = vmatprep.subr.mxu0 %v1060
    %1193 = vmatpush1.msra.mxu0 %v1059
    %1194 = vmatprep.subr.mxu0 %v1064
    %1195 = vmatpush1.msra.mxu0 %v1063
    %1196 = vmatprep.subr.mxu0 %v1068
    %1197 = vmatpush1.msra.mxu0 %v1067
    %1198 = vmatprep.subr.mxu0 %v1072
    %1199 = vmatpush1.msra.mxu0 %v1071
    %1200 = vmatprep.subr.mxu0 %v1076
    %1201 = vmatpush1.msra.mxu0 %v1075
    %1202 = vmatprep.subr.mxu0 %v1080
    %1203 = vmatpush1.msra.mxu0 %v1079
    %1204 = vmatprep.subr.mxu0 %v1084
    %1205 = vmatpush1.msra.mxu0 %v1083
    %1206 = vmatprep.subr.mxu0 %v1088
    %1207 = vmatpush1.msra.mxu0 %v1087
    %1208 = vmatprep.subr.mxu0 %v1092
    %1209 = vmatpush1.msra.mxu0 %v1091
    %1210 = vmatprep.subr.mxu0 %v1096
    %1211 = vmatpush1.msra.mxu0 %v1095
    %1212 = vmatprep.subr.mxu0 %v1100
    %1213 = vmatpush1.msra.mxu0 %v1099
    %1214 = vmatprep.subr.mxu0 %v1104
    %1215 = vmatpush1.msra.mxu0 %v1103
    %1216 = vmatprep.subr.mxu0 %v1108
    %1217 = vmatpush1.msra.mxu0 %v1107
    %1218 = vmatprep.subr.mxu0 %v1112
    %1219 = vmatpush1.msra.mxu0 %v1111
    %1220 = vmatprep.subr.mxu0 %v1116
    %1221 = vmatpush1.msra.mxu0 %v1115
    %1222 = vmatprep.subr.mxu0 %v1120
    %1223 = vmatpush1.msra.mxu0 %v1119
    %1224 = vmatprep.subr.mxu0 0.0
    %1225 = vmatpush1.msra.mxu0 0.0
    %1226 = vmatprep.subr.mxu0 0.0
    %1227 = vmatpush1.msra.mxu0 0.0
    %1228 = vmatprep.subr.mxu0 0.0
    %1229 = vmatpush1.msra.mxu0 0.0
    %1230 = vmatprep.subr.mxu0 0.0
    %1231 = vmatpush1.msra.mxu0 0.0
    %1232 = vmatprep.subr.mxu0 0.0
    %1233 = vmatpush1.msra.mxu0 0.0
    %1234 = vmatprep.subr.mxu0 0.0
    %1235 = vmatpush1.msra.mxu0 0.0
    %1236 = vmatprep.subr.mxu0 0.0
    %1237 = vmatpush1.msra.mxu0 0.0
    %1238 = vmatprep.subr.mxu0 0.0
    %1239 = vmatpush1.msra.mxu0 0.0
    %1240 = vmatprep.subr.mxu0 0.0
    %1241 = vmatpush1.msra.mxu0 0.0
    %1242 = vmatprep.subr.mxu0 0.0
    %1243 = vmatpush1.msra.mxu0 0.0
    %1244 = vmatprep.subr.mxu0 0.0
    %1245 = vmatpush1.msra.mxu0 0.0
    %1246 = vmatprep.subr.mxu0 0.0
    %1247 = vmatpush1.msra.mxu0 0.0
    %1248 = vmatprep.subr.mxu0 0.0
    %1249 = vmatpush1.msra.mxu0 0.0
    %1250 = vmatprep.subr.mxu0 0.0
    %1251 = vmatpush1.msra.mxu0 0.0
    %1252 = vmatprep.subr.mxu0 0.0
    %1253 = vmatpush1.msra.mxu0 0.0
    %1254 = vmatprep.subr.mxu0 0.0
    %1255 = vmatpush1.msra.mxu0 0.0
    %1256 = vmatprep.mubr.f32.mxu0 0.0
    %1257 = vmatmul.mubr.f32.gmra.mrb[0].mxu0 %v990
    %v1258 = vpop.f32.mrb[0].mxu0
    %v1259 = vadd.f32 0.0, %v1258
    %v1260 = vpop.f32.mrb[0].mxu0
    %v1261 = vadd.f32 0.0, %v1260
    %1262 = vdwg.mxu0
    %1263 = vmatprep.subr.mxu0 %v994
    %1264 = vmatpush1.msra.mxu0 %v993
    %1265 = vmatprep.subr.mxu0 %v998
    %1266 = vmatpush1.msra.mxu0 %v997
    %1267 = vmatprep.subr.mxu0 %v1002
    %1268 = vmatpush1.msra.mxu0 %v1001
    %1269 = vmatprep.subr.mxu0 %v1006
    %1270 = vmatpush1.msra.mxu0 %v1005
    %1271 = vmatprep.subr.mxu0 %v1010
    %1272 = vmatpush1.msra.mxu0 %v1009
    %1273 = vmatprep.subr.mxu0 %v1014
    %1274 = vmatpush1.msra.mxu0 %v1013
    %1275 = vmatprep.subr.mxu0 %v1018
    %1276 = vmatpush1.msra.mxu0 %v1017
    %1277 = vmatprep.subr.mxu0 %v1022
    %1278 = vmatpush1.msra.mxu0 %v1021
    %1279 = vmatprep.subr.mxu0 %v1026
    %1280 = vmatpush1.msra.mxu0 %v1025
    %1281 = vmatprep.subr.mxu0 %v1030
    %1282 = vmatpush1.msra.mxu0 %v1029
    %1283 = vmatprep.subr.mxu0 %v1034
    %1284 = vmatpush1.msra.mxu0 %v1033
    %1285 = vmatprep.subr.mxu0 %v1038
    %1286 = vmatpush1.msra.mxu0 %v1037
    %1287 = vmatprep.subr.mxu0 %v1042
    %1288 = vmatpush1.msra.mxu0 %v1041
    %1289 = vmatprep.subr.mxu0 %v1046
    %1290 = vmatpush1.msra.mxu0 %v1045
    %1291 = vmatprep.subr.mxu0 %v1050
    %1292 = vmatpush1.msra.mxu0 %v1049
    %1293 = vmatprep.subr.mxu0 %v1054
    %1294 = vmatpush1.msra.mxu0 %v1053
    %1295 = vmatprep.subr.mxu0 0.0
    %1296 = vmatpush1.msra.mxu0 0.0
    %1297 = vmatprep.subr.mxu0 0.0
    %1298 = vmatpush1.msra.mxu0 0.0
    %1299 = vmatprep.subr.mxu0 0.0
    %1300 = vmatpush1.msra.mxu0 0.0
    %1301 = vmatprep.subr.mxu0 0.0
    %1302 = vmatpush1.msra.mxu0 0.0
    %1303 = vmatprep.subr.mxu0 0.0
    %1304 = vmatpush1.msra.mxu0 0.0
    %1305 = vmatprep.subr.mxu0 0.0
    %1306 = vmatpush1.msra.mxu0 0.0
    %1307 = vmatprep.subr.mxu0 0.0
    %1308 = vmatpush1.msra.mxu0 0.0
    %1309 = vmatprep.subr.mxu0 0.0
    %1310 = vmatpush1.msra.mxu0 0.0
    %1311 = vmatprep.subr.mxu0 0.0
    %1312 = vmatpush1.msra.mxu0 0.0
    %1313 = vmatprep.subr.mxu0 0.0
    %1314 = vmatpush1.msra.mxu0 0.0
    %1315 = vmatprep.subr.mxu0 0.0
    %1316 = vmatpush1.msra.mxu0 0.0
    %1317 = vmatprep.subr.mxu0 0.0
    %1318 = vmatpush1.msra.mxu0 0.0
    %1319 = vmatprep.subr.mxu0 0.0
    %1320 = vmatpush1.msra.mxu0 0.0
    %1321 = vmatprep.subr.mxu0 0.0
    %1322 = vmatpush1.msra.mxu0 0.0
    %1323 = vmatprep.subr.mxu0 0.0
    %1324 = vmatpush1.msra.mxu0 0.0
    %1325 = vmatprep.subr.mxu0 0.0
    %1326 = vmatpush1.msra.mxu0 0.0
    %1327 = vmatprep.mubr.f32.mxu0 0.0
    %1328 = vmatmul.mubr.f32.gmra.mrb[0].mxu0 %v992
    %v1329 = vpop.f32.mrb[0].mxu0
    %v1330 = vadd.f32 %v1188, %v1329
    %v1331 = vpop.f32.mrb[0].mxu0
    %v1332 = vadd.f32 %v1190, %v1331
    %1333 = vdwg.mxu0
    %1334 = vmatprep.subr.mxu0 %v996
    %1335 = vmatpush1.msra.mxu0 %v995
    %1336 = vmatprep.subr.mxu0 %v1000
    %1337 = vmatpush1.msra.mxu0 %v999
    %1338 = vmatprep.subr.mxu0 %v1004
    %1339 = vmatpush1.msra.mxu0 %v1003
    %1340 = vmatprep.subr.mxu0 %v1008
    %1341 = vmatpush1.msra.mxu0 %v1007
    %1342 = vmatprep.subr.mxu0 %v1012
    %1343 = vmatpush1.msra.mxu0 %v1011
    %1344 = vmatprep.subr.mxu0 %v1016
    %1345 = vmatpush1.msra.mxu0 %v1015
    %1346 = vmatprep.subr.mxu0 %v1020
    %1347 = vmatpush1.msra.mxu0 %v1019
    %1348 = vmatprep.subr.mxu0 %v1024
    %1349 = vmatpush1.msra.mxu0 %v1023
    %1350 = vmatprep.subr.mxu0 %v1028
    %1351 = vmatpush1.msra.mxu0 %v1027
    %1352 = vmatprep.subr.mxu0 %v1032
    %1353 = vmatpush1.msra.mxu0 %v1031
    %1354 = vmatprep.subr.mxu0 %v1036
    %1355 = vmatpush1.msra.mxu0 %v1035
    %1356 = vmatprep.subr.mxu0 %v1040
    %1357 = vmatpush1.msra.mxu0 %v1039
    %1358 = vmatprep.subr.mxu0 %v1044
    %1359 = vmatpush1.msra.mxu0 %v1043
    %1360 = vmatprep.subr.mxu0 %v1048
    %1361 = vmatpush1.msra.mxu0 %v1047
    %1362 = vmatprep.subr.mxu0 %v1052
    %1363 = vmatpush1.msra.mxu0 %v1051
    %1364 = vmatprep.subr.mxu0 %v1056
    %1365 = vmatpush1.msra.mxu0 %v1055
    %1366 = vmatprep.subr.mxu0 0.0
    %1367 = vmatpush1.msra.mxu0 0.0
    %1368 = vmatprep.subr.mxu0 0.0
    %1369 = vmatpush1.msra.mxu0 0.0
    %1370 = vmatprep.subr.mxu0 0.0
    %1371 = vmatpush1.msra.mxu0 0.0
    %1372 = vmatprep.subr.mxu0 0.0
    %1373 = vmatpush1.msra.mxu0 0.0
    %1374 = vmatprep.subr.mxu0 0.0
    %1375 = vmatpush1.msra.mxu0 0.0
    %1376 = vmatprep.subr.mxu0 0.0
    %1377 = vmatpush1.msra.mxu0 0.0
    %1378 = vmatprep.subr.mxu0 0.0
    %1379 = vmatpush1.msra.mxu0 0.0
    %1380 = vmatprep.subr.mxu0 0.0
    %1381 = vmatpush1.msra.mxu0 0.0
    %1382 = vmatprep.subr.mxu0 0.0
    %1383 = vmatpush1.msra.mxu0 0.0
    %1384 = vmatprep.subr.mxu0 0.0
    %1385 = vmatpush1.msra.mxu0 0.0
    %1386 = vmatprep.subr.mxu0 0.0
    %1387 = vmatpush1.msra.mxu0 0.0
    %1388 = vmatprep.subr.mxu0 0.0
    %1389 = vmatpush1.msra.mxu0 0.0
    %1390 = vmatprep.subr.mxu0 0.0
    %1391 = vmatpush1.msra.mxu0 0.0
    %1392 = vmatprep.subr.mxu0 0.0
    %1393 = vmatpush1.msra.mxu0 0.0
    %1394 = vmatprep.subr.mxu0 0.0
    %1395 = vmatpush1.msra.mxu0 0.0
    %1396 = vmatprep.subr.mxu0 0.0
    %1397 = vmatpush1.msra.mxu0 0.0
    %1398 = vmatprep.mubr.f32.mxu0 0.0
    %1399 = vmatmul.mubr.f32.gmra.mrb[0].mxu0 %v992
    %v1400 = vpop.f32.mrb[0].mxu0
    %v1401 = vadd.f32 %v1259, %v1400
    %v1402 = vpop.f32.mrb[0].mxu0
    %v1403 = vadd.f32 %v1261, %v1402
    %1404 = vdwg.mxu0
    %v1405 = vadd.f32 %v1330, %v504
    %v1406 = vadd.f32 %v1332, %v508
    %v1407 = vadd.f32 %v1401, %v512
    %v1408 = vadd.f32 %v1403, %v516
    %v1409 = vxor.u32 %v1405, 2147483648
    %v1410 = vmul.f32 %v1409, 1.442695
    %v1411 = vpow.pop %v1410
    %v1412 = vadd.f32 %v1411, 1.0
    %v1413 = vrcp.pop %v1412
    %v1414 = vmul.f32 1.0, %v1413
    %v1415 = vxor.u32 %v1406, 2147483648
    %v1416 = vmul.f32 %v1415, 1.442695
    %v1417 = vpow.pop %v1416
    %v1418 = vadd.f32 %v1417, 1.0
    %v1419 = vrcp.pop %v1418
    %v1420 = vmul.f32 1.0, %v1419
    %v1421 = vtanh.pop %v1407
    %v1422 = vxor.u32 %v1408, 2147483648
    %v1423 = vmul.f32 %v1422, 1.442695
    %v1424 = vpow.pop %v1423
    %v1425 = vadd.f32 %v1424, 1.0
    %v1426 = vrcp.pop %v1425
    %v1427 = vmul.f32 1.0, %v1426
    %v1428 = vmul.f32 %v1420, %v988
    %v1429 = vmul.f32 %v1414, %v1421
    %v1430 = vadd.f32 %v1428, %v1429
    %v1431 = vtanh.pop %v1430
    %v1432 = vmul.f32 %v1427, %v1431
    %1433 = vst [vmem:[#allocation2 + $0x2] sm:$0x1] %v1432
    %v1434 = vld [vmem:[#allocation3 + $0x3] sm:$0x1]
    %v1435 = vld [vmem:[#allocation6] sm:$0xff]
    %v1436 = vld [vmem:[#allocation6 + $0x8] sm:$0xff]
    %v1437 = vld [vmem:[#allocation6 + $0x10] sm:$0xff]
    %v1438 = vld [vmem:[#allocation6 + $0x18] sm:$0xff]
    %v1439 = vld [vmem:[#allocation6 + $0x20] sm:$0xff]
    %v1440 = vld [vmem:[#allocation6 + $0x28] sm:$0xff]
    %v1441 = vld [vmem:[#allocation6 + $0x30] sm:$0xff]
    %v1442 = vld [vmem:[#allocation6 + $0x38] sm:$0xff]
    %v1443 = vld [vmem:[#allocation6 + $0x40] sm:$0xff]
    %v1444 = vld [vmem:[#allocation6 + $0x48] sm:$0xff]
    %v1445 = vld [vmem:[#allocation6 + $0x50] sm:$0xff]
    %v1446 = vld [vmem:[#allocation6 + $0x58] sm:$0xff]
    %v1447 = vld [vmem:[#allocation6 + $0x60] sm:$0xff]
    %v1448 = vld [vmem:[#allocation6 + $0x68] sm:$0xff]
    %v1449 = vld [vmem:[#allocation6 + $0x70] sm:$0xff]
    %v1450 = vld [vmem:[#allocation6 + $0x78] sm:$0xff]
    %v1451 = vld [vmem:[#allocation6 + $0x80] sm:$0xff]
    %v1452 = vld [vmem:[#allocation6 + $0x88] sm:$0xff]
    %v1453 = vld [vmem:[#allocation6 + $0x90] sm:$0xff]
    %v1454 = vld [vmem:[#allocation6 + $0x98] sm:$0xff]
    %v1455 = vld [vmem:[#allocation6 + $0xa0] sm:$0xff]
    %v1456 = vld [vmem:[#allocation6 + $0xa8] sm:$0xff]
    %v1457 = vld [vmem:[#allocation6 + $0xb0] sm:$0xff]
    %v1458 = vld [vmem:[#allocation6 + $0xb8] sm:$0xff]
    %v1459 = vld [vmem:[#allocation6 + $0xc0] sm:$0xff]
    %v1460 = vld [vmem:[#allocation6 + $0xc8] sm:$0xff]
    %v1461 = vld [vmem:[#allocation6 + $0xd0] sm:$0xff]
    %v1462 = vld [vmem:[#allocation6 + $0xd8] sm:$0xff]
    %v1463 = vld [vmem:[#allocation6 + $0xe0] sm:$0xff]
    %v1464 = vld [vmem:[#allocation6 + $0xe8] sm:$0xff]
    %v1465 = vld [vmem:[#allocation6 + $0xf0] sm:$0xff]
    %v1466 = vld [vmem:[#allocation6 + $0xf8] sm:$0xff]
    %v1467 = vld [vmem:[#allocation6 + $0x100] sm:$0xff]
    %v1468 = vld [vmem:[#allocation6 + $0x108] sm:$0xff]
    %v1469 = vld [vmem:[#allocation6 + $0x110] sm:$0xff]
    %v1470 = vld [vmem:[#allocation6 + $0x118] sm:$0xff]
    %v1471 = vld [vmem:[#allocation6 + $0x120] sm:$0xff]
    %v1472 = vld [vmem:[#allocation6 + $0x128] sm:$0xff]
    %v1473 = vld [vmem:[#allocation6 + $0x130] sm:$0xff]
    %v1474 = vld [vmem:[#allocation6 + $0x138] sm:$0xff]
    %v1475 = vld [vmem:[#allocation6 + $0x140] sm:$0xff]
    %v1476 = vld [vmem:[#allocation6 + $0x148] sm:$0xff]
    %v1477 = vld [vmem:[#allocation6 + $0x150] sm:$0xff]
    %v1478 = vld [vmem:[#allocation6 + $0x158] sm:$0xff]
    %v1479 = vld [vmem:[#allocation6 + $0x160] sm:$0xff]
    %v1480 = vld [vmem:[#allocation6 + $0x168] sm:$0xff]
    %v1481 = vld [vmem:[#allocation6 + $0x170] sm:$0xff]
    %v1482 = vld [vmem:[#allocation6 + $0x178] sm:$0xff]
    %v1483 = vld [vmem:[#allocation6 + $0x180] sm:$0xff]
    %v1484 = vld [vmem:[#allocation6 + $0x188] sm:$0xff]
    %v1485 = vld [vmem:[#allocation6 + $0x190] sm:$0xff]
    %v1486 = vld [vmem:[#allocation6 + $0x198] sm:$0xff]
    %v1487 = vld [vmem:[#allocation6 + $0x1a0] sm:$0xff]
    %v1488 = vld [vmem:[#allocation6 + $0x1a8] sm:$0xff]
    %v1489 = vld [vmem:[#allocation6 + $0x1b0] sm:$0xff]
    %v1490 = vld [vmem:[#allocation6 + $0x1b8] sm:$0xff]
    %v1491 = vld [vmem:[#allocation6 + $0x1c0] sm:$0xff]
    %v1492 = vld [vmem:[#allocation6 + $0x1c8] sm:$0xff]
    %v1493 = vld [vmem:[#allocation6 + $0x1d0] sm:$0xff]
    %v1494 = vld [vmem:[#allocation6 + $0x1d8] sm:$0xff]
    %v1495 = vld [vmem:[#allocation6 + $0x1e0] sm:$0xff]
    %v1496 = vld [vmem:[#allocation6 + $0x1e8] sm:$0xff]
    %v1497 = vld [vmem:[#allocation6 + $0x1f0] sm:$0xff]
    %v1498 = vld [vmem:[#allocation6 + $0x1f8] sm:$0xff]
    %v1499 = vld [vmem:[#allocation6 + $0x200] sm:$0xff]
    %v1500 = vld [vmem:[#allocation6 + $0x208] sm:$0xff]
    %v1501 = vld [vmem:[#allocation6 + $0x210] sm:$0xff]
    %v1502 = vld [vmem:[#allocation6 + $0x218] sm:$0xff]
    %v1503 = vld [vmem:[#allocation6 + $0x220] sm:$0xff]
    %v1504 = vld [vmem:[#allocation6 + $0x228] sm:$0xff]
    %v1505 = vld [vmem:[#allocation6 + $0x230] sm:$0xff]
    %v1506 = vld [vmem:[#allocation6 + $0x238] sm:$0xff]
    %v1507 = vld [vmem:[#allocation6 + $0x240] sm:$0xff]
    %v1508 = vld [vmem:[#allocation6 + $0x248] sm:$0xff]
    %v1509 = vld [vmem:[#allocation6 + $0x250] sm:$0xff]
    %v1510 = vld [vmem:[#allocation6 + $0x258] sm:$0xff]
    %v1511 = vld [vmem:[#allocation6 + $0x260] sm:$0xff]
    %v1512 = vld [vmem:[#allocation6 + $0x268] sm:$0xff]
    %v1513 = vld [vmem:[#allocation6 + $0x270] sm:$0xff]
    %v1514 = vld [vmem:[#allocation6 + $0x278] sm:$0xff]
    %v1515 = vld [vmem:[#allocation6 + $0x280] sm:$0xff]
    %v1516 = vld [vmem:[#allocation6 + $0x288] sm:$0xff]
    %v1517 = vld [vmem:[#allocation6 + $0x290] sm:$0xff]
    %v1518 = vld [vmem:[#allocation6 + $0x298] sm:$0xff]
    %v1519 = vld [vmem:[#allocation6 + $0x2a0] sm:$0xff]
    %v1520 = vld [vmem:[#allocation6 + $0x2a8] sm:$0xff]
    %v1521 = vld [vmem:[#allocation6 + $0x2b0] sm:$0xff]
    %v1522 = vld [vmem:[#allocation6 + $0x2b8] sm:$0xff]
    %v1523 = vld [vmem:[#allocation6 + $0x2c0] sm:$0xff]
    %v1524 = vld [vmem:[#allocation6 + $0x2c8] sm:$0xff]
    %v1525 = vld [vmem:[#allocation6 + $0x2d0] sm:$0xff]
    %v1526 = vld [vmem:[#allocation6 + $0x2d8] sm:$0xff]
    %v1527 = vld [vmem:[#allocation6 + $0x2e0] sm:$0xff]
    %v1528 = vld [vmem:[#allocation6 + $0x2e8] sm:$0xff]
    %v1529 = vld [vmem:[#allocation6 + $0x2f0] sm:$0xff]
    %v1530 = vld [vmem:[#allocation6 + $0x2f8] sm:$0xff]
    %v1531 = vld [vmem:[#allocation6 + $0x300] sm:$0xff]
    %v1532 = vld [vmem:[#allocation6 + $0x308] sm:$0xff]
    %v1533 = vld [vmem:[#allocation6 + $0x310] sm:$0xff]
    %v1534 = vld [vmem:[#allocation6 + $0x318] sm:$0xff]
    %v1535 = vld [vmem:[#allocation6 + $0x320] sm:$0xff]
    %v1536 = vld [vmem:[#allocation6 + $0x328] sm:$0xff]
    %v1537 = vld [vmem:[#allocation6 + $0x330] sm:$0xff]
    %v1538 = vld [vmem:[#allocation6 + $0x338] sm:$0xff]
    %v1539 = vld [vmem:[#allocation6 + $0x340] sm:$0xff]
    %v1540 = vld [vmem:[#allocation6 + $0x348] sm:$0xff]
    %v1541 = vld [vmem:[#allocation6 + $0x350] sm:$0xff]
    %v1542 = vld [vmem:[#allocation6 + $0x358] sm:$0xff]
    %v1543 = vld [vmem:[#allocation6 + $0x360] sm:$0xff]
    %v1544 = vld [vmem:[#allocation6 + $0x368] sm:$0xff]
    %v1545 = vld [vmem:[#allocation6 + $0x370] sm:$0xff]
    %v1546 = vld [vmem:[#allocation6 + $0x378] sm:$0xff]
    %v1547 = vld [vmem:[#allocation6 + $0x380] sm:$0xff]
    %v1548 = vld [vmem:[#allocation6 + $0x388] sm:$0xff]
    %v1549 = vld [vmem:[#allocation6 + $0x390] sm:$0xff]
    %v1550 = vld [vmem:[#allocation6 + $0x398] sm:$0xff]
    %v1551 = vld [vmem:[#allocation6 + $0x3a0] sm:$0xff]
    %v1552 = vld [vmem:[#allocation6 + $0x3a8] sm:$0xff]
    %v1553 = vld [vmem:[#allocation6 + $0x3b0] sm:$0xff]
    %v1554 = vld [vmem:[#allocation6 + $0x3b8] sm:$0xff]
    %v1555 = vld [vmem:[#allocation6 + $0x3c0] sm:$0xff]
    %v1556 = vld [vmem:[#allocation6 + $0x3c8] sm:$0xff]
    %v1557 = vld [vmem:[#allocation6 + $0x3d0] sm:$0xff]
    %v1558 = vld [vmem:[#allocation6 + $0x3d8] sm:$0xff]
    %v1559 = vld [vmem:[#allocation6 + $0x3e0] sm:$0xff]
    %v1560 = vld [vmem:[#allocation6 + $0x3e8] sm:$0xff]
    %v1561 = vld [vmem:[#allocation6 + $0x3f0] sm:$0xff]
    %v1562 = vld [vmem:[#allocation6 + $0x3f8] sm:$0xff]
    %1563 = vmatprep.subr.mxu0 %v1500
    %1564 = vmatpush1.msra.mxu0 %v1499
    %1565 = vmatprep.subr.mxu0 %v1504
    %1566 = vmatpush1.msra.mxu0 %v1503
    %1567 = vmatprep.subr.mxu0 %v1508
    %1568 = vmatpush1.msra.mxu0 %v1507
    %1569 = vmatprep.subr.mxu0 %v1512
    %1570 = vmatpush1.msra.mxu0 %v1511
    %1571 = vmatprep.subr.mxu0 %v1516
    %1572 = vmatpush1.msra.mxu0 %v1515
    %1573 = vmatprep.subr.mxu0 %v1520
    %1574 = vmatpush1.msra.mxu0 %v1519
    %1575 = vmatprep.subr.mxu0 %v1524
    %1576 = vmatpush1.msra.mxu0 %v1523
    %1577 = vmatprep.subr.mxu0 %v1528
    %1578 = vmatpush1.msra.mxu0 %v1527
    %1579 = vmatprep.subr.mxu0 %v1532
    %1580 = vmatpush1.msra.mxu0 %v1531
    %1581 = vmatprep.subr.mxu0 %v1536
    %1582 = vmatpush1.msra.mxu0 %v1535
    %1583 = vmatprep.subr.mxu0 %v1540
    %1584 = vmatpush1.msra.mxu0 %v1539
    %1585 = vmatprep.subr.mxu0 %v1544
    %1586 = vmatpush1.msra.mxu0 %v1543
    %1587 = vmatprep.subr.mxu0 %v1548
    %1588 = vmatpush1.msra.mxu0 %v1547
    %1589 = vmatprep.subr.mxu0 %v1552
    %1590 = vmatpush1.msra.mxu0 %v1551
    %1591 = vmatprep.subr.mxu0 %v1556
    %1592 = vmatpush1.msra.mxu0 %v1555
    %1593 = vmatprep.subr.mxu0 %v1560
    %1594 = vmatpush1.msra.mxu0 %v1559
    %1595 = vmatprep.subr.mxu0 0.0
    %1596 = vmatpush1.msra.mxu0 0.0
    %1597 = vmatprep.subr.mxu0 0.0
    %1598 = vmatpush1.msra.mxu0 0.0
    %1599 = vmatprep.subr.mxu0 0.0
    %1600 = vmatpush1.msra.mxu0 0.0
    %1601 = vmatprep.subr.mxu0 0.0
    %1602 = vmatpush1.msra.mxu0 0.0
    %1603 = vmatprep.subr.mxu0 0.0
    %1604 = vmatpush1.msra.mxu0 0.0
    %1605 = vmatprep.subr.mxu0 0.0
    %1606 = vmatpush1.msra.mxu0 0.0
    %1607 = vmatprep.subr.mxu0 0.0
    %1608 = vmatpush1.msra.mxu0 0.0
    %1609 = vmatprep.subr.mxu0 0.0
    %1610 = vmatpush1.msra.mxu0 0.0
    %1611 = vmatprep.subr.mxu0 0.0
    %1612 = vmatpush1.msra.mxu0 0.0
    %1613 = vmatprep.subr.mxu0 0.0
    %1614 = vmatpush1.msra.mxu0 0.0
    %1615 = vmatprep.subr.mxu0 0.0
    %1616 = vmatpush1.msra.mxu0 0.0
    %1617 = vmatprep.subr.mxu0 0.0
    %1618 = vmatpush1.msra.mxu0 0.0
    %1619 = vmatprep.subr.mxu0 0.0
    %1620 = vmatpush1.msra.mxu0 0.0
    %1621 = vmatprep.subr.mxu0 0.0
    %1622 = vmatpush1.msra.mxu0 0.0
    %1623 = vmatprep.subr.mxu0 0.0
    %1624 = vmatpush1.msra.mxu0 0.0
    %1625 = vmatprep.subr.mxu0 0.0
    %1626 = vmatpush1.msra.mxu0 0.0
    %1627 = vmatprep.mubr.f32.mxu0 0.0
    %1628 = vmatmul.mubr.f32.gmra.mrb[0].mxu0 %v1432
    %v1629 = vpop.f32.mrb[0].mxu0
    %v1630 = vadd.f32 0.0, %v1629
    %v1631 = vpop.f32.mrb[0].mxu0
    %v1632 = vadd.f32 0.0, %v1631
    %1633 = vdwg.mxu0
    %1634 = vmatprep.subr.mxu0 %v1502
    %1635 = vmatpush1.msra.mxu0 %v1501
    %1636 = vmatprep.subr.mxu0 %v1506
    %1637 = vmatpush1.msra.mxu0 %v1505
    %1638 = vmatprep.subr.mxu0 %v1510
    %1639 = vmatpush1.msra.mxu0 %v1509
    %1640 = vmatprep.subr.mxu0 %v1514
    %1641 = vmatpush1.msra.mxu0 %v1513
    %1642 = vmatprep.subr.mxu0 %v1518
    %1643 = vmatpush1.msra.mxu0 %v1517
    %1644 = vmatprep.subr.mxu0 %v1522
    %1645 = vmatpush1.msra.mxu0 %v1521
    %1646 = vmatprep.subr.mxu0 %v1526
    %1647 = vmatpush1.msra.mxu0 %v1525
    %1648 = vmatprep.subr.mxu0 %v1530
    %1649 = vmatpush1.msra.mxu0 %v1529
    %1650 = vmatprep.subr.mxu0 %v1534
    %1651 = vmatpush1.msra.mxu0 %v1533
    %1652 = vmatprep.subr.mxu0 %v1538
    %1653 = vmatpush1.msra.mxu0 %v1537
    %1654 = vmatprep.subr.mxu0 %v1542
    %1655 = vmatpush1.msra.mxu0 %v1541
    %1656 = vmatprep.subr.mxu0 %v1546
    %1657 = vmatpush1.msra.mxu0 %v1545
    %1658 = vmatprep.subr.mxu0 %v1550
    %1659 = vmatpush1.msra.mxu0 %v1549
    %1660 = vmatprep.subr.mxu0 %v1554
    %1661 = vmatpush1.msra.mxu0 %v1553
    %1662 = vmatprep.subr.mxu0 %v1558
    %1663 = vmatpush1.msra.mxu0 %v1557
    %1664 = vmatprep.subr.mxu0 %v1562
    %1665 = vmatpush1.msra.mxu0 %v1561
    %1666 = vmatprep.subr.mxu0 0.0
    %1667 = vmatpush1.msra.mxu0 0.0
    %1668 = vmatprep.subr.mxu0 0.0
    %1669 = vmatpush1.msra.mxu0 0.0
    %1670 = vmatprep.subr.mxu0 0.0
    %1671 = vmatpush1.msra.mxu0 0.0
    %1672 = vmatprep.subr.mxu0 0.0
    %1673 = vmatpush1.msra.mxu0 0.0
    %1674 = vmatprep.subr.mxu0 0.0
    %1675 = vmatpush1.msra.mxu0 0.0
    %1676 = vmatprep.subr.mxu0 0.0
    %1677 = vmatpush1.msra.mxu0 0.0
    %1678 = vmatprep.subr.mxu0 0.0
    %1679 = vmatpush1.msra.mxu0 0.0
    %1680 = vmatprep.subr.mxu0 0.0
    %1681 = vmatpush1.msra.mxu0 0.0
    %1682 = vmatprep.subr.mxu0 0.0
    %1683 = vmatpush1.msra.mxu0 0.0
    %1684 = vmatprep.subr.mxu0 0.0
    %1685 = vmatpush1.msra.mxu0 0.0
    %1686 = vmatprep.subr.mxu0 0.0
    %1687 = vmatpush1.msra.mxu0 0.0
    %1688 = vmatprep.subr.mxu0 0.0
    %1689 = vmatpush1.msra.mxu0 0.0
    %1690 = vmatprep.subr.mxu0 0.0
    %1691 = vmatpush1.msra.mxu0 0.0
    %1692 = vmatprep.subr.mxu0 0.0
    %1693 = vmatpush1.msra.mxu0 0.0
    %1694 = vmatprep.subr.mxu0 0.0
    %1695 = vmatpush1.msra.mxu0 0.0
    %1696 = vmatprep.subr.mxu0 0.0
    %1697 = vmatpush1.msra.mxu0 0.0
    %1698 = vmatprep.mubr.f32.mxu0 0.0
    %1699 = vmatmul.mubr.f32.gmra.mrb[0].mxu0 %v1432
    %v1700 = vpop.f32.mrb[0].mxu0
    %v1701 = vadd.f32 0.0, %v1700
    %v1702 = vpop.f32.mrb[0].mxu0
    %v1703 = vadd.f32 0.0, %v1702
    %1704 = vdwg.mxu0
    %1705 = vmatprep.subr.mxu0 %v1436
    %1706 = vmatpush1.msra.mxu0 %v1435
    %1707 = vmatprep.subr.mxu0 %v1440
    %1708 = vmatpush1.msra.mxu0 %v1439
    %1709 = vmatprep.subr.mxu0 %v1444
    %1710 = vmatpush1.msra.mxu0 %v1443
    %1711 = vmatprep.subr.mxu0 %v1448
    %1712 = vmatpush1.msra.mxu0 %v1447
    %1713 = vmatprep.subr.mxu0 %v1452
    %1714 = vmatpush1.msra.mxu0 %v1451
    %1715 = vmatprep.subr.mxu0 %v1456
    %1716 = vmatpush1.msra.mxu0 %v1455
    %1717 = vmatprep.subr.mxu0 %v1460
    %1718 = vmatpush1.msra.mxu0 %v1459
    %1719 = vmatprep.subr.mxu0 %v1464
    %1720 = vmatpush1.msra.mxu0 %v1463
    %1721 = vmatprep.subr.mxu0 %v1468
    %1722 = vmatpush1.msra.mxu0 %v1467
    %1723 = vmatprep.subr.mxu0 %v1472
    %1724 = vmatpush1.msra.mxu0 %v1471
    %1725 = vmatprep.subr.mxu0 %v1476
    %1726 = vmatpush1.msra.mxu0 %v1475
    %1727 = vmatprep.subr.mxu0 %v1480
    %1728 = vmatpush1.msra.mxu0 %v1479
    %1729 = vmatprep.subr.mxu0 %v1484
    %1730 = vmatpush1.msra.mxu0 %v1483
    %1731 = vmatprep.subr.mxu0 %v1488
    %1732 = vmatpush1.msra.mxu0 %v1487
    %1733 = vmatprep.subr.mxu0 %v1492
    %1734 = vmatpush1.msra.mxu0 %v1491
    %1735 = vmatprep.subr.mxu0 %v1496
    %1736 = vmatpush1.msra.mxu0 %v1495
    %1737 = vmatprep.subr.mxu0 0.0
    %1738 = vmatpush1.msra.mxu0 0.0
    %1739 = vmatprep.subr.mxu0 0.0
    %1740 = vmatpush1.msra.mxu0 0.0
    %1741 = vmatprep.subr.mxu0 0.0
    %1742 = vmatpush1.msra.mxu0 0.0
    %1743 = vmatprep.subr.mxu0 0.0
    %1744 = vmatpush1.msra.mxu0 0.0
    %1745 = vmatprep.subr.mxu0 0.0
    %1746 = vmatpush1.msra.mxu0 0.0
    %1747 = vmatprep.subr.mxu0 0.0
    %1748 = vmatpush1.msra.mxu0 0.0
    %1749 = vmatprep.subr.mxu0 0.0
    %1750 = vmatpush1.msra.mxu0 0.0
    %1751 = vmatprep.subr.mxu0 0.0
    %1752 = vmatpush1.msra.mxu0 0.0
    %1753 = vmatprep.subr.mxu0 0.0
    %1754 = vmatpush1.msra.mxu0 0.0
    %1755 = vmatprep.subr.mxu0 0.0
    %1756 = vmatpush1.msra.mxu0 0.0
    %1757 = vmatprep.subr.mxu0 0.0
    %1758 = vmatpush1.msra.mxu0 0.0
    %1759 = vmatprep.subr.mxu0 0.0
    %1760 = vmatpush1.msra.mxu0 0.0
    %1761 = vmatprep.subr.mxu0 0.0
    %1762 = vmatpush1.msra.mxu0 0.0
    %1763 = vmatprep.subr.mxu0 0.0
    %1764 = vmatpush1.msra.mxu0 0.0
    %1765 = vmatprep.subr.mxu0 0.0
    %1766 = vmatpush1.msra.mxu0 0.0
    %1767 = vmatprep.subr.mxu0 0.0
    %1768 = vmatpush1.msra.mxu0 0.0
    %1769 = vmatprep.mubr.f32.mxu0 0.0
    %1770 = vmatmul.mubr.f32.gmra.mrb[0].mxu0 %v1434
    %v1771 = vpop.f32.mrb[0].mxu0
    %v1772 = vadd.f32 %v1630, %v1771
    %v1773 = vpop.f32.mrb[0].mxu0
    %v1774 = vadd.f32 %v1632, %v1773
    %1775 = vdwg.mxu0
    %1776 = vmatprep.subr.mxu0 %v1438
    %1777 = vmatpush1.msra.mxu0 %v1437
    %1778 = vmatprep.subr.mxu0 %v1442
    %1779 = vmatpush1.msra.mxu0 %v1441
    %1780 = vmatprep.subr.mxu0 %v1446
    %1781 = vmatpush1.msra.mxu0 %v1445
    %1782 = vmatprep.subr.mxu0 %v1450
    %1783 = vmatpush1.msra.mxu0 %v1449
    %1784 = vmatprep.subr.mxu0 %v1454
    %1785 = vmatpush1.msra.mxu0 %v1453
    %1786 = vmatprep.subr.mxu0 %v1458
    %1787 = vmatpush1.msra.mxu0 %v1457
    %1788 = vmatprep.subr.mxu0 %v1462
    %1789 = vmatpush1.msra.mxu0 %v1461
    %1790 = vmatprep.subr.mxu0 %v1466
    %1791 = vmatpush1.msra.mxu0 %v1465
    %1792 = vmatprep.subr.mxu0 %v1470
    %1793 = vmatpush1.msra.mxu0 %v1469
    %1794 = vmatprep.subr.mxu0 %v1474
    %1795 = vmatpush1.msra.mxu0 %v1473
    %1796 = vmatprep.subr.mxu0 %v1478
    %1797 = vmatpush1.msra.mxu0 %v1477
    %1798 = vmatprep.subr.mxu0 %v1482
    %1799 = vmatpush1.msra.mxu0 %v1481
    %1800 = vmatprep.subr.mxu0 %v1486
    %1801 = vmatpush1.msra.mxu0 %v1485
    %1802 = vmatprep.subr.mxu0 %v1490
    %1803 = vmatpush1.msra.mxu0 %v1489
    %1804 = vmatprep.subr.mxu0 %v1494
    %1805 = vmatpush1.msra.mxu0 %v1493
    %1806 = vmatprep.subr.mxu0 %v1498
    %1807 = vmatpush1.msra.mxu0 %v1497
    %1808 = vmatprep.subr.mxu0 0.0
    %1809 = vmatpush1.msra.mxu0 0.0
    %1810 = vmatprep.subr.mxu0 0.0
    %1811 = vmatpush1.msra.mxu0 0.0
    %1812 = vmatprep.subr.mxu0 0.0
    %1813 = vmatpush1.msra.mxu0 0.0
    %1814 = vmatprep.subr.mxu0 0.0
    %1815 = vmatpush1.msra.mxu0 0.0
    %1816 = vmatprep.subr.mxu0 0.0
    %1817 = vmatpush1.msra.mxu0 0.0
    %1818 = vmatprep.subr.mxu0 0.0
    %1819 = vmatpush1.msra.mxu0 0.0
    %1820 = vmatprep.subr.mxu0 0.0
    %1821 = vmatpush1.msra.mxu0 0.0
    %1822 = vmatprep.subr.mxu0 0.0
    %1823 = vmatpush1.msra.mxu0 0.0
    %1824 = vmatprep.subr.mxu0 0.0
    %1825 = vmatpush1.msra.mxu0 0.0
    %1826 = vmatprep.subr.mxu0 0.0
    %1827 = vmatpush1.msra.mxu0 0.0
    %1828 = vmatprep.subr.mxu0 0.0
    %1829 = vmatpush1.msra.mxu0 0.0
    %1830 = vmatprep.subr.mxu0 0.0
    %1831 = vmatpush1.msra.mxu0 0.0
    %1832 = vmatprep.subr.mxu0 0.0
    %1833 = vmatpush1.msra.mxu0 0.0
    %1834 = vmatprep.subr.mxu0 0.0
    %1835 = vmatpush1.msra.mxu0 0.0
    %1836 = vmatprep.subr.mxu0 0.0
    %1837 = vmatpush1.msra.mxu0 0.0
    %1838 = vmatprep.subr.mxu0 0.0
    %1839 = vmatpush1.msra.mxu0 0.0
    %1840 = vmatprep.mubr.f32.mxu0 0.0
    %1841 = vmatmul.mubr.f32.gmra.mrb[0].mxu0 %v1434
    %v1842 = vpop.f32.mrb[0].mxu0
    %v1843 = vadd.f32 %v1701, %v1842
    %v1844 = vpop.f32.mrb[0].mxu0
    %v1845 = vadd.f32 %v1703, %v1844
    %1846 = vdwg.mxu0
    %v1847 = vadd.f32 %v1772, %v504
    %v1848 = vadd.f32 %v1774, %v508
    %v1849 = vadd.f32 %v1843, %v512
    %v1850 = vadd.f32 %v1845, %v516
    %v1851 = vxor.u32 %v1847, 2147483648
    %v1852 = vmul.f32 %v1851, 1.442695
    %v1853 = vpow.pop %v1852
    %v1854 = vadd.f32 %v1853, 1.0
    %v1855 = vrcp.pop %v1854
    %v1856 = vmul.f32 1.0, %v1855
    %v1857 = vxor.u32 %v1848, 2147483648
    %v1858 = vmul.f32 %v1857, 1.442695
    %v1859 = vpow.pop %v1858
    %v1860 = vadd.f32 %v1859, 1.0
    %v1861 = vrcp.pop %v1860
    %v1862 = vmul.f32 1.0, %v1861
    %v1863 = vtanh.pop %v1849
    %v1864 = vxor.u32 %v1850, 2147483648
    %v1865 = vmul.f32 %v1864, 1.442695
    %v1866 = vpow.pop %v1865
    %v1867 = vadd.f32 %v1866, 1.0
    %v1868 = vrcp.pop %v1867
    %v1869 = vmul.f32 1.0, %v1868
    %v1870 = vmul.f32 %v1862, %v1430
    %v1871 = vmul.f32 %v1856, %v1863
    %v1872 = vadd.f32 %v1870, %v1871
    %v1873 = vtanh.pop %v1872
    %v1874 = vmul.f32 %v1869, %v1873
    %1875 = vst [vmem:[#allocation2 + $0x3] sm:$0x1] %v1874
    %v1876 = vld [vmem:[#allocation3 + $0x4] sm:$0x1]
    %v1877 = vld [vmem:[#allocation6] sm:$0xff]
    %v1878 = vld [vmem:[#allocation6 + $0x8] sm:$0xff]
    %v1879 = vld [vmem:[#allocation6 + $0x10] sm:$0xff]
    %v1880 = vld [vmem:[#allocation6 + $0x18] sm:$0xff]
    %v1881 = vld [vmem:[#allocation6 + $0x20] sm:$0xff]
    %v1882 = vld [vmem:[#allocation6 + $0x28] sm:$0xff]
    %v1883 = vld [vmem:[#allocation6 + $0x30] sm:$0xff]
    %v1884 = vld [vmem:[#allocation6 + $0x38] sm:$0xff]
    %v1885 = vld [vmem:[#allocation6 + $0x40] sm:$0xff]
    %v1886 = vld [vmem:[#allocation6 + $0x48] sm:$0xff]
    %v1887 = vld [vmem:[#allocation6 + $0x50] sm:$0xff]
    %v1888 = vld [vmem:[#allocation6 + $0x58] sm:$0xff]
    %v1889 = vld [vmem:[#allocation6 + $0x60] sm:$0xff]
    %v1890 = vld [vmem:[#allocation6 + $0x68] sm:$0xff]
    %v1891 = vld [vmem:[#allocation6 + $0x70] sm:$0xff]
    %v1892 = vld [vmem:[#allocation6 + $0x78] sm:$0xff]
    %v1893 = vld [vmem:[#allocation6 + $0x80] sm:$0xff]
    %v1894 = vld [vmem:[#allocation6 + $0x88] sm:$0xff]
    %v1895 = vld [vmem:[#allocation6 + $0x90] sm:$0xff]
    %v1896 = vld [vmem:[#allocation6 + $0x98] sm:$0xff]
    %v1897 = vld [vmem:[#allocation6 + $0xa0] sm:$0xff]
    %v1898 = vld [vmem:[#allocation6 + $0xa8] sm:$0xff]
    %v1899 = vld [vmem:[#allocation6 + $0xb0] sm:$0xff]
    %v1900 = vld [vmem:[#allocation6 + $0xb8] sm:$0xff]
    %v1901 = vld [vmem:[#allocation6 + $0xc0] sm:$0xff]
    %v1902 = vld [vmem:[#allocation6 + $0xc8] sm:$0xff]
    %v1903 = vld [vmem:[#allocation6 + $0xd0] sm:$0xff]
    %v1904 = vld [vmem:[#allocation6 + $0xd8] sm:$0xff]
    %v1905 = vld [vmem:[#allocation6 + $0xe0] sm:$0xff]
    %v1906 = vld [vmem:[#allocation6 + $0xe8] sm:$0xff]
    %v1907 = vld [vmem:[#allocation6 + $0xf0] sm:$0xff]
    %v1908 = vld [vmem:[#allocation6 + $0xf8] sm:$0xff]
    %v1909 = vld [vmem:[#allocation6 + $0x100] sm:$0xff]
    %v1910 = vld [vmem:[#allocation6 + $0x108] sm:$0xff]
    %v1911 = vld [vmem:[#allocation6 + $0x110] sm:$0xff]
    %v1912 = vld [vmem:[#allocation6 + $0x118] sm:$0xff]
    %v1913 = vld [vmem:[#allocation6 + $0x120] sm:$0xff]
    %v1914 = vld [vmem:[#allocation6 + $0x128] sm:$0xff]
    %v1915 = vld [vmem:[#allocation6 + $0x130] sm:$0xff]
    %v1916 = vld [vmem:[#allocation6 + $0x138] sm:$0xff]
    %v1917 = vld [vmem:[#allocation6 + $0x140] sm:$0xff]
    %v1918 = vld [vmem:[#allocation6 + $0x148] sm:$0xff]
    %v1919 = vld [vmem:[#allocation6 + $0x150] sm:$0xff]
    %v1920 = vld [vmem:[#allocation6 + $0x158] sm:$0xff]
    %v1921 = vld [vmem:[#allocation6 + $0x160] sm:$0xff]
    %v1922 = vld [vmem:[#allocation6 + $0x168] sm:$0xff]
    %v1923 = vld [vmem:[#allocation6 + $0x170] sm:$0xff]
    %v1924 = vld [vmem:[#allocation6 + $0x178] sm:$0xff]
    %v1925 = vld [vmem:[#allocation6 + $0x180] sm:$0xff]
    %v1926 = vld [vmem:[#allocation6 + $0x188] sm:$0xff]
    %v1927 = vld [vmem:[#allocation6 + $0x190] sm:$0xff]
    %v1928 = vld [vmem:[#allocation6 + $0x198] sm:$0xff]
    %v1929 = vld [vmem:[#allocation6 + $0x1a0] sm:$0xff]
    %v1930 = vld [vmem:[#allocation6 + $0x1a8] sm:$0xff]
    %v1931 = vld [vmem:[#allocation6 + $0x1b0] sm:$0xff]
    %v1932 = vld [vmem:[#allocation6 + $0x1b8] sm:$0xff]
    %v1933 = vld [vmem:[#allocation6 + $0x1c0] sm:$0xff]
    %v1934 = vld [vmem:[#allocation6 + $0x1c8] sm:$0xff]
    %v1935 = vld [vmem:[#allocation6 + $0x1d0] sm:$0xff]
    %v1936 = vld [vmem:[#allocation6 + $0x1d8] sm:$0xff]
    %v1937 = vld [vmem:[#allocation6 + $0x1e0] sm:$0xff]
    %v1938 = vld [vmem:[#allocation6 + $0x1e8] sm:$0xff]
    %v1939 = vld [vmem:[#allocation6 + $0x1f0] sm:$0xff]
    %v1940 = vld [vmem:[#allocation6 + $0x1f8] sm:$0xff]
    %v1941 = vld [vmem:[#allocation6 + $0x200] sm:$0xff]
    %v1942 = vld [vmem:[#allocation6 + $0x208] sm:$0xff]
    %v1943 = vld [vmem:[#allocation6 + $0x210] sm:$0xff]
    %v1944 = vld [vmem:[#allocation6 + $0x218] sm:$0xff]
    %v1945 = vld [vmem:[#allocation6 + $0x220] sm:$0xff]
    %v1946 = vld [vmem:[#allocation6 + $0x228] sm:$0xff]
    %v1947 = vld [vmem:[#allocation6 + $0x230] sm:$0xff]
    %v1948 = vld [vmem:[#allocation6 + $0x238] sm:$0xff]
    %v1949 = vld [vmem:[#allocation6 + $0x240] sm:$0xff]
    %v1950 = vld [vmem:[#allocation6 + $0x248] sm:$0xff]
    %v1951 = vld [vmem:[#allocation6 + $0x250] sm:$0xff]
    %v1952 = vld [vmem:[#allocation6 + $0x258] sm:$0xff]
    %v1953 = vld [vmem:[#allocation6 + $0x260] sm:$0xff]
    %v1954 = vld [vmem:[#allocation6 + $0x268] sm:$0xff]
    %v1955 = vld [vmem:[#allocation6 + $0x270] sm:$0xff]
    %v1956 = vld [vmem:[#allocation6 + $0x278] sm:$0xff]
    %v1957 = vld [vmem:[#allocation6 + $0x280] sm:$0xff]
    %v1958 = vld [vmem:[#allocation6 + $0x288] sm:$0xff]
    %v1959 = vld [vmem:[#allocation6 + $0x290] sm:$0xff]
    %v1960 = vld [vmem:[#allocation6 + $0x298] sm:$0xff]
    %v1961 = vld [vmem:[#allocation6 + $0x2a0] sm:$0xff]
    %v1962 = vld [vmem:[#allocation6 + $0x2a8] sm:$0xff]
    %v1963 = vld [vmem:[#allocation6 + $0x2b0] sm:$0xff]
    %v1964 = vld [vmem:[#allocation6 + $0x2b8] sm:$0xff]
    %v1965 = vld [vmem:[#allocation6 + $0x2c0] sm:$0xff]
    %v1966 = vld [vmem:[#allocation6 + $0x2c8] sm:$0xff]
    %v1967 = vld [vmem:[#allocation6 + $0x2d0] sm:$0xff]
    %v1968 = vld [vmem:[#allocation6 + $0x2d8] sm:$0xff]
    %v1969 = vld [vmem:[#allocation6 + $0x2e0] sm:$0xff]
    %v1970 = vld [vmem:[#allocation6 + $0x2e8] sm:$0xff]
    %v1971 = vld [vmem:[#allocation6 + $0x2f0] sm:$0xff]
    %v1972 = vld [vmem:[#allocation6 + $0x2f8] sm:$0xff]
    %v1973 = vld [vmem:[#allocation6 + $0x300] sm:$0xff]
    %v1974 = vld [vmem:[#allocation6 + $0x308] sm:$0xff]
    %v1975 = vld [vmem:[#allocation6 + $0x310] sm:$0xff]
    %v1976 = vld [vmem:[#allocation6 + $0x318] sm:$0xff]
    %v1977 = vld [vmem:[#allocation6 + $0x320] sm:$0xff]
    %v1978 = vld [vmem:[#allocation6 + $0x328] sm:$0xff]
    %v1979 = vld [vmem:[#allocation6 + $0x330] sm:$0xff]
    %v1980 = vld [vmem:[#allocation6 + $0x338] sm:$0xff]
    %v1981 = vld [vmem:[#allocation6 + $0x340] sm:$0xff]
    %v1982 = vld [vmem:[#allocation6 + $0x348] sm:$0xff]
    %v1983 = vld [vmem:[#allocation6 + $0x350] sm:$0xff]
    %v1984 = vld [vmem:[#allocation6 + $0x358] sm:$0xff]
    %v1985 = vld [vmem:[#allocation6 + $0x360] sm:$0xff]
    %v1986 = vld [vmem:[#allocation6 + $0x368] sm:$0xff]
    %v1987 = vld [vmem:[#allocation6 + $0x370] sm:$0xff]
    %v1988 = vld [vmem:[#allocation6 + $0x378] sm:$0xff]
    %v1989 = vld [vmem:[#allocation6 + $0x380] sm:$0xff]
    %v1990 = vld [vmem:[#allocation6 + $0x388] sm:$0xff]
    %v1991 = vld [vmem:[#allocation6 + $0x390] sm:$0xff]
    %v1992 = vld [vmem:[#allocation6 + $0x398] sm:$0xff]
    %v1993 = vld [vmem:[#allocation6 + $0x3a0] sm:$0xff]
    %v1994 = vld [vmem:[#allocation6 + $0x3a8] sm:$0xff]
    %v1995 = vld [vmem:[#allocation6 + $0x3b0] sm:$0xff]
    %v1996 = vld [vmem:[#allocation6 + $0x3b8] sm:$0xff]
    %v1997 = vld [vmem:[#allocation6 + $0x3c0] sm:$0xff]
    %v1998 = vld [vmem:[#allocation6 + $0x3c8] sm:$0xff]
    %v1999 = vld [vmem:[#allocation6 + $0x3d0] sm:$0xff]
    %v2000 = vld [vmem:[#allocation6 + $0x3d8] sm:$0xff]
    %v2001 = vld [vmem:[#allocation6 + $0x3e0] sm:$0xff]
    %v2002 = vld [vmem:[#allocation6 + $0x3e8] sm:$0xff]
    %v2003 = vld [vmem:[#allocation6 + $0x3f0] sm:$0xff]
    %v2004 = vld [vmem:[#allocation6 + $0x3f8] sm:$0xff]
    %2005 = vmatprep.subr.mxu0 %v1942
    %2006 = vmatpush1.msra.mxu0 %v1941
    %2007 = vmatprep.subr.mxu0 %v1946
    %2008 = vmatpush1.msra.mxu0 %v1945
    %2009 = vmatprep.subr.mxu0 %v1950
    %2010 = vmatpush1.msra.mxu0 %v1949
    %2011 = vmatprep.subr.mxu0 %v1954
    %2012 = vmatpush1.msra.mxu0 %v1953
    %2013 = vmatprep.subr.mxu0 %v1958
    %2014 = vmatpush1.msra.mxu0 %v1957
    %2015 = vmatprep.subr.mxu0 %v1962
    %2016 = vmatpush1.msra.mxu0 %v1961
    %2017 = vmatprep.subr.mxu0 %v1966
    %2018 = vmatpush1.msra.mxu0 %v1965
    %2019 = vmatprep.subr.mxu0 %v1970
    %2020 = vmatpush1.msra.mxu0 %v1969
    %2021 = vmatprep.subr.mxu0 %v1974
    %2022 = vmatpush1.msra.mxu0 %v1973
    %2023 = vmatprep.subr.mxu0 %v1978
    %2024 = vmatpush1.msra.mxu0 %v1977
    %2025 = vmatprep.subr.mxu0 %v1982
    %2026 = vmatpush1.msra.mxu0 %v1981
    %2027 = vmatprep.subr.mxu0 %v1986
    %2028 = vmatpush1.msra.mxu0 %v1985
    %2029 = vmatprep.subr.mxu0 %v1990
    %2030 = vmatpush1.msra.mxu0 %v1989
    %2031 = vmatprep.subr.mxu0 %v1994
    %2032 = vmatpush1.msra.mxu0 %v1993
    %2033 = vmatprep.subr.mxu0 %v1998
    %2034 = vmatpush1.msra.mxu0 %v1997
    %2035 = vmatprep.subr.mxu0 %v2002
    %2036 = vmatpush1.msra.mxu0 %v2001
    %2037 = vmatprep.subr.mxu0 0.0
    %2038 = vmatpush1.msra.mxu0 0.0
    %2039 = vmatprep.subr.mxu0 0.0
    %2040 = vmatpush1.msra.mxu0 0.0
    %2041 = vmatprep.subr.mxu0 0.0
    %2042 = vmatpush1.msra.mxu0 0.0
    %2043 = vmatprep.subr.mxu0 0.0
    %2044 = vmatpush1.msra.mxu0 0.0
    %2045 = vmatprep.subr.mxu0 0.0
    %2046 = vmatpush1.msra.mxu0 0.0
    %2047 = vmatprep.subr.mxu0 0.0
    %2048 = vmatpush1.msra.mxu0 0.0
    %2049 = vmatprep.subr.mxu0 0.0
    %2050 = vmatpush1.msra.mxu0 0.0
    %2051 = vmatprep.subr.mxu0 0.0
    %2052 = vmatpush1.msra.mxu0 0.0
    %2053 = vmatprep.subr.mxu0 0.0
    %2054 = vmatpush1.msra.mxu0 0.0
    %2055 = vmatprep.subr.mxu0 0.0
    %2056 = vmatpush1.msra.mxu0 0.0
    %2057 = vmatprep.subr.mxu0 0.0
    %2058 = vmatpush1.msra.mxu0 0.0
    %2059 = vmatprep.subr.mxu0 0.0
    %2060 = vmatpush1.msra.mxu0 0.0
    %2061 = vmatprep.subr.mxu0 0.0
    %2062 = vmatpush1.msra.mxu0 0.0
    %2063 = vmatprep.subr.mxu0 0.0
    %2064 = vmatpush1.msra.mxu0 0.0
    %2065 = vmatprep.subr.mxu0 0.0
    %2066 = vmatpush1.msra.mxu0 0.0
    %2067 = vmatprep.subr.mxu0 0.0
    %2068 = vmatpush1.msra.mxu0 0.0
    %2069 = vmatprep.mubr.f32.mxu0 0.0
    %2070 = vmatmul.mubr.f32.gmra.mrb[0].mxu0 %v1874
    %v2071 = vpop.f32.mrb[0].mxu0
    %v2072 = vadd.f32 0.0, %v2071
    %v2073 = vpop.f32.mrb[0].mxu0
    %v2074 = vadd.f32 0.0, %v2073
    %2075 = vdwg.mxu0
    %2076 = vmatprep.subr.mxu0 %v1944
    %2077 = vmatpush1.msra.mxu0 %v1943
    %2078 = vmatprep.subr.mxu0 %v1948
    %2079 = vmatpush1.msra.mxu0 %v1947
    %2080 = vmatprep.subr.mxu0 %v1952
    %2081 = vmatpush1.msra.mxu0 %v1951
    %2082 = vmatprep.subr.mxu0 %v1956
    %2083 = vmatpush1.msra.mxu0 %v1955
    %2084 = vmatprep.subr.mxu0 %v1960
    %2085 = vmatpush1.msra.mxu0 %v1959
    %2086 = vmatprep.subr.mxu0 %v1964
    %2087 = vmatpush1.msra.mxu0 %v1963
    %2088 = vmatprep.subr.mxu0 %v1968
    %2089 = vmatpush1.msra.mxu0 %v1967
    %2090 = vmatprep.subr.mxu0 %v1972
    %2091 = vmatpush1.msra.mxu0 %v1971
    %2092 = vmatprep.subr.mxu0 %v1976
    %2093 = vmatpush1.msra.mxu0 %v1975
    %2094 = vmatprep.subr.mxu0 %v1980
    %2095 = vmatpush1.msra.mxu0 %v1979
    %2096 = vmatprep.subr.mxu0 %v1984
    %2097 = vmatpush1.msra.mxu0 %v1983
    %2098 = vmatprep.subr.mxu0 %v1988
    %2099 = vmatpush1.msra.mxu0 %v1987
    %2100 = vmatprep.subr.mxu0 %v1992
    %2101 = vmatpush1.msra.mxu0 %v1991
    %2102 = vmatprep.subr.mxu0 %v1996
    %2103 = vmatpush1.msra.mxu0 %v1995
    %2104 = vmatprep.subr.mxu0 %v2000
    %2105 = vmatpush1.msra.mxu0 %v1999
    %2106 = vmatprep.subr.mxu0 %v2004
    %2107 = vmatpush1.msra.mxu0 %v2003
    %2108 = vmatprep.subr.mxu0 0.0
    %2109 = vmatpush1.msra.mxu0 0.0
    %2110 = vmatprep.subr.mxu0 0.0
    %2111 = vmatpush1.msra.mxu0 0.0
    %2112 = vmatprep.subr.mxu0 0.0
    %2113 = vmatpush1.msra.mxu0 0.0
    %2114 = vmatprep.subr.mxu0 0.0
    %2115 = vmatpush1.msra.mxu0 0.0
    %2116 = vmatprep.subr.mxu0 0.0
    %2117 = vmatpush1.msra.mxu0 0.0
    %2118 = vmatprep.subr.mxu0 0.0
    %2119 = vmatpush1.msra.mxu0 0.0
    %2120 = vmatprep.subr.mxu0 0.0
    %2121 = vmatpush1.msra.mxu0 0.0
    %2122 = vmatprep.subr.mxu0 0.0
    %2123 = vmatpush1.msra.mxu0 0.0
    %2124 = vmatprep.subr.mxu0 0.0
    %2125 = vmatpush1.msra.mxu0 0.0
    %2126 = vmatprep.subr.mxu0 0.0
    %2127 = vmatpush1.msra.mxu0 0.0
    %2128 = vmatprep.subr.mxu0 0.0
    %2129 = vmatpush1.msra.mxu0 0.0
    %2130 = vmatprep.subr.mxu0 0.0
    %2131 = vmatpush1.msra.mxu0 0.0
    %2132 = vmatprep.subr.mxu0 0.0
    %2133 = vmatpush1.msra.mxu0 0.0
    %2134 = vmatprep.subr.mxu0 0.0
    %2135 = vmatpush1.msra.mxu0 0.0
    %2136 = vmatprep.subr.mxu0 0.0
    %2137 = vmatpush1.msra.mxu0 0.0
    %2138 = vmatprep.subr.mxu0 0.0
    %2139 = vmatpush1.msra.mxu0 0.0
    %2140 = vmatprep.mubr.f32.mxu0 0.0
    %2141 = vmatmul.mubr.f32.gmra.mrb[0].mxu0 %v1874
    %v2142 = vpop.f32.mrb[0].mxu0
    %v2143 = vadd.f32 0.0, %v2142
    %v2144 = vpop.f32.mrb[0].mxu0
    %v2145 = vadd.f32 0.0, %v2144
    %2146 = vdwg.mxu0
    %2147 = vmatprep.subr.mxu0 %v1878
    %2148 = vmatpush1.msra.mxu0 %v1877
    %2149 = vmatprep.subr.mxu0 %v1882
    %2150 = vmatpush1.msra.mxu0 %v1881
    %2151 = vmatprep.subr.mxu0 %v1886
    %2152 = vmatpush1.msra.mxu0 %v1885
    %2153 = vmatprep.subr.mxu0 %v1890
    %2154 = vmatpush1.msra.mxu0 %v1889
    %2155 = vmatprep.subr.mxu0 %v1894
    %2156 = vmatpush1.msra.mxu0 %v1893
    %2157 = vmatprep.subr.mxu0 %v1898
    %2158 = vmatpush1.msra.mxu0 %v1897
    %2159 = vmatprep.subr.mxu0 %v1902
    %2160 = vmatpush1.msra.mxu0 %v1901
    %2161 = vmatprep.subr.mxu0 %v1906
    %2162 = vmatpush1.msra.mxu0 %v1905
    %2163 = vmatprep.subr.mxu0 %v1910
    %2164 = vmatpush1.msra.mxu0 %v1909
    %2165 = vmatprep.subr.mxu0 %v1914
    %2166 = vmatpush1.msra.mxu0 %v1913
    %2167 = vmatprep.subr.mxu0 %v1918
    %2168 = vmatpush1.msra.mxu0 %v1917
    %2169 = vmatprep.subr.mxu0 %v1922
    %2170 = vmatpush1.msra.mxu0 %v1921
    %2171 = vmatprep.subr.mxu0 %v1926
    %2172 = vmatpush1.msra.mxu0 %v1925
    %2173 = vmatprep.subr.mxu0 %v1930
    %2174 = vmatpush1.msra.mxu0 %v1929
    %2175 = vmatprep.subr.mxu0 %v1934
    %2176 = vmatpush1.msra.mxu0 %v1933
    %2177 = vmatprep.subr.mxu0 %v1938
    %2178 = vmatpush1.msra.mxu0 %v1937
    %2179 = vmatprep.subr.mxu0 0.0
    %2180 = vmatpush1.msra.mxu0 0.0
    %2181 = vmatprep.subr.mxu0 0.0
    %2182 = vmatpush1.msra.mxu0 0.0
    %2183 = vmatprep.subr.mxu0 0.0
    %2184 = vmatpush1.msra.mxu0 0.0
    %2185 = vmatprep.subr.mxu0 0.0
    %2186 = vmatpush1.msra.mxu0 0.0
    %2187 = vmatprep.subr.mxu0 0.0
    %2188 = vmatpush1.msra.mxu0 0.0
    %2189 = vmatprep.subr.mxu0 0.0
    %2190 = vmatpush1.msra.mxu0 0.0
    %2191 = vmatprep.subr.mxu0 0.0
    %2192 = vmatpush1.msra.mxu0 0.0
    %2193 = vmatprep.subr.mxu0 0.0
    %2194 = vmatpush1.msra.mxu0 0.0
    %2195 = vmatprep.subr.mxu0 0.0
    %2196 = vmatpush1.msra.mxu0 0.0
    %2197 = vmatprep.subr.mxu0 0.0
    %2198 = vmatpush1.msra.mxu0 0.0
    %2199 = vmatprep.subr.mxu0 0.0
    %2200 = vmatpush1.msra.mxu0 0.0
    %2201 = vmatprep.subr.mxu0 0.0
    %2202 = vmatpush1.msra.mxu0 0.0
    %2203 = vmatprep.subr.mxu0 0.0
    %2204 = vmatpush1.msra.mxu0 0.0
    %2205 = vmatprep.subr.mxu0 0.0
    %2206 = vmatpush1.msra.mxu0 0.0
    %2207 = vmatprep.subr.mxu0 0.0
    %2208 = vmatpush1.msra.mxu0 0.0
    %2209 = vmatprep.subr.mxu0 0.0
    %2210 = vmatpush1.msra.mxu0 0.0
    %2211 = vmatprep.mubr.f32.mxu0 0.0
    %2212 = vmatmul.mubr.f32.gmra.mrb[0].mxu0 %v1876
    %v2213 = vpop.f32.mrb[0].mxu0
    %v2214 = vadd.f32 %v2072, %v2213
    %v2215 = vpop.f32.mrb[0].mxu0
    %v2216 = vadd.f32 %v2074, %v2215
    %2217 = vdwg.mxu0
    %2218 = vmatprep.subr.mxu0 %v1880
    %2219 = vmatpush1.msra.mxu0 %v1879
    %2220 = vmatprep.subr.mxu0 %v1884
    %2221 = vmatpush1.msra.mxu0 %v1883
    %2222 = vmatprep.subr.mxu0 %v1888
    %2223 = vmatpush1.msra.mxu0 %v1887
    %2224 = vmatprep.subr.mxu0 %v1892
    %2225 = vmatpush1.msra.mxu0 %v1891
    %2226 = vmatprep.subr.mxu0 %v1896
    %2227 = vmatpush1.msra.mxu0 %v1895
    %2228 = vmatprep.subr.mxu0 %v1900
    %2229 = vmatpush1.msra.mxu0 %v1899
    %2230 = vmatprep.subr.mxu0 %v1904
    %2231 = vmatpush1.msra.mxu0 %v1903
    %2232 = vmatprep.subr.mxu0 %v1908
    %2233 = vmatpush1.msra.mxu0 %v1907
    %2234 = vmatprep.subr.mxu0 %v1912
    %2235 = vmatpush1.msra.mxu0 %v1911
    %2236 = vmatprep.subr.mxu0 %v1916
    %2237 = vmatpush1.msra.mxu0 %v1915
    %2238 = vmatprep.subr.mxu0 %v1920
    %2239 = vmatpush1.msra.mxu0 %v1919
    %2240 = vmatprep.subr.mxu0 %v1924
    %2241 = vmatpush1.msra.mxu0 %v1923
    %2242 = vmatprep.subr.mxu0 %v1928
    %2243 = vmatpush1.msra.mxu0 %v1927
    %2244 = vmatprep.subr.mxu0 %v1932
    %2245 = vmatpush1.msra.mxu0 %v1931
    %2246 = vmatprep.subr.mxu0 %v1936
    %2247 = vmatpush1.msra.mxu0 %v1935
    %2248 = vmatprep.subr.mxu0 %v1940
    %2249 = vmatpush1.msra.mxu0 %v1939
    %2250 = vmatprep.subr.mxu0 0.0
    %2251 = vmatpush1.msra.mxu0 0.0
    %2252 = vmatprep.subr.mxu0 0.0
    %2253 = vmatpush1.msra.mxu0 0.0
    %2254 = vmatprep.subr.mxu0 0.0
    %2255 = vmatpush1.msra.mxu0 0.0
    %2256 = vmatprep.subr.mxu0 0.0
    %2257 = vmatpush1.msra.mxu0 0.0
    %2258 = vmatprep.subr.mxu0 0.0
    %2259 = vmatpush1.msra.mxu0 0.0
    %2260 = vmatprep.subr.mxu0 0.0
    %2261 = vmatpush1.msra.mxu0 0.0
    %2262 = vmatprep.subr.mxu0 0.0
    %2263 = vmatpush1.msra.mxu0 0.0
    %2264 = vmatprep.subr.mxu0 0.0
    %2265 = vmatpush1.msra.mxu0 0.0
    %2266 = vmatprep.subr.mxu0 0.0
    %2267 = vmatpush1.msra.mxu0 0.0
    %2268 = vmatprep.subr.mxu0 0.0
    %2269 = vmatpush1.msra.mxu0 0.0
    %2270 = vmatprep.subr.mxu0 0.0
    %2271 = vmatpush1.msra.mxu0 0.0
    %2272 = vmatprep.subr.mxu0 0.0
    %2273 = vmatpush1.msra.mxu0 0.0
    %2274 = vmatprep.subr.mxu0 0.0
    %2275 = vmatpush1.msra.mxu0 0.0
    %2276 = vmatprep.subr.mxu0 0.0
    %2277 = vmatpush1.msra.mxu0 0.0
    %2278 = vmatprep.subr.mxu0 0.0
    %2279 = vmatpush1.msra.mxu0 0.0
    %2280 = vmatprep.subr.mxu0 0.0
    %2281 = vmatpush1.msra.mxu0 0.0
    %2282 = vmatprep.mubr.f32.mxu0 0.0
    %2283 = vmatmul.mubr.f32.gmra.mrb[0].mxu0 %v1876
    %v2284 = vpop.f32.mrb[0].mxu0
    %v2285 = vadd.f32 %v2143, %v2284
    %v2286 = vpop.f32.mrb[0].mxu0
    %v2287 = vadd.f32 %v2145, %v2286
    %2288 = vdwg.mxu0
    %v2289 = vadd.f32 %v2214, %v504
    %v2290 = vadd.f32 %v2216, %v508
    %v2291 = vadd.f32 %v2285, %v512
    %v2292 = vadd.f32 %v2287, %v516
    %v2293 = vxor.u32 %v2289, 2147483648
    %v2294 = vmul.f32 %v2293, 1.442695
    %v2295 = vpow.pop %v2294
    %v2296 = vadd.f32 %v2295, 1.0
    %v2297 = vrcp.pop %v2296
    %v2298 = vmul.f32 1.0, %v2297
    %v2299 = vxor.u32 %v2290, 2147483648
    %v2300 = vmul.f32 %v2299, 1.442695
    %v2301 = vpow.pop %v2300
    %v2302 = vadd.f32 %v2301, 1.0
    %v2303 = vrcp.pop %v2302
    %v2304 = vmul.f32 1.0, %v2303
    %v2305 = vtanh.pop %v2291
    %v2306 = vxor.u32 %v2292, 2147483648
    %v2307 = vmul.f32 %v2306, 1.442695
    %v2308 = vpow.pop %v2307
    %v2309 = vadd.f32 %v2308, 1.0
    %v2310 = vrcp.pop %v2309
    %v2311 = vmul.f32 1.0, %v2310
    %v2312 = vmul.f32 %v2304, %v1872
    %v2313 = vmul.f32 %v2298, %v2305
    %v2314 = vadd.f32 %v2312, %v2313
    %v2315 = vtanh.pop %v2314
    %v2316 = vmul.f32 %v2311, %v2315
    %2317 = vst [vmem:[#allocation2 + $0x4] sm:$0x1] %v2316
    %v2318 = vld [vmem:[#allocation3 + $0x5] sm:$0x1]
    %v2319 = vld [vmem:[#allocation6] sm:$0xff]
    %v2320 = vld [vmem:[#allocation6 + $0x8] sm:$0xff]
    %v2321 = vld [vmem:[#allocation6 + $0x10] sm:$0xff]
    %v2322 = vld [vmem:[#allocation6 + $0x18] sm:$0xff]
    %v2323 = vld [vmem:[#allocation6 + $0x20] sm:$0xff]
    %v2324 = vld [vmem:[#allocation6 + $0x28] sm:$0xff]
    %v2325 = vld [vmem:[#allocation6 + $0x30] sm:$0xff]
    %v2326 = vld [vmem:[#allocation6 + $0x38] sm:$0xff]
    %v2327 = vld [vmem:[#allocation6 + $0x40] sm:$0xff]
    %v2328 = vld [vmem:[#allocation6 + $0x48] sm:$0xff]
    %v2329 = vld [vmem:[#allocation6 + $0x50] sm:$0xff]
    %v2330 = vld [vmem:[#allocation6 + $0x58] sm:$0xff]
    %v2331 = vld [vmem:[#allocation6 + $0x60] sm:$0xff]
    %v2332 = vld [vmem:[#allocation6 + $0x68] sm:$0xff]
    %v2333 = vld [vmem:[#allocation6 + $0x70] sm:$0xff]
    %v2334 = vld [vmem:[#allocation6 + $0x78] sm:$0xff]
    %v2335 = vld [vmem:[#allocation6 + $0x80] sm:$0xff]
    %v2336 = vld [vmem:[#allocation6 + $0x88] sm:$0xff]
    %v2337 = vld [vmem:[#allocation6 + $0x90] sm:$0xff]
    %v2338 = vld [vmem:[#allocation6 + $0x98] sm:$0xff]
    %v2339 = vld [vmem:[#allocation6 + $0xa0] sm:$0xff]
    %v2340 = vld [vmem:[#allocation6 + $0xa8] sm:$0xff]
    %v2341 = vld [vmem:[#allocation6 + $0xb0] sm:$0xff]
    %v2342 = vld [vmem:[#allocation6 + $0xb8] sm:$0xff]
    %v2343 = vld [vmem:[#allocation6 + $0xc0] sm:$0xff]
    %v2344 = vld [vmem:[#allocation6 + $0xc8] sm:$0xff]
    %v2345 = vld [vmem:[#allocation6 + $0xd0] sm:$0xff]
    %v2346 = vld [vmem:[#allocation6 + $0xd8] sm:$0xff]
    %v2347 = vld [vmem:[#allocation6 + $0xe0] sm:$0xff]
    %v2348 = vld [vmem:[#allocation6 + $0xe8] sm:$0xff]
    %v2349 = vld [vmem:[#allocation6 + $0xf0] sm:$0xff]
    %v2350 = vld [vmem:[#allocation6 + $0xf8] sm:$0xff]
    %v2351 = vld [vmem:[#allocation6 + $0x100] sm:$0xff]
    %v2352 = vld [vmem:[#allocation6 + $0x108] sm:$0xff]
    %v2353 = vld [vmem:[#allocation6 + $0x110] sm:$0xff]
    %v2354 = vld [vmem:[#allocation6 + $0x118] sm:$0xff]
    %v2355 = vld [vmem:[#allocation6 + $0x120] sm:$0xff]
    %v2356 = vld [vmem:[#allocation6 + $0x128] sm:$0xff]
    %v2357 = vld [vmem:[#allocation6 + $0x130] sm:$0xff]
    %v2358 = vld [vmem:[#allocation6 + $0x138] sm:$0xff]
    %v2359 = vld [vmem:[#allocation6 + $0x140] sm:$0xff]
    %v2360 = vld [vmem:[#allocation6 + $0x148] sm:$0xff]
    %v2361 = vld [vmem:[#allocation6 + $0x150] sm:$0xff]
    %v2362 = vld [vmem:[#allocation6 + $0x158] sm:$0xff]
    %v2363 = vld [vmem:[#allocation6 + $0x160] sm:$0xff]
    %v2364 = vld [vmem:[#allocation6 + $0x168] sm:$0xff]
    %v2365 = vld [vmem:[#allocation6 + $0x170] sm:$0xff]
    %v2366 = vld [vmem:[#allocation6 + $0x178] sm:$0xff]
    %v2367 = vld [vmem:[#allocation6 + $0x180] sm:$0xff]
    %v2368 = vld [vmem:[#allocation6 + $0x188] sm:$0xff]
    %v2369 = vld [vmem:[#allocation6 + $0x190] sm:$0xff]
    %v2370 = vld [vmem:[#allocation6 + $0x198] sm:$0xff]
    %v2371 = vld [vmem:[#allocation6 + $0x1a0] sm:$0xff]
    %v2372 = vld [vmem:[#allocation6 + $0x1a8] sm:$0xff]
    %v2373 = vld [vmem:[#allocation6 + $0x1b0] sm:$0xff]
    %v2374 = vld [vmem:[#allocation6 + $0x1b8] sm:$0xff]
    %v2375 = vld [vmem:[#allocation6 + $0x1c0] sm:$0xff]
    %v2376 = vld [vmem:[#allocation6 + $0x1c8] sm:$0xff]
    %v2377 = vld [vmem:[#allocation6 + $0x1d0] sm:$0xff]
    %v2378 = vld [vmem:[#allocation6 + $0x1d8] sm:$0xff]
    %v2379 = vld [vmem:[#allocation6 + $0x1e0] sm:$0xff]
    %v2380 = vld [vmem:[#allocation6 + $0x1e8] sm:$0xff]
    %v2381 = vld [vmem:[#allocation6 + $0x1f0] sm:$0xff]
    %v2382 = vld [vmem:[#allocation6 + $0x1f8] sm:$0xff]
    %v2383 = vld [vmem:[#allocation6 + $0x200] sm:$0xff]
    %v2384 = vld [vmem:[#allocation6 + $0x208] sm:$0xff]
    %v2385 = vld [vmem:[#allocation6 + $0x210] sm:$0xff]
    %v2386 = vld [vmem:[#allocation6 + $0x218] sm:$0xff]
    %v2387 = vld [vmem:[#allocation6 + $0x220] sm:$0xff]
    %v2388 = vld [vmem:[#allocation6 + $0x228] sm:$0xff]
    %v2389 = vld [vmem:[#allocation6 + $0x230] sm:$0xff]
    %v2390 = vld [vmem:[#allocation6 + $0x238] sm:$0xff]
    %v2391 = vld [vmem:[#allocation6 + $0x240] sm:$0xff]
    %v2392 = vld [vmem:[#allocation6 + $0x248] sm:$0xff]
    %v2393 = vld [vmem:[#allocation6 + $0x250] sm:$0xff]
    %v2394 = vld [vmem:[#allocation6 + $0x258] sm:$0xff]
    %v2395 = vld [vmem:[#allocation6 + $0x260] sm:$0xff]
    %v2396 = vld [vmem:[#allocation6 + $0x268] sm:$0xff]
    %v2397 = vld [vmem:[#allocation6 + $0x270] sm:$0xff]
    %v2398 = vld [vmem:[#allocation6 + $0x278] sm:$0xff]
    %v2399 = vld [vmem:[#allocation6 + $0x280] sm:$0xff]
    %v2400 = vld [vmem:[#allocation6 + $0x288] sm:$0xff]
    %v2401 = vld [vmem:[#allocation6 + $0x290] sm:$0xff]
    %v2402 = vld [vmem:[#allocation6 + $0x298] sm:$0xff]
    %v2403 = vld [vmem:[#allocation6 + $0x2a0] sm:$0xff]
    %v2404 = vld [vmem:[#allocation6 + $0x2a8] sm:$0xff]
    %v2405 = vld [vmem:[#allocation6 + $0x2b0] sm:$0xff]
    %v2406 = vld [vmem:[#allocation6 + $0x2b8] sm:$0xff]
    %v2407 = vld [vmem:[#allocation6 + $0x2c0] sm:$0xff]
    %v2408 = vld [vmem:[#allocation6 + $0x2c8] sm:$0xff]
    %v2409 = vld [vmem:[#allocation6 + $0x2d0] sm:$0xff]
    %v2410 = vld [vmem:[#allocation6 + $0x2d8] sm:$0xff]
    %v2411 = vld [vmem:[#allocation6 + $0x2e0] sm:$0xff]
    %v2412 = vld [vmem:[#allocation6 + $0x2e8] sm:$0xff]
    %v2413 = vld [vmem:[#allocation6 + $0x2f0] sm:$0xff]
    %v2414 = vld [vmem:[#allocation6 + $0x2f8] sm:$0xff]
    %v2415 = vld [vmem:[#allocation6 + $0x300] sm:$0xff]
    %v2416 = vld [vmem:[#allocation6 + $0x308] sm:$0xff]
    %v2417 = vld [vmem:[#allocation6 + $0x310] sm:$0xff]
    %v2418 = vld [vmem:[#allocation6 + $0x318] sm:$0xff]
    %v2419 = vld [vmem:[#allocation6 + $0x320] sm:$0xff]
    %v2420 = vld [vmem:[#allocation6 + $0x328] sm:$0xff]
    %v2421 = vld [vmem:[#allocation6 + $0x330] sm:$0xff]
    %v2422 = vld [vmem:[#allocation6 + $0x338] sm:$0xff]
    %v2423 = vld [vmem:[#allocation6 + $0x340] sm:$0xff]
    %v2424 = vld [vmem:[#allocation6 + $0x348] sm:$0xff]
    %v2425 = vld [vmem:[#allocation6 + $0x350] sm:$0xff]
    %v2426 = vld [vmem:[#allocation6 + $0x358] sm:$0xff]
    %v2427 = vld [vmem:[#allocation6 + $0x360] sm:$0xff]
    %v2428 = vld [vmem:[#allocation6 + $0x368] sm:$0xff]
    %v2429 = vld [vmem:[#allocation6 + $0x370] sm:$0xff]
    %v2430 = vld [vmem:[#allocation6 + $0x378] sm:$0xff]
    %v2431 = vld [vmem:[#allocation6 + $0x380] sm:$0xff]
    %v2432 = vld [vmem:[#allocation6 + $0x388] sm:$0xff]
    %v2433 = vld [vmem:[#allocation6 + $0x390] sm:$0xff]
    %v2434 = vld [vmem:[#allocation6 + $0x398] sm:$0xff]
    %v2435 = vld [vmem:[#allocation6 + $0x3a0] sm:$0xff]
    %v2436 = vld [vmem:[#allocation6 + $0x3a8] sm:$0xff]
    %v2437 = vld [vmem:[#allocation6 + $0x3b0] sm:$0xff]
    %v2438 = vld [vmem:[#allocation6 + $0x3b8] sm:$0xff]
    %v2439 = vld [vmem:[#allocation6 + $0x3c0] sm:$0xff]
    %v2440 = vld [vmem:[#allocation6 + $0x3c8] sm:$0xff]
    %v2441 = vld [vmem:[#allocation6 + $0x3d0] sm:$0xff]
    %v2442 = vld [vmem:[#allocation6 + $0x3d8] sm:$0xff]
    %v2443 = vld [vmem:[#allocation6 + $0x3e0] sm:$0xff]
    %v2444 = vld [vmem:[#allocation6 + $0x3e8] sm:$0xff]
    %v2445 = vld [vmem:[#allocation6 + $0x3f0] sm:$0xff]
    %v2446 = vld [vmem:[#allocation6 + $0x3f8] sm:$0xff]
    %2447 = vmatprep.subr.mxu0 %v2384
    %2448 = vmatpush1.msra.mxu0 %v2383
    %2449 = vmatprep.subr.mxu0 %v2388
    %2450 = vmatpush1.msra.mxu0 %v2387
    %2451 = vmatprep.subr.mxu0 %v2392
    %2452 = vmatpush1.msra.mxu0 %v2391
    %2453 = vmatprep.subr.mxu0 %v2396
    %2454 = vmatpush1.msra.mxu0 %v2395
    %2455 = vmatprep.subr.mxu0 %v2400
    %2456 = vmatpush1.msra.mxu0 %v2399
    %2457 = vmatprep.subr.mxu0 %v2404
    %2458 = vmatpush1.msra.mxu0 %v2403
    %2459 = vmatprep.subr.mxu0 %v2408
    %2460 = vmatpush1.msra.mxu0 %v2407
    %2461 = vmatprep.subr.mxu0 %v2412
    %2462 = vmatpush1.msra.mxu0 %v2411
    %2463 = vmatprep.subr.mxu0 %v2416
    %2464 = vmatpush1.msra.mxu0 %v2415
    %2465 = vmatprep.subr.mxu0 %v2420
    %2466 = vmatpush1.msra.mxu0 %v2419
    %2467 = vmatprep.subr.mxu0 %v2424
    %2468 = vmatpush1.msra.mxu0 %v2423
    %2469 = vmatprep.subr.mxu0 %v2428
    %2470 = vmatpush1.msra.mxu0 %v2427
    %2471 = vmatprep.subr.mxu0 %v2432
    %2472 = vmatpush1.msra.mxu0 %v2431
    %2473 = vmatprep.subr.mxu0 %v2436
    %2474 = vmatpush1.msra.mxu0 %v2435
    %2475 = vmatprep.subr.mxu0 %v2440
    %2476 = vmatpush1.msra.mxu0 %v2439
    %2477 = vmatprep.subr.mxu0 %v2444
    %2478 = vmatpush1.msra.mxu0 %v2443
    %2479 = vmatprep.subr.mxu0 0.0
    %2480 = vmatpush1.msra.mxu0 0.0
    %2481 = vmatprep.subr.mxu0 0.0
    %2482 = vmatpush1.msra.mxu0 0.0
    %2483 = vmatprep.subr.mxu0 0.0
    %2484 = vmatpush1.msra.mxu0 0.0
    %2485 = vmatprep.subr.mxu0 0.0
    %2486 = vmatpush1.msra.mxu0 0.0
    %2487 = vmatprep.subr.mxu0 0.0
    %2488 = vmatpush1.msra.mxu0 0.0
    %2489 = vmatprep.subr.mxu0 0.0
    %2490 = vmatpush1.msra.mxu0 0.0
    %2491 = vmatprep.subr.mxu0 0.0
    %2492 = vmatpush1.msra.mxu0 0.0
    %2493 = vmatprep.subr.mxu0 0.0
    %2494 = vmatpush1.msra.mxu0 0.0
    %2495 = vmatprep.subr.mxu0 0.0
    %2496 = vmatpush1.msra.mxu0 0.0
    %2497 = vmatprep.subr.mxu0 0.0
    %2498 = vmatpush1.msra.mxu0 0.0
    %2499 = vmatprep.subr.mxu0 0.0
    %2500 = vmatpush1.msra.mxu0 0.0
    %2501 = vmatprep.subr.mxu0 0.0
    %2502 = vmatpush1.msra.mxu0 0.0
    %2503 = vmatprep.subr.mxu0 0.0
    %2504 = vmatpush1.msra.mxu0 0.0
    %2505 = vmatprep.subr.mxu0 0.0
    %2506 = vmatpush1.msra.mxu0 0.0
    %2507 = vmatprep.subr.mxu0 0.0
    %2508 = vmatpush1.msra.mxu0 0.0
    %2509 = vmatprep.subr.mxu0 0.0
    %2510 = vmatpush1.msra.mxu0 0.0
    %2511 = vmatprep.mubr.f32.mxu0 0.0
    %2512 = vmatmul.mubr.f32.gmra.mrb[0].mxu0 %v2316
    %v2513 = vpop.f32.mrb[0].mxu0
    %v2514 = vadd.f32 0.0, %v2513
    %v2515 = vpop.f32.mrb[0].mxu0
    %v2516 = vadd.f32 0.0, %v2515
    %2517 = vdwg.mxu0
    %2518 = vmatprep.subr.mxu0 %v2386
    %2519 = vmatpush1.msra.mxu0 %v2385
    %2520 = vmatprep.subr.mxu0 %v2390
    %2521 = vmatpush1.msra.mxu0 %v2389
    %2522 = vmatprep.subr.mxu0 %v2394
    %2523 = vmatpush1.msra.mxu0 %v2393
    %2524 = vmatprep.subr.mxu0 %v2398
    %2525 = vmatpush1.msra.mxu0 %v2397
    %2526 = vmatprep.subr.mxu0 %v2402
    %2527 = vmatpush1.msra.mxu0 %v2401
    %2528 = vmatprep.subr.mxu0 %v2406
    %2529 = vmatpush1.msra.mxu0 %v2405
    %2530 = vmatprep.subr.mxu0 %v2410
    %2531 = vmatpush1.msra.mxu0 %v2409
    %2532 = vmatprep.subr.mxu0 %v2414
    %2533 = vmatpush1.msra.mxu0 %v2413
    %2534 = vmatprep.subr.mxu0 %v2418
    %2535 = vmatpush1.msra.mxu0 %v2417
    %2536 = vmatprep.subr.mxu0 %v2422
    %2537 = vmatpush1.msra.mxu0 %v2421
    %2538 = vmatprep.subr.mxu0 %v2426
    %2539 = vmatpush1.msra.mxu0 %v2425
    %2540 = vmatprep.subr.mxu0 %v2430
    %2541 = vmatpush1.msra.mxu0 %v2429
    %2542 = vmatprep.subr.mxu0 %v2434
    %2543 = vmatpush1.msra.mxu0 %v2433
    %2544 = vmatprep.subr.mxu0 %v2438
    %2545 = vmatpush1.msra.mxu0 %v2437
    %2546 = vmatprep.subr.mxu0 %v2442
    %2547 = vmatpush1.msra.mxu0 %v2441
    %2548 = vmatprep.subr.mxu0 %v2446
    %2549 = vmatpush1.msra.mxu0 %v2445
    %2550 = vmatprep.subr.mxu0 0.0
    %2551 = vmatpush1.msra.mxu0 0.0
    %2552 = vmatprep.subr.mxu0 0.0
    %2553 = vmatpush1.msra.mxu0 0.0
    %2554 = vmatprep.subr.mxu0 0.0
    %2555 = vmatpush1.msra.mxu0 0.0
    %2556 = vmatprep.subr.mxu0 0.0
    %2557 = vmatpush1.msra.mxu0 0.0
    %2558 = vmatprep.subr.mxu0 0.0
    %2559 = vmatpush1.msra.mxu0 0.0
    %2560 = vmatprep.subr.mxu0 0.0
    %2561 = vmatpush1.msra.mxu0 0.0
    %2562 = vmatprep.subr.mxu0 0.0
    %2563 = vmatpush1.msra.mxu0 0.0
    %2564 = vmatprep.subr.mxu0 0.0
    %2565 = vmatpush1.msra.mxu0 0.0
    %2566 = vmatprep.subr.mxu0 0.0
    %2567 = vmatpush1.msra.mxu0 0.0
    %2568 = vmatprep.subr.mxu0 0.0
    %2569 = vmatpush1.msra.mxu0 0.0
    %2570 = vmatprep.subr.mxu0 0.0
    %2571 = vmatpush1.msra.mxu0 0.0
    %2572 = vmatprep.subr.mxu0 0.0
    %2573 = vmatpush1.msra.mxu0 0.0
    %2574 = vmatprep.subr.mxu0 0.0
    %2575 = vmatpush1.msra.mxu0 0.0
    %2576 = vmatprep.subr.mxu0 0.0
    %2577 = vmatpush1.msra.mxu0 0.0
    %2578 = vmatprep.subr.mxu0 0.0
    %2579 = vmatpush1.msra.mxu0 0.0
    %2580 = vmatprep.subr.mxu0 0.0
    %2581 = vmatpush1.msra.mxu0 0.0
    %2582 = vmatprep.mubr.f32.mxu0 0.0
    %2583 = vmatmul.mubr.f32.gmra.mrb[0].mxu0 %v2316
    %v2584 = vpop.f32.mrb[0].mxu0
    %v2585 = vadd.f32 0.0, %v2584
    %v2586 = vpop.f32.mrb[0].mxu0
    %v2587 = vadd.f32 0.0, %v2586
    %2588 = vdwg.mxu0
    %2589 = vmatprep.subr.mxu0 %v2320
    %2590 = vmatpush1.msra.mxu0 %v2319
    %2591 = vmatprep.subr.mxu0 %v2324
    %2592 = vmatpush1.msra.mxu0 %v2323
    %2593 = vmatprep.subr.mxu0 %v2328
    %2594 = vmatpush1.msra.mxu0 %v2327
    %2595 = vmatprep.subr.mxu0 %v2332
    %2596 = vmatpush1.msra.mxu0 %v2331
    %2597 = vmatprep.subr.mxu0 %v2336
    %2598 = vmatpush1.msra.mxu0 %v2335
    %2599 = vmatprep.subr.mxu0 %v2340
    %2600 = vmatpush1.msra.mxu0 %v2339
    %2601 = vmatprep.subr.mxu0 %v2344
    %2602 = vmatpush1.msra.mxu0 %v2343
    %2603 = vmatprep.subr.mxu0 %v2348
    %2604 = vmatpush1.msra.mxu0 %v2347
    %2605 = vmatprep.subr.mxu0 %v2352
    %2606 = vmatpush1.msra.mxu0 %v2351
    %2607 = vmatprep.subr.mxu0 %v2356
    %2608 = vmatpush1.msra.mxu0 %v2355
    %2609 = vmatprep.subr.mxu0 %v2360
    %2610 = vmatpush1.msra.mxu0 %v2359
    %2611 = vmatprep.subr.mxu0 %v2364
    %2612 = vmatpush1.msra.mxu0 %v2363
    %2613 = vmatprep.subr.mxu0 %v2368
    %2614 = vmatpush1.msra.mxu0 %v2367
    %2615 = vmatprep.subr.mxu0 %v2372
    %2616 = vmatpush1.msra.mxu0 %v2371
    %2617 = vmatprep.subr.mxu0 %v2376
    %2618 = vmatpush1.msra.mxu0 %v2375
    %2619 = vmatprep.subr.mxu0 %v2380
    %2620 = vmatpush1.msra.mxu0 %v2379
    %2621 = vmatprep.subr.mxu0 0.0
    %2622 = vmatpush1.msra.mxu0 0.0
    %2623 = vmatprep.subr.mxu0 0.0
    %2624 = vmatpush1.msra.mxu0 0.0
    %2625 = vmatprep.subr.mxu0 0.0
    %2626 = vmatpush1.msra.mxu0 0.0
    %2627 = vmatprep.subr.mxu0 0.0
    %2628 = vmatpush1.msra.mxu0 0.0
    %2629 = vmatprep.subr.mxu0 0.0
    %2630 = vmatpush1.msra.mxu0 0.0
    %2631 = vmatprep.subr.mxu0 0.0
    %2632 = vmatpush1.msra.mxu0 0.0
    %2633 = vmatprep.subr.mxu0 0.0
    %2634 = vmatpush1.msra.mxu0 0.0
    %2635 = vmatprep.subr.mxu0 0.0
    %2636 = vmatpush1.msra.mxu0 0.0
    %2637 = vmatprep.subr.mxu0 0.0
    %2638 = vmatpush1.msra.mxu0 0.0
    %2639 = vmatprep.subr.mxu0 0.0
    %2640 = vmatpush1.msra.mxu0 0.0
    %2641 = vmatprep.subr.mxu0 0.0
    %2642 = vmatpush1.msra.mxu0 0.0
    %2643 = vmatprep.subr.mxu0 0.0
    %2644 = vmatpush1.msra.mxu0 0.0
    %2645 = vmatprep.subr.mxu0 0.0
    %2646 = vmatpush1.msra.mxu0 0.0
    %2647 = vmatprep.subr.mxu0 0.0
    %2648 = vmatpush1.msra.mxu0 0.0
    %2649 = vmatprep.subr.mxu0 0.0
    %2650 = vmatpush1.msra.mxu0 0.0
    %2651 = vmatprep.subr.mxu0 0.0
    %2652 = vmatpush1.msra.mxu0 0.0
    %2653 = vmatprep.mubr.f32.mxu0 0.0
    %2654 = vmatmul.mubr.f32.gmra.mrb[0].mxu0 %v2318
    %v2655 = vpop.f32.mrb[0].mxu0
    %v2656 = vadd.f32 %v2514, %v2655
    %v2657 = vpop.f32.mrb[0].mxu0
    %v2658 = vadd.f32 %v2516, %v2657
    %2659 = vdwg.mxu0
    %2660 = vmatprep.subr.mxu0 %v2322
    %2661 = vmatpush1.msra.mxu0 %v2321
    %2662 = vmatprep.subr.mxu0 %v2326
    %2663 = vmatpush1.msra.mxu0 %v2325
    %2664 = vmatprep.subr.mxu0 %v2330
    %2665 = vmatpush1.msra.mxu0 %v2329
    %2666 = vmatprep.subr.mxu0 %v2334
    %2667 = vmatpush1.msra.mxu0 %v2333
    %2668 = vmatprep.subr.mxu0 %v2338
    %2669 = vmatpush1.msra.mxu0 %v2337
    %2670 = vmatprep.subr.mxu0 %v2342
    %2671 = vmatpush1.msra.mxu0 %v2341
    %2672 = vmatprep.subr.mxu0 %v2346
    %2673 = vmatpush1.msra.mxu0 %v2345
    %2674 = vmatprep.subr.mxu0 %v2350
    %2675 = vmatpush1.msra.mxu0 %v2349
    %2676 = vmatprep.subr.mxu0 %v2354
    %2677 = vmatpush1.msra.mxu0 %v2353
    %2678 = vmatprep.subr.mxu0 %v2358
    %2679 = vmatpush1.msra.mxu0 %v2357
    %2680 = vmatprep.subr.mxu0 %v2362
    %2681 = vmatpush1.msra.mxu0 %v2361
    %2682 = vmatprep.subr.mxu0 %v2366
    %2683 = vmatpush1.msra.mxu0 %v2365
    %2684 = vmatprep.subr.mxu0 %v2370
    %2685 = vmatpush1.msra.mxu0 %v2369
    %2686 = vmatprep.subr.mxu0 %v2374
    %2687 = vmatpush1.msra.mxu0 %v2373
    %2688 = vmatprep.subr.mxu0 %v2378
    %2689 = vmatpush1.msra.mxu0 %v2377
    %2690 = vmatprep.subr.mxu0 %v2382
    %2691 = vmatpush1.msra.mxu0 %v2381
    %2692 = vmatprep.subr.mxu0 0.0
    %2693 = vmatpush1.msra.mxu0 0.0
    %2694 = vmatprep.subr.mxu0 0.0
    %2695 = vmatpush1.msra.mxu0 0.0
    %2696 = vmatprep.subr.mxu0 0.0
    %2697 = vmatpush1.msra.mxu0 0.0
    %2698 = vmatprep.subr.mxu0 0.0
    %2699 = vmatpush1.msra.mxu0 0.0
    %2700 = vmatprep.subr.mxu0 0.0
    %2701 = vmatpush1.msra.mxu0 0.0
    %2702 = vmatprep.subr.mxu0 0.0
    %2703 = vmatpush1.msra.mxu0 0.0
    %2704 = vmatprep.subr.mxu0 0.0
    %2705 = vmatpush1.msra.mxu0 0.0
    %2706 = vmatprep.subr.mxu0 0.0
    %2707 = vmatpush1.msra.mxu0 0.0
    %2708 = vmatprep.subr.mxu0 0.0
    %2709 = vmatpush1.msra.mxu0 0.0
    %2710 = vmatprep.subr.mxu0 0.0
    %2711 = vmatpush1.msra.mxu0 0.0
    %2712 = vmatprep.subr.mxu0 0.0
    %2713 = vmatpush1.msra.mxu0 0.0
    %2714 = vmatprep.subr.mxu0 0.0
    %2715 = vmatpush1.msra.mxu0 0.0
    %2716 = vmatprep.subr.mxu0 0.0
    %2717 = vmatpush1.msra.mxu0 0.0
    %2718 = vmatprep.subr.mxu0 0.0
    %2719 = vmatpush1.msra.mxu0 0.0
    %2720 = vmatprep.subr.mxu0 0.0
    %2721 = vmatpush1.msra.mxu0 0.0
    %2722 = vmatprep.subr.mxu0 0.0
    %2723 = vmatpush1.msra.mxu0 0.0
    %2724 = vmatprep.mubr.f32.mxu0 0.0
    %2725 = vmatmul.mubr.f32.gmra.mrb[0].mxu0 %v2318
    %v2726 = vpop.f32.mrb[0].mxu0
    %v2727 = vadd.f32 %v2585, %v2726
    %v2728 = vpop.f32.mrb[0].mxu0
    %v2729 = vadd.f32 %v2587, %v2728
    %2730 = vdwg.mxu0
    %v2731 = vadd.f32 %v2656, %v504
    %v2732 = vadd.f32 %v2658, %v508
    %v2733 = vadd.f32 %v2727, %v512
    %v2734 = vadd.f32 %v2729, %v516
    %v2735 = vxor.u32 %v2731, 2147483648
    %v2736 = vmul.f32 %v2735, 1.442695
    %v2737 = vpow.pop %v2736
    %v2738 = vadd.f32 %v2737, 1.0
    %v2739 = vrcp.pop %v2738
    %v2740 = vmul.f32 1.0, %v2739
    %v2741 = vxor.u32 %v2732, 2147483648
    %v2742 = vmul.f32 %v2741, 1.442695
    %v2743 = vpow.pop %v2742
    %v2744 = vadd.f32 %v2743, 1.0
    %v2745 = vrcp.pop %v2744
    %v2746 = vmul.f32 1.0, %v2745
    %v2747 = vtanh.pop %v2733
    %v2748 = vxor.u32 %v2734, 2147483648
    %v2749 = vmul.f32 %v2748, 1.442695
    %v2750 = vpow.pop %v2749
    %v2751 = vadd.f32 %v2750, 1.0
    %v2752 = vrcp.pop %v2751
    %v2753 = vmul.f32 1.0, %v2752
    %v2754 = vmul.f32 %v2746, %v2314
    %v2755 = vmul.f32 %v2740, %v2747
    %v2756 = vadd.f32 %v2754, %v2755
    %v2757 = vtanh.pop %v2756
    %v2758 = vmul.f32 %v2753, %v2757
    %2759 = vst [vmem:[#allocation2 + $0x5] sm:$0x1] %v2758
    %v2760 = vld [vmem:[#allocation3 + $0x6] sm:$0x1]
    %v2761 = vld [vmem:[#allocation6] sm:$0xff]
    %v2762 = vld [vmem:[#allocation6 + $0x8] sm:$0xff]
    %v2763 = vld [vmem:[#allocation6 + $0x10] sm:$0xff]
    %v2764 = vld [vmem:[#allocation6 + $0x18] sm:$0xff]
    %v2765 = vld [vmem:[#allocation6 + $0x20] sm:$0xff]
    %v2766 = vld [vmem:[#allocation6 + $0x28] sm:$0xff]
    %v2767 = vld [vmem:[#allocation6 + $0x30] sm:$0xff]
    %v2768 = vld [vmem:[#allocation6 + $0x38] sm:$0xff]
    %v2769 = vld [vmem:[#allocation6 + $0x40] sm:$0xff]
    %v2770 = vld [vmem:[#allocation6 + $0x48] sm:$0xff]
    %v2771 = vld [vmem:[#allocation6 + $0x50] sm:$0xff]
    %v2772 = vld [vmem:[#allocation6 + $0x58] sm:$0xff]
    %v2773 = vld [vmem:[#allocation6 + $0x60] sm:$0xff]
    %v2774 = vld [vmem:[#allocation6 + $0x68] sm:$0xff]
    %v2775 = vld [vmem:[#allocation6 + $0x70] sm:$0xff]
    %v2776 = vld [vmem:[#allocation6 + $0x78] sm:$0xff]
    %v2777 = vld [vmem:[#allocation6 + $0x80] sm:$0xff]
    %v2778 = vld [vmem:[#allocation6 + $0x88] sm:$0xff]
    %v2779 = vld [vmem:[#allocation6 + $0x90] sm:$0xff]
    %v2780 = vld [vmem:[#allocation6 + $0x98] sm:$0xff]
    %v2781 = vld [vmem:[#allocation6 + $0xa0] sm:$0xff]
    %v2782 = vld [vmem:[#allocation6 + $0xa8] sm:$0xff]
    %v2783 = vld [vmem:[#allocation6 + $0xb0] sm:$0xff]
    %v2784 = vld [vmem:[#allocation6 + $0xb8] sm:$0xff]
    %v2785 = vld [vmem:[#allocation6 + $0xc0] sm:$0xff]
    %v2786 = vld [vmem:[#allocation6 + $0xc8] sm:$0xff]
    %v2787 = vld [vmem:[#allocation6 + $0xd0] sm:$0xff]
    %v2788 = vld [vmem:[#allocation6 + $0xd8] sm:$0xff]
    %v2789 = vld [vmem:[#allocation6 + $0xe0] sm:$0xff]
    %v2790 = vld [vmem:[#allocation6 + $0xe8] sm:$0xff]
    %v2791 = vld [vmem:[#allocation6 + $0xf0] sm:$0xff]
    %v2792 = vld [vmem:[#allocation6 + $0xf8] sm:$0xff]
    %v2793 = vld [vmem:[#allocation6 + $0x100] sm:$0xff]
    %v2794 = vld [vmem:[#allocation6 + $0x108] sm:$0xff]
    %v2795 = vld [vmem:[#allocation6 + $0x110] sm:$0xff]
    %v2796 = vld [vmem:[#allocation6 + $0x118] sm:$0xff]
    %v2797 = vld [vmem:[#allocation6 + $0x120] sm:$0xff]
    %v2798 = vld [vmem:[#allocation6 + $0x128] sm:$0xff]
    %v2799 = vld [vmem:[#allocation6 + $0x130] sm:$0xff]
    %v2800 = vld [vmem:[#allocation6 + $0x138] sm:$0xff]
    %v2801 = vld [vmem:[#allocation6 + $0x140] sm:$0xff]
    %v2802 = vld [vmem:[#allocation6 + $0x148] sm:$0xff]
    %v2803 = vld [vmem:[#allocation6 + $0x150] sm:$0xff]
    %v2804 = vld [vmem:[#allocation6 + $0x158] sm:$0xff]
    %v2805 = vld [vmem:[#allocation6 + $0x160] sm:$0xff]
    %v2806 = vld [vmem:[#allocation6 + $0x168] sm:$0xff]
    %v2807 = vld [vmem:[#allocation6 + $0x170] sm:$0xff]
    %v2808 = vld [vmem:[#allocation6 + $0x178] sm:$0xff]
    %v2809 = vld [vmem:[#allocation6 + $0x180] sm:$0xff]
    %v2810 = vld [vmem:[#allocation6 + $0x188] sm:$0xff]
    %v2811 = vld [vmem:[#allocation6 + $0x190] sm:$0xff]
    %v2812 = vld [vmem:[#allocation6 + $0x198] sm:$0xff]
    %v2813 = vld [vmem:[#allocation6 + $0x1a0] sm:$0xff]
    %v2814 = vld [vmem:[#allocation6 + $0x1a8] sm:$0xff]
    %v2815 = vld [vmem:[#allocation6 + $0x1b0] sm:$0xff]
    %v2816 = vld [vmem:[#allocation6 + $0x1b8] sm:$0xff]
    %v2817 = vld [vmem:[#allocation6 + $0x1c0] sm:$0xff]
    %v2818 = vld [vmem:[#allocation6 + $0x1c8] sm:$0xff]
    %v2819 = vld [vmem:[#allocation6 + $0x1d0] sm:$0xff]
    %v2820 = vld [vmem:[#allocation6 + $0x1d8] sm:$0xff]
    %v2821 = vld [vmem:[#allocation6 + $0x1e0] sm:$0xff]
    %v2822 = vld [vmem:[#allocation6 + $0x1e8] sm:$0xff]
    %v2823 = vld [vmem:[#allocation6 + $0x1f0] sm:$0xff]
    %v2824 = vld [vmem:[#allocation6 + $0x1f8] sm:$0xff]
    %v2825 = vld [vmem:[#allocation6 + $0x200] sm:$0xff]
    %v2826 = vld [vmem:[#allocation6 + $0x208] sm:$0xff]
    %v2827 = vld [vmem:[#allocation6 + $0x210] sm:$0xff]
    %v2828 = vld [vmem:[#allocation6 + $0x218] sm:$0xff]
    %v2829 = vld [vmem:[#allocation6 + $0x220] sm:$0xff]
    %v2830 = vld [vmem:[#allocation6 + $0x228] sm:$0xff]
    %v2831 = vld [vmem:[#allocation6 + $0x230] sm:$0xff]
    %v2832 = vld [vmem:[#allocation6 + $0x238] sm:$0xff]
    %v2833 = vld [vmem:[#allocation6 + $0x240] sm:$0xff]
    %v2834 = vld [vmem:[#allocation6 + $0x248] sm:$0xff]
    %v2835 = vld [vmem:[#allocation6 + $0x250] sm:$0xff]
    %v2836 = vld [vmem:[#allocation6 + $0x258] sm:$0xff]
    %v2837 = vld [vmem:[#allocation6 + $0x260] sm:$0xff]
    %v2838 = vld [vmem:[#allocation6 + $0x268] sm:$0xff]
    %v2839 = vld [vmem:[#allocation6 + $0x270] sm:$0xff]
    %v2840 = vld [vmem:[#allocation6 + $0x278] sm:$0xff]
    %v2841 = vld [vmem:[#allocation6 + $0x280] sm:$0xff]
    %v2842 = vld [vmem:[#allocation6 + $0x288] sm:$0xff]
    %v2843 = vld [vmem:[#allocation6 + $0x290] sm:$0xff]
    %v2844 = vld [vmem:[#allocation6 + $0x298] sm:$0xff]
    %v2845 = vld [vmem:[#allocation6 + $0x2a0] sm:$0xff]
    %v2846 = vld [vmem:[#allocation6 + $0x2a8] sm:$0xff]
    %v2847 = vld [vmem:[#allocation6 + $0x2b0] sm:$0xff]
    %v2848 = vld [vmem:[#allocation6 + $0x2b8] sm:$0xff]
    %v2849 = vld [vmem:[#allocation6 + $0x2c0] sm:$0xff]
    %v2850 = vld [vmem:[#allocation6 + $0x2c8] sm:$0xff]
    %v2851 = vld [vmem:[#allocation6 + $0x2d0] sm:$0xff]
    %v2852 = vld [vmem:[#allocation6 + $0x2d8] sm:$0xff]
    %v2853 = vld [vmem:[#allocation6 + $0x2e0] sm:$0xff]
    %v2854 = vld [vmem:[#allocation6 + $0x2e8] sm:$0xff]
    %v2855 = vld [vmem:[#allocation6 + $0x2f0] sm:$0xff]
    %v2856 = vld [vmem:[#allocation6 + $0x2f8] sm:$0xff]
    %v2857 = vld [vmem:[#allocation6 + $0x300] sm:$0xff]
    %v2858 = vld [vmem:[#allocation6 + $0x308] sm:$0xff]
    %v2859 = vld [vmem:[#allocation6 + $0x310] sm:$0xff]
    %v2860 = vld [vmem:[#allocation6 + $0x318] sm:$0xff]
    %v2861 = vld [vmem:[#allocation6 + $0x320] sm:$0xff]
    %v2862 = vld [vmem:[#allocation6 + $0x328] sm:$0xff]
    %v2863 = vld [vmem:[#allocation6 + $0x330] sm:$0xff]
    %v2864 = vld [vmem:[#allocation6 + $0x338] sm:$0xff]
    %v2865 = vld [vmem:[#allocation6 + $0x340] sm:$0xff]
    %v2866 = vld [vmem:[#allocation6 + $0x348] sm:$0xff]
    %v2867 = vld [vmem:[#allocation6 + $0x350] sm:$0xff]
    %v2868 = vld [vmem:[#allocation6 + $0x358] sm:$0xff]
    %v2869 = vld [vmem:[#allocation6 + $0x360] sm:$0xff]
    %v2870 = vld [vmem:[#allocation6 + $0x368] sm:$0xff]
    %v2871 = vld [vmem:[#allocation6 + $0x370] sm:$0xff]
    %v2872 = vld [vmem:[#allocation6 + $0x378] sm:$0xff]
    %v2873 = vld [vmem:[#allocation6 + $0x380] sm:$0xff]
    %v2874 = vld [vmem:[#allocation6 + $0x388] sm:$0xff]
    %v2875 = vld [vmem:[#allocation6 + $0x390] sm:$0xff]
    %v2876 = vld [vmem:[#allocation6 + $0x398] sm:$0xff]
    %v2877 = vld [vmem:[#allocation6 + $0x3a0] sm:$0xff]
    %v2878 = vld [vmem:[#allocation6 + $0x3a8] sm:$0xff]
    %v2879 = vld [vmem:[#allocation6 + $0x3b0] sm:$0xff]
    %v2880 = vld [vmem:[#allocation6 + $0x3b8] sm:$0xff]
    %v2881 = vld [vmem:[#allocation6 + $0x3c0] sm:$0xff]
    %v2882 = vld [vmem:[#allocation6 + $0x3c8] sm:$0xff]
    %v2883 = vld [vmem:[#allocation6 + $0x3d0] sm:$0xff]
    %v2884 = vld [vmem:[#allocation6 + $0x3d8] sm:$0xff]
    %v2885 = vld [vmem:[#allocation6 + $0x3e0] sm:$0xff]
    %v2886 = vld [vmem:[#allocation6 + $0x3e8] sm:$0xff]
    %v2887 = vld [vmem:[#allocation6 + $0x3f0] sm:$0xff]
    %v2888 = vld [vmem:[#allocation6 + $0x3f8] sm:$0xff]
    %2889 = vmatprep.subr.mxu0 %v2826
    %2890 = vmatpush1.msra.mxu0 %v2825
    %2891 = vmatprep.subr.mxu0 %v2830
    %2892 = vmatpush1.msra.mxu0 %v2829
    %2893 = vmatprep.subr.mxu0 %v2834
    %2894 = vmatpush1.msra.mxu0 %v2833
    %2895 = vmatprep.subr.mxu0 %v2838
    %2896 = vmatpush1.msra.mxu0 %v2837
    %2897 = vmatprep.subr.mxu0 %v2842
    %2898 = vmatpush1.msra.mxu0 %v2841
    %2899 = vmatprep.subr.mxu0 %v2846
    %2900 = vmatpush1.msra.mxu0 %v2845
    %2901 = vmatprep.subr.mxu0 %v2850
    %2902 = vmatpush1.msra.mxu0 %v2849
    %2903 = vmatprep.subr.mxu0 %v2854
    %2904 = vmatpush1.msra.mxu0 %v2853
    %2905 = vmatprep.subr.mxu0 %v2858
    %2906 = vmatpush1.msra.mxu0 %v2857
    %2907 = vmatprep.subr.mxu0 %v2862
    %2908 = vmatpush1.msra.mxu0 %v2861
    %2909 = vmatprep.subr.mxu0 %v2866
    %2910 = vmatpush1.msra.mxu0 %v2865
    %2911 = vmatprep.subr.mxu0 %v2870
    %2912 = vmatpush1.msra.mxu0 %v2869
    %2913 = vmatprep.subr.mxu0 %v2874
    %2914 = vmatpush1.msra.mxu0 %v2873
    %2915 = vmatprep.subr.mxu0 %v2878
    %2916 = vmatpush1.msra.mxu0 %v2877
    %2917 = vmatprep.subr.mxu0 %v2882
    %2918 = vmatpush1.msra.mxu0 %v2881
    %2919 = vmatprep.subr.mxu0 %v2886
    %2920 = vmatpush1.msra.mxu0 %v2885
    %2921 = vmatprep.subr.mxu0 0.0
    %2922 = vmatpush1.msra.mxu0 0.0
    %2923 = vmatprep.subr.mxu0 0.0
    %2924 = vmatpush1.msra.mxu0 0.0
    %2925 = vmatprep.subr.mxu0 0.0
    %2926 = vmatpush1.msra.mxu0 0.0
    %2927 = vmatprep.subr.mxu0 0.0
    %2928 = vmatpush1.msra.mxu0 0.0
    %2929 = vmatprep.subr.mxu0 0.0
    %2930 = vmatpush1.msra.mxu0 0.0
    %2931 = vmatprep.subr.mxu0 0.0
    %2932 = vmatpush1.msra.mxu0 0.0
    %2933 = vmatprep.subr.mxu0 0.0
    %2934 = vmatpush1.msra.mxu0 0.0
    %2935 = vmatprep.subr.mxu0 0.0
    %2936 = vmatpush1.msra.mxu0 0.0
    %2937 = vmatprep.subr.mxu0 0.0
    %2938 = vmatpush1.msra.mxu0 0.0
    %2939 = vmatprep.subr.mxu0 0.0
    %2940 = vmatpush1.msra.mxu0 0.0
    %2941 = vmatprep.subr.mxu0 0.0
    %2942 = vmatpush1.msra.mxu0 0.0
    %2943 = vmatprep.subr.mxu0 0.0
    %2944 = vmatpush1.msra.mxu0 0.0
    %2945 = vmatprep.subr.mxu0 0.0
    %2946 = vmatpush1.msra.mxu0 0.0
    %2947 = vmatprep.subr.mxu0 0.0
    %2948 = vmatpush1.msra.mxu0 0.0
    %2949 = vmatprep.subr.mxu0 0.0
    %2950 = vmatpush1.msra.mxu0 0.0
    %2951 = vmatprep.subr.mxu0 0.0
    %2952 = vmatpush1.msra.mxu0 0.0
    %2953 = vmatprep.mubr.f32.mxu0 0.0
    %2954 = vmatmul.mubr.f32.gmra.mrb[0].mxu0 %v2758
    %v2955 = vpop.f32.mrb[0].mxu0
    %v2956 = vadd.f32 0.0, %v2955
    %v2957 = vpop.f32.mrb[0].mxu0
    %v2958 = vadd.f32 0.0, %v2957
    %2959 = vdwg.mxu0
    %2960 = vmatprep.subr.mxu0 %v2828
    %2961 = vmatpush1.msra.mxu0 %v2827
    %2962 = vmatprep.subr.mxu0 %v2832
    %2963 = vmatpush1.msra.mxu0 %v2831
    %2964 = vmatprep.subr.mxu0 %v2836
    %2965 = vmatpush1.msra.mxu0 %v2835
    %2966 = vmatprep.subr.mxu0 %v2840
    %2967 = vmatpush1.msra.mxu0 %v2839
    %2968 = vmatprep.subr.mxu0 %v2844
    %2969 = vmatpush1.msra.mxu0 %v2843
    %2970 = vmatprep.subr.mxu0 %v2848
    %2971 = vmatpush1.msra.mxu0 %v2847
    %2972 = vmatprep.subr.mxu0 %v2852
    %2973 = vmatpush1.msra.mxu0 %v2851
    %2974 = vmatprep.subr.mxu0 %v2856
    %2975 = vmatpush1.msra.mxu0 %v2855
    %2976 = vmatprep.subr.mxu0 %v2860
    %2977 = vmatpush1.msra.mxu0 %v2859
    %2978 = vmatprep.subr.mxu0 %v2864
    %2979 = vmatpush1.msra.mxu0 %v2863
    %2980 = vmatprep.subr.mxu0 %v2868
    %2981 = vmatpush1.msra.mxu0 %v2867
    %2982 = vmatprep.subr.mxu0 %v2872
    %2983 = vmatpush1.msra.mxu0 %v2871
    %2984 = vmatprep.subr.mxu0 %v2876
    %2985 = vmatpush1.msra.mxu0 %v2875
    %2986 = vmatprep.subr.mxu0 %v2880
    %2987 = vmatpush1.msra.mxu0 %v2879
    %2988 = vmatprep.subr.mxu0 %v2884
    %2989 = vmatpush1.msra.mxu0 %v2883
    %2990 = vmatprep.subr.mxu0 %v2888
    %2991 = vmatpush1.msra.mxu0 %v2887
    %2992 = vmatprep.subr.mxu0 0.0
    %2993 = vmatpush1.msra.mxu0 0.0
    %2994 = vmatprep.subr.mxu0 0.0
    %2995 = vmatpush1.msra.mxu0 0.0
    %2996 = vmatprep.subr.mxu0 0.0
    %2997 = vmatpush1.msra.mxu0 0.0
    %2998 = vmatprep.subr.mxu0 0.0
    %2999 = vmatpush1.msra.mxu0 0.0
    %3000 = vmatprep.subr.mxu0 0.0
    %3001 = vmatpush1.msra.mxu0 0.0
    %3002 = vmatprep.subr.mxu0 0.0
    %3003 = vmatpush1.msra.mxu0 0.0
    %3004 = vmatprep.subr.mxu0 0.0
    %3005 = vmatpush1.msra.mxu0 0.0
    %3006 = vmatprep.subr.mxu0 0.0
    %3007 = vmatpush1.msra.mxu0 0.0
    %3008 = vmatprep.subr.mxu0 0.0
    %3009 = vmatpush1.msra.mxu0 0.0
    %3010 = vmatprep.subr.mxu0 0.0
    %3011 = vmatpush1.msra.mxu0 0.0
    %3012 = vmatprep.subr.mxu0 0.0
    %3013 = vmatpush1.msra.mxu0 0.0
    %3014 = vmatprep.subr.mxu0 0.0
    %3015 = vmatpush1.msra.mxu0 0.0
    %3016 = vmatprep.subr.mxu0 0.0
    %3017 = vmatpush1.msra.mxu0 0.0
    %3018 = vmatprep.subr.mxu0 0.0
    %3019 = vmatpush1.msra.mxu0 0.0
    %3020 = vmatprep.subr.mxu0 0.0
    %3021 = vmatpush1.msra.mxu0 0.0
    %3022 = vmatprep.subr.mxu0 0.0
    %3023 = vmatpush1.msra.mxu0 0.0
    %3024 = vmatprep.mubr.f32.mxu0 0.0
    %3025 = vmatmul.mubr.f32.gmra.mrb[0].mxu0 %v2758
    %v3026 = vpop.f32.mrb[0].mxu0
    %v3027 = vadd.f32 0.0, %v3026
    %v3028 = vpop.f32.mrb[0].mxu0
    %v3029 = vadd.f32 0.0, %v3028
    %3030 = vdwg.mxu0
    %3031 = vmatprep.subr.mxu0 %v2762
    %3032 = vmatpush1.msra.mxu0 %v2761
    %3033 = vmatprep.subr.mxu0 %v2766
    %3034 = vmatpush1.msra.mxu0 %v2765
    %3035 = vmatprep.subr.mxu0 %v2770
    %3036 = vmatpush1.msra.mxu0 %v2769
    %3037 = vmatprep.subr.mxu0 %v2774
    %3038 = vmatpush1.msra.mxu0 %v2773
    %3039 = vmatprep.subr.mxu0 %v2778
    %3040 = vmatpush1.msra.mxu0 %v2777
    %3041 = vmatprep.subr.mxu0 %v2782
    %3042 = vmatpush1.msra.mxu0 %v2781
    %3043 = vmatprep.subr.mxu0 %v2786
    %3044 = vmatpush1.msra.mxu0 %v2785
    %3045 = vmatprep.subr.mxu0 %v2790
    %3046 = vmatpush1.msra.mxu0 %v2789
    %3047 = vmatprep.subr.mxu0 %v2794
    %3048 = vmatpush1.msra.mxu0 %v2793
    %3049 = vmatprep.subr.mxu0 %v2798
    %3050 = vmatpush1.msra.mxu0 %v2797
    %3051 = vmatprep.subr.mxu0 %v2802
    %3052 = vmatpush1.msra.mxu0 %v2801
    %3053 = vmatprep.subr.mxu0 %v2806
    %3054 = vmatpush1.msra.mxu0 %v2805
    %3055 = vmatprep.subr.mxu0 %v2810
    %3056 = vmatpush1.msra.mxu0 %v2809
    %3057 = vmatprep.subr.mxu0 %v2814
    %3058 = vmatpush1.msra.mxu0 %v2813
    %3059 = vmatprep.subr.mxu0 %v2818
    %3060 = vmatpush1.msra.mxu0 %v2817
    %3061 = vmatprep.subr.mxu0 %v2822
    %3062 = vmatpush1.msra.mxu0 %v2821
    %3063 = vmatprep.subr.mxu0 0.0
    %3064 = vmatpush1.msra.mxu0 0.0
    %3065 = vmatprep.subr.mxu0 0.0
    %3066 = vmatpush1.msra.mxu0 0.0
    %3067 = vmatprep.subr.mxu0 0.0
    %3068 = vmatpush1.msra.mxu0 0.0
    %3069 = vmatprep.subr.mxu0 0.0
    %3070 = vmatpush1.msra.mxu0 0.0
    %3071 = vmatprep.subr.mxu0 0.0
    %3072 = vmatpush1.msra.mxu0 0.0
    %3073 = vmatprep.subr.mxu0 0.0
    %3074 = vmatpush1.msra.mxu0 0.0
    %3075 = vmatprep.subr.mxu0 0.0
    %3076 = vmatpush1.msra.mxu0 0.0
    %3077 = vmatprep.subr.mxu0 0.0
    %3078 = vmatpush1.msra.mxu0 0.0
    %3079 = vmatprep.subr.mxu0 0.0
    %3080 = vmatpush1.msra.mxu0 0.0
    %3081 = vmatprep.subr.mxu0 0.0
    %3082 = vmatpush1.msra.mxu0 0.0
    %3083 = vmatprep.subr.mxu0 0.0
    %3084 = vmatpush1.msra.mxu0 0.0
    %3085 = vmatprep.subr.mxu0 0.0
    %3086 = vmatpush1.msra.mxu0 0.0
    %3087 = vmatprep.subr.mxu0 0.0
    %3088 = vmatpush1.msra.mxu0 0.0
    %3089 = vmatprep.subr.mxu0 0.0
    %3090 = vmatpush1.msra.mxu0 0.0
    %3091 = vmatprep.subr.mxu0 0.0
    %3092 = vmatpush1.msra.mxu0 0.0
    %3093 = vmatprep.subr.mxu0 0.0
    %3094 = vmatpush1.msra.mxu0 0.0
    %3095 = vmatprep.mubr.f32.mxu0 0.0
    %3096 = vmatmul.mubr.f32.gmra.mrb[0].mxu0 %v2760
    %v3097 = vpop.f32.mrb[0].mxu0
    %v3098 = vadd.f32 %v2956, %v3097
    %v3099 = vpop.f32.mrb[0].mxu0
    %v3100 = vadd.f32 %v2958, %v3099
    %3101 = vdwg.mxu0
    %3102 = vmatprep.subr.mxu0 %v2764
    %3103 = vmatpush1.msra.mxu0 %v2763
    %3104 = vmatprep.subr.mxu0 %v2768
    %3105 = vmatpush1.msra.mxu0 %v2767
    %3106 = vmatprep.subr.mxu0 %v2772
    %3107 = vmatpush1.msra.mxu0 %v2771
    %3108 = vmatprep.subr.mxu0 %v2776
    %3109 = vmatpush1.msra.mxu0 %v2775
    %3110 = vmatprep.subr.mxu0 %v2780
    %3111 = vmatpush1.msra.mxu0 %v2779
    %3112 = vmatprep.subr.mxu0 %v2784
    %3113 = vmatpush1.msra.mxu0 %v2783
    %3114 = vmatprep.subr.mxu0 %v2788
    %3115 = vmatpush1.msra.mxu0 %v2787
    %3116 = vmatprep.subr.mxu0 %v2792
    %3117 = vmatpush1.msra.mxu0 %v2791
    %3118 = vmatprep.subr.mxu0 %v2796
    %3119 = vmatpush1.msra.mxu0 %v2795
    %3120 = vmatprep.subr.mxu0 %v2800
    %3121 = vmatpush1.msra.mxu0 %v2799
    %3122 = vmatprep.subr.mxu0 %v2804
    %3123 = vmatpush1.msra.mxu0 %v2803
    %3124 = vmatprep.subr.mxu0 %v2808
    %3125 = vmatpush1.msra.mxu0 %v2807
    %3126 = vmatprep.subr.mxu0 %v2812
    %3127 = vmatpush1.msra.mxu0 %v2811
    %3128 = vmatprep.subr.mxu0 %v2816
    %3129 = vmatpush1.msra.mxu0 %v2815
    %3130 = vmatprep.subr.mxu0 %v2820
    %3131 = vmatpush1.msra.mxu0 %v2819
    %3132 = vmatprep.subr.mxu0 %v2824
    %3133 = vmatpush1.msra.mxu0 %v2823
    %3134 = vmatprep.subr.mxu0 0.0
    %3135 = vmatpush1.msra.mxu0 0.0
    %3136 = vmatprep.subr.mxu0 0.0
    %3137 = vmatpush1.msra.mxu0 0.0
    %3138 = vmatprep.subr.mxu0 0.0
    %3139 = vmatpush1.msra.mxu0 0.0
    %3140 = vmatprep.subr.mxu0 0.0
    %3141 = vmatpush1.msra.mxu0 0.0
    %3142 = vmatprep.subr.mxu0 0.0
    %3143 = vmatpush1.msra.mxu0 0.0
    %3144 = vmatprep.subr.mxu0 0.0
    %3145 = vmatpush1.msra.mxu0 0.0
    %3146 = vmatprep.subr.mxu0 0.0
    %3147 = vmatpush1.msra.mxu0 0.0
    %3148 = vmatprep.subr.mxu0 0.0
    %3149 = vmatpush1.msra.mxu0 0.0
    %3150 = vmatprep.subr.mxu0 0.0
    %3151 = vmatpush1.msra.mxu0 0.0
    %3152 = vmatprep.subr.mxu0 0.0
    %3153 = vmatpush1.msra.mxu0 0.0
    %3154 = vmatprep.subr.mxu0 0.0
    %3155 = vmatpush1.msra.mxu0 0.0
    %3156 = vmatprep.subr.mxu0 0.0
    %3157 = vmatpush1.msra.mxu0 0.0
    %3158 = vmatprep.subr.mxu0 0.0
    %3159 = vmatpush1.msra.mxu0 0.0
    %3160 = vmatprep.subr.mxu0 0.0
    %3161 = vmatpush1.msra.mxu0 0.0
    %3162 = vmatprep.subr.mxu0 0.0
    %3163 = vmatpush1.msra.mxu0 0.0
    %3164 = vmatprep.subr.mxu0 0.0
    %3165 = vmatpush1.msra.mxu0 0.0
    %3166 = vmatprep.mubr.f32.mxu0 0.0
    %3167 = vmatmul.mubr.f32.gmra.mrb[0].mxu0 %v2760
    %v3168 = vpop.f32.mrb[0].mxu0
    %v3169 = vadd.f32 %v3027, %v3168
    %v3170 = vpop.f32.mrb[0].mxu0
    %v3171 = vadd.f32 %v3029, %v3170
    %3172 = vdwg.mxu0
    %v3173 = vadd.f32 %v3098, %v504
    %v3174 = vadd.f32 %v3100, %v508
    %v3175 = vadd.f32 %v3169, %v512
    %v3176 = vadd.f32 %v3171, %v516
    %v3177 = vxor.u32 %v3173, 2147483648
    %v3178 = vmul.f32 %v3177, 1.442695
    %v3179 = vpow.pop %v3178
    %v3180 = vadd.f32 %v3179, 1.0
    %v3181 = vrcp.pop %v3180
    %v3182 = vmul.f32 1.0, %v3181
    %v3183 = vxor.u32 %v3174, 2147483648
    %v3184 = vmul.f32 %v3183, 1.442695
    %v3185 = vpow.pop %v3184
    %v3186 = vadd.f32 %v3185, 1.0
    %v3187 = vrcp.pop %v3186
    %v3188 = vmul.f32 1.0, %v3187
    %v3189 = vtanh.pop %v3175
    %v3190 = vxor.u32 %v3176, 2147483648
    %v3191 = vmul.f32 %v3190, 1.442695
    %v3192 = vpow.pop %v3191
    %v3193 = vadd.f32 %v3192, 1.0
    %v3194 = vrcp.pop %v3193
    %v3195 = vmul.f32 1.0, %v3194
    %v3196 = vmul.f32 %v3188, %v2756
    %v3197 = vmul.f32 %v3182, %v3189
    %v3198 = vadd.f32 %v3196, %v3197
    %v3199 = vtanh.pop %v3198
    %v3200 = vmul.f32 %v3195, %v3199
    %3201 = vst [vmem:[#allocation2 + $0x6] sm:$0x1] %v3200
    %v3202 = vld [vmem:[#allocation3 + $0x7] sm:$0x1]
    %v3203 = vld [vmem:[#allocation6] sm:$0xff]
    %v3204 = vld [vmem:[#allocation6 + $0x8] sm:$0xff]
    %v3205 = vld [vmem:[#allocation6 + $0x10] sm:$0xff]
    %v3206 = vld [vmem:[#allocation6 + $0x18] sm:$0xff]
    %v3207 = vld [vmem:[#allocation6 + $0x20] sm:$0xff]
    %v3208 = vld [vmem:[#allocation6 + $0x28] sm:$0xff]
    %v3209 = vld [vmem:[#allocation6 + $0x30] sm:$0xff]
    %v3210 = vld [vmem:[#allocation6 + $0x38] sm:$0xff]
    %v3211 = vld [vmem:[#allocation6 + $0x40] sm:$0xff]
    %v3212 = vld [vmem:[#allocation6 + $0x48] sm:$0xff]
    %v3213 = vld [vmem:[#allocation6 + $0x50] sm:$0xff]
    %v3214 = vld [vmem:[#allocation6 + $0x58] sm:$0xff]
    %v3215 = vld [vmem:[#allocation6 + $0x60] sm:$0xff]
    %v3216 = vld [vmem:[#allocation6 + $0x68] sm:$0xff]
    %v3217 = vld [vmem:[#allocation6 + $0x70] sm:$0xff]
    %v3218 = vld [vmem:[#allocation6 + $0x78] sm:$0xff]
    %v3219 = vld [vmem:[#allocation6 + $0x80] sm:$0xff]
    %v3220 = vld [vmem:[#allocation6 + $0x88] sm:$0xff]
    %v3221 = vld [vmem:[#allocation6 + $0x90] sm:$0xff]
    %v3222 = vld [vmem:[#allocation6 + $0x98] sm:$0xff]
    %v3223 = vld [vmem:[#allocation6 + $0xa0] sm:$0xff]
    %v3224 = vld [vmem:[#allocation6 + $0xa8] sm:$0xff]
    %v3225 = vld [vmem:[#allocation6 + $0xb0] sm:$0xff]
    %v3226 = vld [vmem:[#allocation6 + $0xb8] sm:$0xff]
    %v3227 = vld [vmem:[#allocation6 + $0xc0] sm:$0xff]
    %v3228 = vld [vmem:[#allocation6 + $0xc8] sm:$0xff]
    %v3229 = vld [vmem:[#allocation6 + $0xd0] sm:$0xff]
    %v3230 = vld [vmem:[#allocation6 + $0xd8] sm:$0xff]
    %v3231 = vld [vmem:[#allocation6 + $0xe0] sm:$0xff]
    %v3232 = vld [vmem:[#allocation6 + $0xe8] sm:$0xff]
    %v3233 = vld [vmem:[#allocation6 + $0xf0] sm:$0xff]
    %v3234 = vld [vmem:[#allocation6 + $0xf8] sm:$0xff]
    %v3235 = vld [vmem:[#allocation6 + $0x100] sm:$0xff]
    %v3236 = vld [vmem:[#allocation6 + $0x108] sm:$0xff]
    %v3237 = vld [vmem:[#allocation6 + $0x110] sm:$0xff]
    %v3238 = vld [vmem:[#allocation6 + $0x118] sm:$0xff]
    %v3239 = vld [vmem:[#allocation6 + $0x120] sm:$0xff]
    %v3240 = vld [vmem:[#allocation6 + $0x128] sm:$0xff]
    %v3241 = vld [vmem:[#allocation6 + $0x130] sm:$0xff]
    %v3242 = vld [vmem:[#allocation6 + $0x138] sm:$0xff]
    %v3243 = vld [vmem:[#allocation6 + $0x140] sm:$0xff]
    %v3244 = vld [vmem:[#allocation6 + $0x148] sm:$0xff]
    %v3245 = vld [vmem:[#allocation6 + $0x150] sm:$0xff]
    %v3246 = vld [vmem:[#allocation6 + $0x158] sm:$0xff]
    %v3247 = vld [vmem:[#allocation6 + $0x160] sm:$0xff]
    %v3248 = vld [vmem:[#allocation6 + $0x168] sm:$0xff]
    %v3249 = vld [vmem:[#allocation6 + $0x170] sm:$0xff]
    %v3250 = vld [vmem:[#allocation6 + $0x178] sm:$0xff]
    %v3251 = vld [vmem:[#allocation6 + $0x180] sm:$0xff]
    %v3252 = vld [vmem:[#allocation6 + $0x188] sm:$0xff]
    %v3253 = vld [vmem:[#allocation6 + $0x190] sm:$0xff]
    %v3254 = vld [vmem:[#allocation6 + $0x198] sm:$0xff]
    %v3255 = vld [vmem:[#allocation6 + $0x1a0] sm:$0xff]
    %v3256 = vld [vmem:[#allocation6 + $0x1a8] sm:$0xff]
    %v3257 = vld [vmem:[#allocation6 + $0x1b0] sm:$0xff]
    %v3258 = vld [vmem:[#allocation6 + $0x1b8] sm:$0xff]
    %v3259 = vld [vmem:[#allocation6 + $0x1c0] sm:$0xff]
    %v3260 = vld [vmem:[#allocation6 + $0x1c8] sm:$0xff]
    %v3261 = vld [vmem:[#allocation6 + $0x1d0] sm:$0xff]
    %v3262 = vld [vmem:[#allocation6 + $0x1d8] sm:$0xff]
    %v3263 = vld [vmem:[#allocation6 + $0x1e0] sm:$0xff]
    %v3264 = vld [vmem:[#allocation6 + $0x1e8] sm:$0xff]
    %v3265 = vld [vmem:[#allocation6 + $0x1f0] sm:$0xff]
    %v3266 = vld [vmem:[#allocation6 + $0x1f8] sm:$0xff]
    %v3267 = vld [vmem:[#allocation6 + $0x200] sm:$0xff]
    %v3268 = vld [vmem:[#allocation6 + $0x208] sm:$0xff]
    %v3269 = vld [vmem:[#allocation6 + $0x210] sm:$0xff]
    %v3270 = vld [vmem:[#allocation6 + $0x218] sm:$0xff]
    %v3271 = vld [vmem:[#allocation6 + $0x220] sm:$0xff]
    %v3272 = vld [vmem:[#allocation6 + $0x228] sm:$0xff]
    %v3273 = vld [vmem:[#allocation6 + $0x230] sm:$0xff]
    %v3274 = vld [vmem:[#allocation6 + $0x238] sm:$0xff]
    %v3275 = vld [vmem:[#allocation6 + $0x240] sm:$0xff]
    %v3276 = vld [vmem:[#allocation6 + $0x248] sm:$0xff]
    %v3277 = vld [vmem:[#allocation6 + $0x250] sm:$0xff]
    %v3278 = vld [vmem:[#allocation6 + $0x258] sm:$0xff]
    %v3279 = vld [vmem:[#allocation6 + $0x260] sm:$0xff]
    %v3280 = vld [vmem:[#allocation6 + $0x268] sm:$0xff]
    %v3281 = vld [vmem:[#allocation6 + $0x270] sm:$0xff]
    %v3282 = vld [vmem:[#allocation6 + $0x278] sm:$0xff]
    %v3283 = vld [vmem:[#allocation6 + $0x280] sm:$0xff]
    %v3284 = vld [vmem:[#allocation6 + $0x288] sm:$0xff]
    %v3285 = vld [vmem:[#allocation6 + $0x290] sm:$0xff]
    %v3286 = vld [vmem:[#allocation6 + $0x298] sm:$0xff]
    %v3287 = vld [vmem:[#allocation6 + $0x2a0] sm:$0xff]
    %v3288 = vld [vmem:[#allocation6 + $0x2a8] sm:$0xff]
    %v3289 = vld [vmem:[#allocation6 + $0x2b0] sm:$0xff]
    %v3290 = vld [vmem:[#allocation6 + $0x2b8] sm:$0xff]
    %v3291 = vld [vmem:[#allocation6 + $0x2c0] sm:$0xff]
    %v3292 = vld [vmem:[#allocation6 + $0x2c8] sm:$0xff]
    %v3293 = vld [vmem:[#allocation6 + $0x2d0] sm:$0xff]
    %v3294 = vld [vmem:[#allocation6 + $0x2d8] sm:$0xff]
    %v3295 = vld [vmem:[#allocation6 + $0x2e0] sm:$0xff]
    %v3296 = vld [vmem:[#allocation6 + $0x2e8] sm:$0xff]
    %v3297 = vld [vmem:[#allocation6 + $0x2f0] sm:$0xff]
    %v3298 = vld [vmem:[#allocation6 + $0x2f8] sm:$0xff]
    %v3299 = vld [vmem:[#allocation6 + $0x300] sm:$0xff]
    %v3300 = vld [vmem:[#allocation6 + $0x308] sm:$0xff]
    %v3301 = vld [vmem:[#allocation6 + $0x310] sm:$0xff]
    %v3302 = vld [vmem:[#allocation6 + $0x318] sm:$0xff]
    %v3303 = vld [vmem:[#allocation6 + $0x320] sm:$0xff]
    %v3304 = vld [vmem:[#allocation6 + $0x328] sm:$0xff]
    %v3305 = vld [vmem:[#allocation6 + $0x330] sm:$0xff]
    %v3306 = vld [vmem:[#allocation6 + $0x338] sm:$0xff]
    %v3307 = vld [vmem:[#allocation6 + $0x340] sm:$0xff]
    %v3308 = vld [vmem:[#allocation6 + $0x348] sm:$0xff]
    %v3309 = vld [vmem:[#allocation6 + $0x350] sm:$0xff]
    %v3310 = vld [vmem:[#allocation6 + $0x358] sm:$0xff]
    %v3311 = vld [vmem:[#allocation6 + $0x360] sm:$0xff]
    %v3312 = vld [vmem:[#allocation6 + $0x368] sm:$0xff]
    %v3313 = vld [vmem:[#allocation6 + $0x370] sm:$0xff]
    %v3314 = vld [vmem:[#allocation6 + $0x378] sm:$0xff]
    %v3315 = vld [vmem:[#allocation6 + $0x380] sm:$0xff]
    %v3316 = vld [vmem:[#allocation6 + $0x388] sm:$0xff]
    %v3317 = vld [vmem:[#allocation6 + $0x390] sm:$0xff]
    %v3318 = vld [vmem:[#allocation6 + $0x398] sm:$0xff]
    %v3319 = vld [vmem:[#allocation6 + $0x3a0] sm:$0xff]
    %v3320 = vld [vmem:[#allocation6 + $0x3a8] sm:$0xff]
    %v3321 = vld [vmem:[#allocation6 + $0x3b0] sm:$0xff]
    %v3322 = vld [vmem:[#allocation6 + $0x3b8] sm:$0xff]
    %v3323 = vld [vmem:[#allocation6 + $0x3c0] sm:$0xff]
    %v3324 = vld [vmem:[#allocation6 + $0x3c8] sm:$0xff]
    %v3325 = vld [vmem:[#allocation6 + $0x3d0] sm:$0xff]
    %v3326 = vld [vmem:[#allocation6 + $0x3d8] sm:$0xff]
    %v3327 = vld [vmem:[#allocation6 + $0x3e0] sm:$0xff]
    %v3328 = vld [vmem:[#allocation6 + $0x3e8] sm:$0xff]
    %v3329 = vld [vmem:[#allocation6 + $0x3f0] sm:$0xff]
    %v3330 = vld [vmem:[#allocation6 + $0x3f8] sm:$0xff]
    %3331 = vmatprep.subr.mxu0 %v3268
    %3332 = vmatpush1.msra.mxu0 %v3267
    %3333 = vmatprep.subr.mxu0 %v3272
    %3334 = vmatpush1.msra.mxu0 %v3271
    %3335 = vmatprep.subr.mxu0 %v3276
    %3336 = vmatpush1.msra.mxu0 %v3275
    %3337 = vmatprep.subr.mxu0 %v3280
    %3338 = vmatpush1.msra.mxu0 %v3279
    %3339 = vmatprep.subr.mxu0 %v3284
    %3340 = vmatpush1.msra.mxu0 %v3283
    %3341 = vmatprep.subr.mxu0 %v3288
    %3342 = vmatpush1.msra.mxu0 %v3287
    %3343 = vmatprep.subr.mxu0 %v3292
    %3344 = vmatpush1.msra.mxu0 %v3291
    %3345 = vmatprep.subr.mxu0 %v3296
    %3346 = vmatpush1.msra.mxu0 %v3295
    %3347 = vmatprep.subr.mxu0 %v3300
    %3348 = vmatpush1.msra.mxu0 %v3299
    %3349 = vmatprep.subr.mxu0 %v3304
    %3350 = vmatpush1.msra.mxu0 %v3303
    %3351 = vmatprep.subr.mxu0 %v3308
    %3352 = vmatpush1.msra.mxu0 %v3307
    %3353 = vmatprep.subr.mxu0 %v3312
    %3354 = vmatpush1.msra.mxu0 %v3311
    %3355 = vmatprep.subr.mxu0 %v3316
    %3356 = vmatpush1.msra.mxu0 %v3315
    %3357 = vmatprep.subr.mxu0 %v3320
    %3358 = vmatpush1.msra.mxu0 %v3319
    %3359 = vmatprep.subr.mxu0 %v3324
    %3360 = vmatpush1.msra.mxu0 %v3323
    %3361 = vmatprep.subr.mxu0 %v3328
    %3362 = vmatpush1.msra.mxu0 %v3327
    %3363 = vmatprep.subr.mxu0 0.0
    %3364 = vmatpush1.msra.mxu0 0.0
    %3365 = vmatprep.subr.mxu0 0.0
    %3366 = vmatpush1.msra.mxu0 0.0
    %3367 = vmatprep.subr.mxu0 0.0
    %3368 = vmatpush1.msra.mxu0 0.0
    %3369 = vmatprep.subr.mxu0 0.0
    %3370 = vmatpush1.msra.mxu0 0.0
    %3371 = vmatprep.subr.mxu0 0.0
    %3372 = vmatpush1.msra.mxu0 0.0
    %3373 = vmatprep.subr.mxu0 0.0
    %3374 = vmatpush1.msra.mxu0 0.0
    %3375 = vmatprep.subr.mxu0 0.0
    %3376 = vmatpush1.msra.mxu0 0.0
    %3377 = vmatprep.subr.mxu0 0.0
    %3378 = vmatpush1.msra.mxu0 0.0
    %3379 = vmatprep.subr.mxu0 0.0
    %3380 = vmatpush1.msra.mxu0 0.0
    %3381 = vmatprep.subr.mxu0 0.0
    %3382 = vmatpush1.msra.mxu0 0.0
    %3383 = vmatprep.subr.mxu0 0.0
    %3384 = vmatpush1.msra.mxu0 0.0
    %3385 = vmatprep.subr.mxu0 0.0
    %3386 = vmatpush1.msra.mxu0 0.0
    %3387 = vmatprep.subr.mxu0 0.0
    %3388 = vmatpush1.msra.mxu0 0.0
    %3389 = vmatprep.subr.mxu0 0.0
    %3390 = vmatpush1.msra.mxu0 0.0
    %3391 = vmatprep.subr.mxu0 0.0
    %3392 = vmatpush1.msra.mxu0 0.0
    %3393 = vmatprep.subr.mxu0 0.0
    %3394 = vmatpush1.msra.mxu0 0.0
    %3395 = vmatprep.mubr.f32.mxu0 0.0
    %3396 = vmatmul.mubr.f32.gmra.mrb[0].mxu0 %v3200
    %v3397 = vpop.f32.mrb[0].mxu0
    %v3398 = vadd.f32 0.0, %v3397
    %v3399 = vpop.f32.mrb[0].mxu0
    %v3400 = vadd.f32 0.0, %v3399
    %3401 = vdwg.mxu0
    %3402 = vmatprep.subr.mxu0 %v3270
    %3403 = vmatpush1.msra.mxu0 %v3269
    %3404 = vmatprep.subr.mxu0 %v3274
    %3405 = vmatpush1.msra.mxu0 %v3273
    %3406 = vmatprep.subr.mxu0 %v3278
    %3407 = vmatpush1.msra.mxu0 %v3277
    %3408 = vmatprep.subr.mxu0 %v3282
    %3409 = vmatpush1.msra.mxu0 %v3281
    %3410 = vmatprep.subr.mxu0 %v3286
    %3411 = vmatpush1.msra.mxu0 %v3285
    %3412 = vmatprep.subr.mxu0 %v3290
    %3413 = vmatpush1.msra.mxu0 %v3289
    %3414 = vmatprep.subr.mxu0 %v3294
    %3415 = vmatpush1.msra.mxu0 %v3293
    %3416 = vmatprep.subr.mxu0 %v3298
    %3417 = vmatpush1.msra.mxu0 %v3297
    %3418 = vmatprep.subr.mxu0 %v3302
    %3419 = vmatpush1.msra.mxu0 %v3301
    %3420 = vmatprep.subr.mxu0 %v3306
    %3421 = vmatpush1.msra.mxu0 %v3305
    %3422 = vmatprep.subr.mxu0 %v3310
    %3423 = vmatpush1.msra.mxu0 %v3309
    %3424 = vmatprep.subr.mxu0 %v3314
    %3425 = vmatpush1.msra.mxu0 %v3313
    %3426 = vmatprep.subr.mxu0 %v3318
    %3427 = vmatpush1.msra.mxu0 %v3317
    %3428 = vmatprep.subr.mxu0 %v3322
    %3429 = vmatpush1.msra.mxu0 %v3321
    %3430 = vmatprep.subr.mxu0 %v3326
    %3431 = vmatpush1.msra.mxu0 %v3325
    %3432 = vmatprep.subr.mxu0 %v3330
    %3433 = vmatpush1.msra.mxu0 %v3329
    %3434 = vmatprep.subr.mxu0 0.0
    %3435 = vmatpush1.msra.mxu0 0.0
    %3436 = vmatprep.subr.mxu0 0.0
    %3437 = vmatpush1.msra.mxu0 0.0
    %3438 = vmatprep.subr.mxu0 0.0
    %3439 = vmatpush1.msra.mxu0 0.0
    %3440 = vmatprep.subr.mxu0 0.0
    %3441 = vmatpush1.msra.mxu0 0.0
    %3442 = vmatprep.subr.mxu0 0.0
    %3443 = vmatpush1.msra.mxu0 0.0
    %3444 = vmatprep.subr.mxu0 0.0
    %3445 = vmatpush1.msra.mxu0 0.0
    %3446 = vmatprep.subr.mxu0 0.0
    %3447 = vmatpush1.msra.mxu0 0.0
    %3448 = vmatprep.subr.mxu0 0.0
    %3449 = vmatpush1.msra.mxu0 0.0
    %3450 = vmatprep.subr.mxu0 0.0
    %3451 = vmatpush1.msra.mxu0 0.0
    %3452 = vmatprep.subr.mxu0 0.0
    %3453 = vmatpush1.msra.mxu0 0.0
    %3454 = vmatprep.subr.mxu0 0.0
    %3455 = vmatpush1.msra.mxu0 0.0
    %3456 = vmatprep.subr.mxu0 0.0
    %3457 = vmatpush1.msra.mxu0 0.0
    %3458 = vmatprep.subr.mxu0 0.0
    %3459 = vmatpush1.msra.mxu0 0.0
    %3460 = vmatprep.subr.mxu0 0.0
    %3461 = vmatpush1.msra.mxu0 0.0
    %3462 = vmatprep.subr.mxu0 0.0
    %3463 = vmatpush1.msra.mxu0 0.0
    %3464 = vmatprep.subr.mxu0 0.0
    %3465 = vmatpush1.msra.mxu0 0.0
    %3466 = vmatprep.mubr.f32.mxu0 0.0
    %3467 = vmatmul.mubr.f32.gmra.mrb[0].mxu0 %v3200
    %v3468 = vpop.f32.mrb[0].mxu0
    %v3469 = vadd.f32 0.0, %v3468
    %v3470 = vpop.f32.mrb[0].mxu0
    %v3471 = vadd.f32 0.0, %v3470
    %3472 = vdwg.mxu0
    %3473 = vmatprep.subr.mxu0 %v3204
    %3474 = vmatpush1.msra.mxu0 %v3203
    %3475 = vmatprep.subr.mxu0 %v3208
    %3476 = vmatpush1.msra.mxu0 %v3207
    %3477 = vmatprep.subr.mxu0 %v3212
    %3478 = vmatpush1.msra.mxu0 %v3211
    %3479 = vmatprep.subr.mxu0 %v3216
    %3480 = vmatpush1.msra.mxu0 %v3215
    %3481 = vmatprep.subr.mxu0 %v3220
    %3482 = vmatpush1.msra.mxu0 %v3219
    %3483 = vmatprep.subr.mxu0 %v3224
    %3484 = vmatpush1.msra.mxu0 %v3223
    %3485 = vmatprep.subr.mxu0 %v3228
    %3486 = vmatpush1.msra.mxu0 %v3227
    %3487 = vmatprep.subr.mxu0 %v3232
    %3488 = vmatpush1.msra.mxu0 %v3231
    %3489 = vmatprep.subr.mxu0 %v3236
    %3490 = vmatpush1.msra.mxu0 %v3235
    %3491 = vmatprep.subr.mxu0 %v3240
    %3492 = vmatpush1.msra.mxu0 %v3239
    %3493 = vmatprep.subr.mxu0 %v3244
    %3494 = vmatpush1.msra.mxu0 %v3243
    %3495 = vmatprep.subr.mxu0 %v3248
    %3496 = vmatpush1.msra.mxu0 %v3247
    %3497 = vmatprep.subr.mxu0 %v3252
    %3498 = vmatpush1.msra.mxu0 %v3251
    %3499 = vmatprep.subr.mxu0 %v3256
    %3500 = vmatpush1.msra.mxu0 %v3255
    %3501 = vmatprep.subr.mxu0 %v3260
    %3502 = vmatpush1.msra.mxu0 %v3259
    %3503 = vmatprep.subr.mxu0 %v3264
    %3504 = vmatpush1.msra.mxu0 %v3263
    %3505 = vmatprep.subr.mxu0 0.0
    %3506 = vmatpush1.msra.mxu0 0.0
    %3507 = vmatprep.subr.mxu0 0.0
    %3508 = vmatpush1.msra.mxu0 0.0
    %3509 = vmatprep.subr.mxu0 0.0
    %3510 = vmatpush1.msra.mxu0 0.0
    %3511 = vmatprep.subr.mxu0 0.0
    %3512 = vmatpush1.msra.mxu0 0.0
    %3513 = vmatprep.subr.mxu0 0.0
    %3514 = vmatpush1.msra.mxu0 0.0
    %3515 = vmatprep.subr.mxu0 0.0
    %3516 = vmatpush1.msra.mxu0 0.0
    %3517 = vmatprep.subr.mxu0 0.0
    %3518 = vmatpush1.msra.mxu0 0.0
    %3519 = vmatprep.subr.mxu0 0.0
    %3520 = vmatpush1.msra.mxu0 0.0
    %3521 = vmatprep.subr.mxu0 0.0
    %3522 = vmatpush1.msra.mxu0 0.0
    %3523 = vmatprep.subr.mxu0 0.0
    %3524 = vmatpush1.msra.mxu0 0.0
    %3525 = vmatprep.subr.mxu0 0.0
    %3526 = vmatpush1.msra.mxu0 0.0
    %3527 = vmatprep.subr.mxu0 0.0
    %3528 = vmatpush1.msra.mxu0 0.0
    %3529 = vmatprep.subr.mxu0 0.0
    %3530 = vmatpush1.msra.mxu0 0.0
    %3531 = vmatprep.subr.mxu0 0.0
    %3532 = vmatpush1.msra.mxu0 0.0
    %3533 = vmatprep.subr.mxu0 0.0
    %3534 = vmatpush1.msra.mxu0 0.0
    %3535 = vmatprep.subr.mxu0 0.0
    %3536 = vmatpush1.msra.mxu0 0.0
    %3537 = vmatprep.mubr.f32.mxu0 0.0
    %3538 = vmatmul.mubr.f32.gmra.mrb[0].mxu0 %v3202
    %v3539 = vpop.f32.mrb[0].mxu0
    %v3540 = vadd.f32 %v3398, %v3539
    %v3541 = vpop.f32.mrb[0].mxu0
    %v3542 = vadd.f32 %v3400, %v3541
    %3543 = vdwg.mxu0
    %3544 = vmatprep.subr.mxu0 %v3206
    %3545 = vmatpush1.msra.mxu0 %v3205
    %3546 = vmatprep.subr.mxu0 %v3210
    %3547 = vmatpush1.msra.mxu0 %v3209
    %3548 = vmatprep.subr.mxu0 %v3214
    %3549 = vmatpush1.msra.mxu0 %v3213
    %3550 = vmatprep.subr.mxu0 %v3218
    %3551 = vmatpush1.msra.mxu0 %v3217
    %3552 = vmatprep.subr.mxu0 %v3222
    %3553 = vmatpush1.msra.mxu0 %v3221
    %3554 = vmatprep.subr.mxu0 %v3226
    %3555 = vmatpush1.msra.mxu0 %v3225
    %3556 = vmatprep.subr.mxu0 %v3230
    %3557 = vmatpush1.msra.mxu0 %v3229
    %3558 = vmatprep.subr.mxu0 %v3234
    %3559 = vmatpush1.msra.mxu0 %v3233
    %3560 = vmatprep.subr.mxu0 %v3238
    %3561 = vmatpush1.msra.mxu0 %v3237
    %3562 = vmatprep.subr.mxu0 %v3242
    %3563 = vmatpush1.msra.mxu0 %v3241
    %3564 = vmatprep.subr.mxu0 %v3246
    %3565 = vmatpush1.msra.mxu0 %v3245
    %3566 = vmatprep.subr.mxu0 %v3250
    %3567 = vmatpush1.msra.mxu0 %v3249
    %3568 = vmatprep.subr.mxu0 %v3254
    %3569 = vmatpush1.msra.mxu0 %v3253
    %3570 = vmatprep.subr.mxu0 %v3258
    %3571 = vmatpush1.msra.mxu0 %v3257
    %3572 = vmatprep.subr.mxu0 %v3262
    %3573 = vmatpush1.msra.mxu0 %v3261
    %3574 = vmatprep.subr.mxu0 %v3266
    %3575 = vmatpush1.msra.mxu0 %v3265
    %3576 = vmatprep.subr.mxu0 0.0
    %3577 = vmatpush1.msra.mxu0 0.0
    %3578 = vmatprep.subr.mxu0 0.0
    %3579 = vmatpush1.msra.mxu0 0.0
    %3580 = vmatprep.subr.mxu0 0.0
    %3581 = vmatpush1.msra.mxu0 0.0
    %3582 = vmatprep.subr.mxu0 0.0
    %3583 = vmatpush1.msra.mxu0 0.0
    %3584 = vmatprep.subr.mxu0 0.0
    %3585 = vmatpush1.msra.mxu0 0.0
    %3586 = vmatprep.subr.mxu0 0.0
    %3587 = vmatpush1.msra.mxu0 0.0
    %3588 = vmatprep.subr.mxu0 0.0
    %3589 = vmatpush1.msra.mxu0 0.0
    %3590 = vmatprep.subr.mxu0 0.0
    %3591 = vmatpush1.msra.mxu0 0.0
    %3592 = vmatprep.subr.mxu0 0.0
    %3593 = vmatpush1.msra.mxu0 0.0
    %3594 = vmatprep.subr.mxu0 0.0
    %3595 = vmatpush1.msra.mxu0 0.0
    %3596 = vmatprep.subr.mxu0 0.0
    %3597 = vmatpush1.msra.mxu0 0.0
    %3598 = vmatprep.subr.mxu0 0.0
    %3599 = vmatpush1.msra.mxu0 0.0
    %3600 = vmatprep.subr.mxu0 0.0
    %3601 = vmatpush1.msra.mxu0 0.0
    %3602 = vmatprep.subr.mxu0 0.0
    %3603 = vmatpush1.msra.mxu0 0.0
    %3604 = vmatprep.subr.mxu0 0.0
    %3605 = vmatpush1.msra.mxu0 0.0
    %3606 = vmatprep.subr.mxu0 0.0
    %3607 = vmatpush1.msra.mxu0 0.0
    %3608 = vmatprep.mubr.f32.mxu0 0.0
    %3609 = vmatmul.mubr.f32.gmra.mrb[0].mxu0 %v3202
    %v3610 = vpop.f32.mrb[0].mxu0
    %v3611 = vadd.f32 %v3469, %v3610
    %v3612 = vpop.f32.mrb[0].mxu0
    %v3613 = vadd.f32 %v3471, %v3612
    %3614 = vdwg.mxu0
    %v3615 = vadd.f32 %v3540, %v504
    %v3616 = vadd.f32 %v3542, %v508
    %v3617 = vadd.f32 %v3611, %v512
    %v3618 = vadd.f32 %v3613, %v516
    %v3619 = vxor.u32 %v3615, 2147483648
    %v3620 = vmul.f32 %v3619, 1.442695
    %v3621 = vpow.pop %v3620
    %v3622 = vadd.f32 %v3621, 1.0
    %v3623 = vrcp.pop %v3622
    %v3624 = vmul.f32 1.0, %v3623
    %v3625 = vxor.u32 %v3616, 2147483648
    %v3626 = vmul.f32 %v3625, 1.442695
    %v3627 = vpow.pop %v3626
    %v3628 = vadd.f32 %v3627, 1.0
    %v3629 = vrcp.pop %v3628
    %v3630 = vmul.f32 1.0, %v3629
    %v3631 = vtanh.pop %v3617
    %v3632 = vxor.u32 %v3618, 2147483648
    %v3633 = vmul.f32 %v3632, 1.442695
    %v3634 = vpow.pop %v3633
    %v3635 = vadd.f32 %v3634, 1.0
    %v3636 = vrcp.pop %v3635
    %v3637 = vmul.f32 1.0, %v3636
    %v3638 = vmul.f32 %v3630, %v3198
    %v3639 = vmul.f32 %v3624, %v3631
    %v3640 = vadd.f32 %v3638, %v3639
    %v3641 = vtanh.pop %v3640
    %v3642 = vmul.f32 %v3637, %v3641
    %3643 = vst [vmem:[#allocation2 + $0x7] sm:$0x1] %v3642
    %3644 = vst [vmem:[#allocation12] sm:$0x1] %v3642
    %3645 = vst [vmem:[#allocation12 + $0x1] sm:$0x1] %v3640
    %v3646 = vld [vmem:[#allocation2] sm:$0xff]
    %v3647 = vld [vmem:[#allocation8] sm:$0xff]
    %v3648 = vld [vmem:[#allocation8 + $0x8] sm:$0xff]
    %v3649 = vld [vmem:[#allocation8 + $0x10] sm:$0xff]
    %v3650 = vld [vmem:[#allocation8 + $0x18] sm:$0xff]
    %v3651 = vld [vmem:[#allocation8 + $0x20] sm:$0xff]
    %v3652 = vld [vmem:[#allocation8 + $0x28] sm:$0xff]
    %v3653 = vld [vmem:[#allocation8 + $0x30] sm:$0xff]
    %v3654 = vld [vmem:[#allocation8 + $0x38] sm:$0xff]
    %v3655 = vld [vmem:[#allocation8 + $0x40] sm:$0xff]
    %v3656 = vld [vmem:[#allocation8 + $0x48] sm:$0xff]
    %v3657 = vld [vmem:[#allocation8 + $0x50] sm:$0xff]
    %v3658 = vld [vmem:[#allocation8 + $0x58] sm:$0xff]
    %v3659 = vld [vmem:[#allocation8 + $0x60] sm:$0xff]
    %v3660 = vld [vmem:[#allocation8 + $0x68] sm:$0xff]
    %v3661 = vld [vmem:[#allocation8 + $0x70] sm:$0xff]
    %v3662 = vld [vmem:[#allocation8 + $0x78] sm:$0xff]
    %v3663 = vld [vmem:[%s4 + $0x4] sm:$0x1]
    %v3665 = vlaneseq
    %v3666 = vshrl.u32 %v3665, 7
    %v3667 = vsub.s32 0, %v3666
    %v3668 = vrot.slane %v3663, %v3667
    %3670 = vmatprep.subr.mxu0 0.0
    %3671 = vmatpush1.msra.mxu0 %v3647
    %3672 = vmatprep.subr.mxu0 0.0
    %3673 = vmatpush1.msra.mxu0 %v3648
    %3674 = vmatprep.subr.mxu0 0.0
    %3675 = vmatpush1.msra.mxu0 %v3649
    %3676 = vmatprep.subr.mxu0 0.0
    %3677 = vmatpush1.msra.mxu0 %v3650
    %3678 = vmatprep.subr.mxu0 0.0
    %3679 = vmatpush1.msra.mxu0 %v3651
    %3680 = vmatprep.subr.mxu0 0.0
    %3681 = vmatpush1.msra.mxu0 %v3652
    %3682 = vmatprep.subr.mxu0 0.0
    %3683 = vmatpush1.msra.mxu0 %v3653
    %3684 = vmatprep.subr.mxu0 0.0
    %3685 = vmatpush1.msra.mxu0 %v3654
    %3686 = vmatprep.subr.mxu0 0.0
    %3687 = vmatpush1.msra.mxu0 %v3655
    %3688 = vmatprep.subr.mxu0 0.0
    %3689 = vmatpush1.msra.mxu0 %v3656
    %3690 = vmatprep.subr.mxu0 0.0
    %3691 = vmatpush1.msra.mxu0 %v3657
    %3692 = vmatprep.subr.mxu0 0.0
    %3693 = vmatpush1.msra.mxu0 %v3658
    %3694 = vmatprep.subr.mxu0 0.0
    %3695 = vmatpush1.msra.mxu0 %v3659
    %3696 = vmatprep.subr.mxu0 0.0
    %3697 = vmatpush1.msra.mxu0 %v3660
    %3698 = vmatprep.subr.mxu0 0.0
    %3699 = vmatpush1.msra.mxu0 %v3661
    %3700 = vmatprep.subr.mxu0 0.0
    %3701 = vmatpush1.msra.mxu0 %v3662
    %3702 = vmatprep.subr.mxu0 0.0
    %3703 = vmatpush1.msra.mxu0 0.0
    %3704 = vmatprep.subr.mxu0 0.0
    %3705 = vmatpush1.msra.mxu0 0.0
    %3706 = vmatprep.subr.mxu0 0.0
    %3707 = vmatpush1.msra.mxu0 0.0
    %3708 = vmatprep.subr.mxu0 0.0
    %3709 = vmatpush1.msra.mxu0 0.0
    %3710 = vmatprep.subr.mxu0 0.0
    %3711 = vmatpush1.msra.mxu0 0.0
    %3712 = vmatprep.subr.mxu0 0.0
    %3713 = vmatpush1.msra.mxu0 0.0
    %3714 = vmatprep.subr.mxu0 0.0
    %3715 = vmatpush1.msra.mxu0 0.0
    %3716 = vmatprep.subr.mxu0 0.0
    %3717 = vmatpush1.msra.mxu0 0.0
    %3718 = vmatprep.subr.mxu0 0.0
    %3719 = vmatpush1.msra.mxu0 0.0
    %3720 = vmatprep.subr.mxu0 0.0
    %3721 = vmatpush1.msra.mxu0 0.0
    %3722 = vmatprep.subr.mxu0 0.0
    %3723 = vmatpush1.msra.mxu0 0.0
    %3724 = vmatprep.subr.mxu0 0.0
    %3725 = vmatpush1.msra.mxu0 0.0
    %3726 = vmatprep.subr.mxu0 0.0
    %3727 = vmatpush1.msra.mxu0 0.0
    %3728 = vmatprep.subr.mxu0 0.0
    %3729 = vmatpush1.msra.mxu0 0.0
    %3730 = vmatprep.subr.mxu0 0.0
    %3731 = vmatpush1.msra.mxu0 0.0
    %3732 = vmatprep.subr.mxu0 0.0
    %3733 = vmatpush1.msra.mxu0 0.0
    %3734 = vmatprep.mubr.f32.mxu0 0.0
    %3735 = vmatmul.mubr.f32.gmra.mrb[0].mxu0 %v3646
    %v3736 = vpop.f32.mrb[0].mxu0
    %v3737 = vadd.f32 %v3668, %v3736
    %v3738 = vpop.f32.mrb[0].mxu0
    %3739 = vdwg.mxu0
    %v3740 = vld [vmem:[%s6] sm:$0xff]
    %vm3741 = vcmask 64512
    %v3743 = vsel %vm3741, %v3740, 0
    %3745 = vmatprep.subr.mxu0 0.0
    %3746 = vmatpush1.msra.mxu0 %v3737
    %3747 = vmatprep.subr.mxu0 0.0
    %3748 = vmatpush1.msra.mxu0 0.0
    %3749 = vmatprep.subr.mxu0 0.0
    %3750 = vmatpush1.msra.mxu0 0.0
    %3751 = vmatprep.subr.mxu0 0.0
    %3752 = vmatpush1.msra.mxu0 0.0
    %3753 = vmatprep.subr.mxu0 0.0
    %3754 = vmatpush1.msra.mxu0 0.0
    %3755 = vmatprep.subr.mxu0 0.0
    %3756 = vmatpush1.msra.mxu0 0.0
    %3757 = vmatprep.subr.mxu0 0.0
    %3758 = vmatpush1.msra.mxu0 0.0
    %3759 = vmatprep.subr.mxu0 0.0
    %3760 = vmatpush1.msra.mxu0 0.0
    %3761 = vmatprep.subr.mxu0 0.0
    %3762 = vmatpush1.msra.mxu0 0.0
    %3763 = vmatprep.subr.mxu0 0.0
    %3764 = vmatpush1.msra.mxu0 0.0
    %3765 = vmatprep.subr.mxu0 0.0
    %3766 = vmatpush1.msra.mxu0 0.0
    %3767 = vmatprep.subr.mxu0 0.0
    %3768 = vmatpush1.msra.mxu0 0.0
    %3769 = vmatprep.subr.mxu0 0.0
    %3770 = vmatpush1.msra.mxu0 0.0
    %3771 = vmatprep.subr.mxu0 0.0
    %3772 = vmatpush1.msra.mxu0 0.0
    %3773 = vmatprep.subr.mxu0 0.0
    %3774 = vmatpush1.msra.mxu0 0.0
    %3775 = vmatprep.subr.mxu0 0.0
    %3776 = vmatpush1.msra.mxu0 0.0
    %3777 = vmatprep.subr.mxu0 0.0
    %3778 = vmatpush1.msra.mxu0 0.0
    %3779 = vmatprep.subr.mxu0 0.0
    %3780 = vmatpush1.msra.mxu0 0.0
    %3781 = vmatprep.subr.mxu0 0.0
    %3782 = vmatpush1.msra.mxu0 0.0
    %3783 = vmatprep.subr.mxu0 0.0
    %3784 = vmatpush1.msra.mxu0 0.0
    %3785 = vmatprep.subr.mxu0 0.0
    %3786 = vmatpush1.msra.mxu0 0.0
    %3787 = vmatprep.subr.mxu0 0.0
    %3788 = vmatpush1.msra.mxu0 0.0
    %3789 = vmatprep.subr.mxu0 0.0
    %3790 = vmatpush1.msra.mxu0 0.0
    %3791 = vmatprep.subr.mxu0 0.0
    %3792 = vmatpush1.msra.mxu0 0.0
    %3793 = vmatprep.subr.mxu0 0.0
    %3794 = vmatpush1.msra.mxu0 0.0
    %3795 = vmatprep.subr.mxu0 0.0
    %3796 = vmatpush1.msra.mxu0 0.0
    %3797 = vmatprep.subr.mxu0 0.0
    %3798 = vmatpush1.msra.mxu0 0.0
    %3799 = vmatprep.subr.mxu0 0.0
    %3800 = vmatpush1.msra.mxu0 0.0
    %3801 = vmatprep.subr.mxu0 0.0
    %3802 = vmatpush1.msra.mxu0 0.0
    %3803 = vmatprep.subr.mxu0 0.0
    %3804 = vmatpush1.msra.mxu0 0.0
    %3805 = vmatprep.subr.mxu0 0.0
    %3806 = vmatpush1.msra.mxu0 0.0
    %3807 = vmatprep.subr.mxu0 0.0
    %3808 = vmatpush1.msra.mxu0 0.0
    %3809 = vmatprep.mubr.f32.mxu0 0.0
    %3810 = vmatmul.mubr.f32.gmra.mrb[0].mxu0 %v3743
    %v3811 = vpop.f32.mrb[0].mxu0
    %v3812 = vadd.f32 0.0, %v3811
    %v3813 = vpop.f32.mrb[0].mxu0
    %3814 = vdwg.mxu0
    %v3815 = vmul.f32 %v3812, %v3812
    %v3816 = vld [vmem:[#allocation9] sm:$0xff]
    %v3817 = vld [vmem:[#allocation9 + $0x8] sm:$0xff]
    %v3818 = vld [vmem:[#allocation9 + $0x10] sm:$0xff]
    %v3819 = vld [vmem:[#allocation9 + $0x18] sm:$0xff]
    %v3820 = vld [vmem:[#allocation9 + $0x20] sm:$0xff]
    %v3821 = vld [vmem:[#allocation9 + $0x28] sm:$0xff]
    %v3822 = vld [vmem:[#allocation9 + $0x30] sm:$0xff]
    %v3823 = vld [vmem:[#allocation9 + $0x38] sm:$0xff]
    %v3824 = vld [vmem:[#allocation9 + $0x40] sm:$0xff]
    %v3825 = vld [vmem:[#allocation9 + $0x48] sm:$0xff]
    %v3826 = vld [vmem:[#allocation9 + $0x50] sm:$0xff]
    %v3827 = vld [vmem:[#allocation9 + $0x58] sm:$0xff]
    %v3828 = vld [vmem:[#allocation9 + $0x60] sm:$0xff]
    %v3829 = vld [vmem:[#allocation9 + $0x68] sm:$0xff]
    %v3830 = vld [vmem:[#allocation9 + $0x70] sm:$0xff]
    %v3831 = vld [vmem:[#allocation9 + $0x78] sm:$0xff]
    %3832 = vmatprep.subr.mxu0 0.0
    %3833 = vmatpush1.msra.mxu0 %v3816
    %3834 = vmatprep.subr.mxu0 0.0
    %3835 = vmatpush1.msra.mxu0 %v3817
    %3836 = vmatprep.subr.mxu0 0.0
    %3837 = vmatpush1.msra.mxu0 %v3818
    %3838 = vmatprep.subr.mxu0 0.0
    %3839 = vmatpush1.msra.mxu0 %v3819
    %3840 = vmatprep.subr.mxu0 0.0
    %3841 = vmatpush1.msra.mxu0 %v3820
    %3842 = vmatprep.subr.mxu0 0.0
    %3843 = vmatpush1.msra.mxu0 %v3821
    %3844 = vmatprep.subr.mxu0 0.0
    %3845 = vmatpush1.msra.mxu0 %v3822
    %3846 = vmatprep.subr.mxu0 0.0
    %3847 = vmatpush1.msra.mxu0 %v3823
    %3848 = vmatprep.subr.mxu0 0.0
    %3849 = vmatpush1.msra.mxu0 %v3824
    %3850 = vmatprep.subr.mxu0 0.0
    %3851 = vmatpush1.msra.mxu0 %v3825
    %3852 = vmatprep.subr.mxu0 0.0
    %3853 = vmatpush1.msra.mxu0 %v3826
    %3854 = vmatprep.subr.mxu0 0.0
    %3855 = vmatpush1.msra.mxu0 %v3827
    %3856 = vmatprep.subr.mxu0 0.0
    %3857 = vmatpush1.msra.mxu0 %v3828
    %3858 = vmatprep.subr.mxu0 0.0
    %3859 = vmatpush1.msra.mxu0 %v3829
    %3860 = vmatprep.subr.mxu0 0.0
    %3861 = vmatpush1.msra.mxu0 %v3830
    %3862 = vmatprep.subr.mxu0 0.0
    %3863 = vmatpush1.msra.mxu0 %v3831
    %3864 = vmatprep.subr.mxu0 0.0
    %3865 = vmatpush1.msra.mxu0 0.0
    %3866 = vmatprep.subr.mxu0 0.0
    %3867 = vmatpush1.msra.mxu0 0.0
    %3868 = vmatprep.subr.mxu0 0.0
    %3869 = vmatpush1.msra.mxu0 0.0
    %3870 = vmatprep.subr.mxu0 0.0
    %3871 = vmatpush1.msra.mxu0 0.0
    %3872 = vmatprep.subr.mxu0 0.0
    %3873 = vmatpush1.msra.mxu0 0.0
    %3874 = vmatprep.subr.mxu0 0.0
    %3875 = vmatpush1.msra.mxu0 0.0
    %3876 = vmatprep.subr.mxu0 0.0
    %3877 = vmatpush1.msra.mxu0 0.0
    %3878 = vmatprep.subr.mxu0 0.0
    %3879 = vmatpush1.msra.mxu0 0.0
    %3880 = vmatprep.subr.mxu0 0.0
    %3881 = vmatpush1.msra.mxu0 0.0
    %3882 = vmatprep.subr.mxu0 0.0
    %3883 = vmatpush1.msra.mxu0 0.0
    %3884 = vmatprep.subr.mxu0 0.0
    %3885 = vmatpush1.msra.mxu0 0.0
    %3886 = vmatprep.subr.mxu0 0.0
    %3887 = vmatpush1.msra.mxu0 0.0
    %3888 = vmatprep.subr.mxu0 0.0
    %3889 = vmatpush1.msra.mxu0 0.0
    %3890 = vmatprep.subr.mxu0 0.0
    %3891 = vmatpush1.msra.mxu0 0.0
    %3892 = vmatprep.subr.mxu0 0.0
    %3893 = vmatpush1.msra.mxu0 0.0
    %3894 = vmatprep.subr.mxu0 0.0
    %3895 = vmatpush1.msra.mxu0 0.0
    %3896 = vmatprep.mubr.f32.mxu0 0.0
    %3897 = vmatmul.mubr.f32.gmra.mrb[0].mxu0 %v3815
    %v3898 = vpop.f32.mrb[0].mxu0
    %v3899 = vadd.f32 0.0, %v3898
    %v3900 = vpop.f32.mrb[0].mxu0
    %3901 = vdwg.mxu0
    %v3902 = vmax.f32 %v3899, 1e-24
    %v3903 = vrsqrt.pop %v3902
    %v3904 = vmul.f32 %v3812, %v3903
    %3905 = vst [vmem:[#allocation11] sm:$0xff] %v3904
    %s3906 = scalar_lea.vmem [#allocation11], 8
    %3907 = vst [vmem:[%s3906] sm:$0xff] %v3737
    // Predicated region
    $region46: #{tpu_custom_call.1} parent=1 // pred_check
      _
    $region47: #{tpu_custom_call.1} parent=1 // pred_check_branch
      %3909 = sbr.rel (0) target = $region49
    $region48: #{tpu_custom_call.1} parent=1 // pred_region
      %s3911 = ssub.s32 256, 256
      %3912 = vsyncadd [#allocation5], %s3911
      %s3913 = sshll.u32 [#allocation11], 4
      %s3914 = int_to_ptr.vmem [resolvable:$true] %s3913
      %3919 = dma.vmem_to_hbm [thread:$0]  %s3914, 256, %s7, [#allocation5], 128, 128, 8
    $region49: #{tpu_custom_call.1} parent=1 // pred_fallthru
      _
    // Predicated region
    $region50: #{tpu_custom_call.1} parent=1 // pred_check
      _
    $region51: #{tpu_custom_call.1} parent=1 // pred_check_branch
      %3921 = sbr.rel (0) target = $region53
    $region52: #{tpu_custom_call.1} parent=1 // pred_region
      %s3923 = ssub.s32 32, 32
      %3924 = vsyncadd [#allocation13], %s3923
      %s3926 = sshll.u32 [#allocation12], 4
      %s3927 = int_to_ptr.vmem [resolvable:$true] %s3926
      %3929 = dma.vmem_to_hbm [thread:$0]  %s3927, 32, %s8, [#allocation13]
    $region53: #{tpu_custom_call.1} parent=1 // pred_fallthru
      _
    // Predicated region
    $region54: #{tpu_custom_call.1} parent=1 // pred_check
      _
    $region55: #{tpu_custom_call.1} parent=1 // pred_check_branch
      %3931 = sbr.rel (0) target = $region57
    $region56: #{tpu_custom_call.1} parent=1 // pred_region
      %3932 = dma.done [#allocation5], 256
    $region57: #{tpu_custom_call.1} parent=1 // pred_fallthru
      _
    // Predicated region
    $region58: #{tpu_custom_call.1} parent=1 // pred_check
      _
    $region59: #{tpu_custom_call.1} parent=1 // pred_check_branch
      %3934 = sbr.rel (0) target = $region61
    $region60: #{tpu_custom_call.1} parent=1 // pred_region
      %3935 = dma.done [#allocation13], 32
    $region61: #{tpu_custom_call.1} parent=1 // pred_fallthru
      _
    %3936 = vsyncpa [#allocation4], 1
    %3937 = vsyncpa [#allocation7], 1
    %3938 = vsyncpa [#allocation10], 1
    %3939 = vsyncpa [#allocation5], 1
    %3940 = vsyncpa [#allocation13], 1

</llo_original>
